<compile_context>
chip_gen: v5e
topology: v5e:2x2
jax: 0.10.0
libtpu: 0.0.40
codegen_flags: <defaults>
</compile_context>

<pallas_src>
import math

import jax
import jax.numpy as jnp
from jax import lax
from jax.experimental import pallas as pl
from jax.experimental.pallas import tpu as pltpu


# ---------------------------------------------------------------------------
# Helpers
# ---------------------------------------------------------------------------
def _pick_block(n, candidates=(512, 256, 128)):
    for cand in candidates:
        if n % cand == 0:
            return cand
    return n   # TODO(synk): pad N and mask the tail kv block instead of this fallback


def _weight_block_spec(block_shape, index_map):
    """Constant-index weight blocks don't need double buffering: request a single
    VMEM buffer when this JAX version exposes pl.Buffered; otherwise fall back."""
    buffered = getattr(pl, "Buffered", None)
    if buffered is not None:
        try:
            return pl.BlockSpec(block_shape, index_map,
                                pipeline_mode=buffered(buffer_count=1))
        except TypeError:
            pass
    return pl.BlockSpec(block_shape, index_map)


def _stage2_vmem_bytes(block_q, block_kv, head_dim, channels, itemsize):
    """Rough per-core VMEM budget of the attention kernel (lane-padded, double-buffered)."""
    lane = 128
    d_pad = max(head_dim, lane)
    c_pad = ((channels + lane - 1) // lane) * lane
    vmem = 0
    vmem += 2 * block_q * d_pad * itemsize            # q block
    vmem += 2 * 2 * block_kv * d_pad * itemsize       # k, v blocks
    vmem += 2 * head_dim * c_pad * itemsize           # per-head out-proj weight block
    vmem += 2 * block_q * c_pad * itemsize            # output block
    vmem += 2 * block_q * lane * 4                    # m, l (f32)
    vmem += block_q * d_pad * 4                       # acc (f32)
    vmem += block_q * c_pad * 4                       # fused out-proj accumulator (f32)
    return vmem


# ---------------------------------------------------------------------------
# Kernel 1: head-major QKV projection
#   For each (batch, token-tile) grid point, compute x_tile @ W_j for every
#   projection slab j in [0, 3H): j < H are q heads (softmax scale folded in),
#   then k heads, then v heads.  Output is written directly in (B, 3H, N, D)
#   layout, so no XLA transpose / head-split round trip is needed afterwards.
# ---------------------------------------------------------------------------
def _qkv_head_proj_kernel(x_ref, w_ref, o_ref):
    # x_ref: (1, bn, C)   w_ref: (3H, C, D)   o_ref: (1, 3H, bn, D)
    x = x_ref[0]
    for j in range(o_ref.shape[1]):                      # static 3H-way unroll
        o_ref[0, j] = jnp.dot(
            x, w_ref[j], preferred_element_type=jnp.float32
        ).astype(o_ref.dtype)


# ---------------------------------------------------------------------------
# Kernel 2: flash attention (online softmax over kv blocks) with H in the grid
#           and the output projection fused per head into an f32 accumulator.
# ---------------------------------------------------------------------------
def _flash_attn_kernel(q_ref, k_ref, v_ref, w_ref, o_ref,
                       m_ref, l_ref, acc_ref, oacc_ref):
    # q_ref: (1, 1, bq, D)   k_ref / v_ref: (1, 1, bk, D)   w_ref: (1, D, C)
    # o_ref: (1, bq, C)
    # scratch: m_ref / l_ref (bq, 1) f32, acc_ref (bq, D) f32, oacc_ref (bq, C) f32
    h = pl.program_id(2)
    ki = pl.program_id(3)
    n_h = pl.num_programs(2)
    n_kv = pl.num_programs(3)

    @pl.when(jnp.logical_and(h == 0, ki == 0))
    def _init_out():
        oacc_ref[...] = jnp.zeros(oacc_ref.shape, dtype=oacc_ref.dtype)

    @pl.when(ki == 0)
    def _init_head():
        m_ref[...] = jnp.full(m_ref.shape, -jnp.inf, dtype=m_ref.dtype)
        l_ref[...] = jnp.zeros(l_ref.shape, dtype=l_ref.dtype)
        acc_ref[...] = jnp.zeros(acc_ref.shape, dtype=acc_ref.dtype)

    q = q_ref[0, 0]        # (bq, D) -- 1/sqrt(D) already folded into the q weights
    k = k_ref[0, 0]        # (bk, D)
    v = v_ref[0, 0]        # (bk, D)

    # Scores; K consumed as the transposed MXU operand (no explicit .T relayout).
    s = lax.dot_general(q, k, (((1,), (1,)), ((), ())),
                        preferred_element_type=jnp.float32)          # (bq, bk) f32

    m_prev = m_ref[...]                                              # (bq, 1)
    m_new = jnp.maximum(m_prev, jnp.max(s, axis=-1, keepdims=True))
    alpha = jnp.exp(m_prev - m_new)                                  # rescale old stats
    p = jnp.exp(s - m_new)                                           # (bq, bk) f32

    l_ref[...] = alpha * l_ref[...] + jnp.sum(p, axis=-1, keepdims=True)
    acc_ref[...] = alpha * acc_ref[...] + jnp.dot(
        p.astype(v.dtype), v, preferred_element_type=jnp.float32)    # (bq, D) f32
    m_ref[...] = m_new

    @pl.when(ki == n_kv - 1)
    def _head_epilogue():
        # Exact normalization (no approx reciprocal -- matches the reference closely),
        # then fuse this head's slice of the output projection into the f32 accumulator.
        attn = (acc_ref[...] / l_ref[...]).astype(w_ref.dtype)       # (bq, D)
        oacc_ref[...] += jnp.dot(attn, w_ref[0],
                                 preferred_element_type=jnp.float32)  # (bq, C)

    @pl.when(jnp.logical_and(h == n_h - 1, ki == n_kv - 1))
    def _finalize():
        o_ref[0] = oacc_ref[...].astype(o_ref.dtype)                 # lane-dense store


# ---------------------------------------------------------------------------
# Wrapper
# ---------------------------------------------------------------------------
def spatial_self_attention(x, wqkv, wout, *, num_heads, block_q=None, block_kv=None):
    """Forward pass of SpatialSelfAttention.

    x:    (B, N, C)
    wqkv: (3C, C)  -- PyTorch nn.Linear layout (out_features, in_features)
    wout: (C, C)   -- PyTorch nn.Linear layout
    """
    B, N, C = x.shape
    assert C % num_heads == 0, "channels must be divisible by num_heads"
    head_dim = C // num_heads
    dtype = x.dtype
    itemsize = jnp.dtype(dtype).itemsize

    # Larger block_q cuts the n_q-fold K/V HBM re-streaming (v5e/v6e guidance).
    block_q = _pick_block(N, (512, 256, 128)) if block_q is None else block_q
    block_kv = _pick_block(N, (256, 128)) if block_kv is None else block_kv
    # TODO(synk): pad/mask ragged N instead of requiring exact tile divisibility.
    assert N % block_q == 0 and N % block_kv == 0

    scale = 1.0 / math.sqrt(head_dim)

    # PyTorch (out, in) -> (in, out); fold the 1/sqrt(D) softmax scale into W_q.
    # (Scale folding pre-cast differs negligibly from PyTorch's post-matmul scale.)
    w_all = wqkv.T                                           # (C, 3C)

    def head_stack(wpart):                                   # (C, C) -> (H, C, D)
        return wpart.reshape(C, num_heads, head_dim).transpose(1, 0, 2)

    w_stack = jnp.concatenate(
        [head_stack(w_all[:, :C] * scale),                   # q heads (scaled)
         head_stack(w_all[:, C:2 * C]),                      # k heads
         head_stack(w_all[:, 2 * C:])],                      # v heads
        axis=0).astype(dtype)                                # (3H, C, D)
    # Out-projection rows grouped per head: (C, C) -> (H, D, C).
    w_out_hdc = wout.T.reshape(num_heads, head_dim, C).astype(dtype)

    # ---- Stage 1: head-major QKV projection --------------------------------
    bn = block_q
    qkvh = pl.pallas_call(
        _qkv_head_proj_kernel,
        out_shape=jax.ShapeDtypeStruct((B, 3 * num_heads, N, head_dim), dtype),
        grid_spec=pltpu.PrefetchScalarGridSpec(
            num_scalar_prefetch=0,
            grid=(B, N // bn),
            in_specs=[
                pl.BlockSpec((1, bn, C), lambda b, i: (b, i, 0)),
                # Constant index -> single-buffered weight stack (Buffered(1) when available).
                # TODO(synk): tile over the head axis for very large C (weights > VMEM).
                _weight_block_spec((3 * num_heads, C, head_dim),
                                   lambda b, i: (0, 0, 0)),
            ],
            out_specs=pl.BlockSpec((1, 3 * num_heads, bn, head_dim),
                                   lambda b, i: (b, 0, i, 0)),
        ),
        compiler_params=pltpu.CompilerParams(
            dimension_semantics=("parallel", "parallel")),
        cost_estimate=pl.CostEstimate(
            flops=2 * B * N * C * 3 * C,
            transcendentals=0,
            bytes_accessed=itemsize * (4 * B * N * C + 3 * C * C)),
    )(x, w_stack)

    # ---- Stage 2: flash attention + fused output projection ----------------
    n_q = N // block_q
    n_kv = N // block_kv

    vmem_est = _stage2_vmem_bytes(block_q, block_kv, head_dim, C, itemsize)
    default_scoped = 32 * 1024 * 1024
    vmem_limit = None
    if 2 * vmem_est > default_scoped:                        # headroom for internal scratch
        vmem_limit = min(2 * vmem_est, 128 * 1024 * 1024)

    out = pl.pallas_call(
        _flash_attn_kernel,
        out_shape=jax.ShapeDtypeStruct((B, N, C), dtype),
        grid_spec=pltpu.PrefetchScalarGridSpec(
            num_scalar_prefetch=0,
            grid=(B, n_q, num_heads, n_kv),
            in_specs=[
                # q / k / v come straight out of the head-major qkv buffer:
                # index 0..H-1 = q heads, H..2H-1 = k heads, 2H..3H-1 = v heads.
                pl.BlockSpec((1, 1, block_q, head_dim),
                             lambda b, qi, h, ki: (b, h, qi, 0)),
                pl.BlockSpec((1, 1, block_kv, head_dim),
                             lambda b, qi, h, ki: (b, num_heads + h, ki, 0)),
                pl.BlockSpec((1, 1, block_kv, head_dim),
                             lambda b, qi, h, ki: (b, 2 * num_heads + h, ki, 0)),
                pl.BlockSpec((1, head_dim, C),
                             lambda b, qi, h, ki: (h, 0, 0)),
            ],
            out_specs=pl.BlockSpec((1, block_q, C),
                                   lambda b, qi, h, ki: (b, qi, 0)),
            scratch_shapes=[
                pltpu.VMEM((block_q, 1), jnp.float32),          # running max m
                pltpu.VMEM((block_q, 1), jnp.float32),          # running sum l
                pltpu.VMEM((block_q, head_dim), jnp.float32),   # per-head attn accumulator
                pltpu.VMEM((block_q, C), jnp.float32),          # fused out-proj accumulator
            ],
        ),
        compiler_params=pltpu.CompilerParams(
            dimension_semantics=("parallel", "parallel", "arbitrary", "arbitrary"),
            vmem_limit_bytes=vmem_limit),
        cost_estimate=pl.CostEstimate(
            flops=4 * B * N * N * C + 2 * B * N * C * C,
            transcendentals=B * num_heads * N * N,
            # Accounts for the n_q-fold K/V re-streaming.
            bytes_accessed=itemsize * (B * N * C * (2 + 2 * n_q) + B * n_q * C * C)),
    )(qkvh, qkvh, qkvh, w_out_hdc)
    return out


# ---------------------------------------------------------------------------
# Pure-JAX reference (PyTorch forward with dropout=0, non-causal)
# ---------------------------------------------------------------------------
def _reference(x, wqkv, wout, *, num_heads):
    B, N, C = x.shape
    D = C // num_heads
    qkv = jnp.einsum("bnc,oc->bno", x, wqkv)            # (B, N, 3C)
    q, k, v = jnp.split(qkv, 3, axis=-1)

    def heads(t):
        return t.reshape(B, N, num_heads, D).transpose(0, 2, 1, 3)   # (B, H, N, D)

    q, k, v = heads(q), heads(k), heads(v)
    s = jnp.einsum("bhqd,bhkd->bhqk", q, k) / jnp.sqrt(jnp.float32(D))
    p = jax.nn.softmax(s, axis=-1)
    o = jnp.einsum("bhqk,bhkd->bhqd", p, v)             # (B, H, N, D)
    o = o.transpose(0, 2, 1, 3).reshape(B, N, C)
    return jnp.einsum("bnc,oc->bno", o, wout)


if __name__ == "__main__":
    key = jax.random.PRNGKey(0)
    # Small but tiling-exercising shapes: 2 q-tiles, 2 kv-tiles, 4 heads (head_dim = 64).
    B, N, C, H = 2, 256, 256, 4

    kx, kq, ko = jax.random.split(key, 3)
    x = jax.random.normal(kx, (B, N, C), dtype=jnp.float32)
    # Deterministic "PyTorch-Linear-like" weight init (uniform +/- 1/sqrt(fan_in)).
    bound = 1.0 / math.sqrt(C)
    wqkv = jax.random.uniform(kq, (3 * C, C), minval=-bound, maxval=bound,
                              dtype=jnp.float32)   # qkv_proj.weight  (3C, C)
    wout = jax.random.uniform(ko, (C, C), minval=-bound, maxval=bound,
                              dtype=jnp.float32)   # out_proj.weight  (C, C)

    out = spatial_self_attention(x, wqkv, wout, num_heads=H,
                                 block_q=128, block_kv=128)
    out = jax.block_until_ready(out)

    ref = _reference(x, wqkv, wout, num_heads=H)
    assert out.shape == (B, N, C)
    err = float(jnp.max(jnp.abs(out - ref)))
    assert jnp.allclose(out, ref, atol=2e-4, rtol=2e-4), (
        f"mismatch vs reference: max abs err = {err}")

    print("KERNEL_OK")
</pallas_src>

<mosaic_0001>
module attributes {stable_mosaic.version = 11 : i64} {
  func.func @_qkv_head_proj_kernel(%arg0: i32, %arg1: i32, %arg2: memref<1x128x256xf32, #tpu.memory_space<vmem>>, %arg3: memref<12x256x64xf32, #tpu.memory_space<vmem>>, %arg4: memref<1x12x128x64xf32, #tpu.memory_space<vmem>>) attributes {dimension_semantics = [#tpu.dimension_semantics<parallel>, #tpu.dimension_semantics<parallel>], iteration_bounds = array<i64: 2, 2>, scalar_prefetch = 0 : i64, scratch_operands = 0 : i64, tpu.core_type = #tpu.core_type<tc>, window_params = [{transform_indices = @transform_0, window_bounds = array<i64: 1, 128, 256>}, {pipeline_mode = #tpu.pipeline_mode<synchronous>, transform_indices = @transform_1, window_bounds = array<i64: 12, 256, 64>}, {transform_indices = @transform_2, window_bounds = array<i64: 1, 12, 128, 64>}]} {
    %c0 = arith.constant 0 : index
    %c0_0 = arith.constant 0 : index
    %c0_1 = arith.constant 0 : index
    %0 = vector.load %arg2[%c0, %c0_0, %c0_1] : memref<1x128x256xf32, #tpu.memory_space<vmem>>, vector<1x128x256xf32>
    %1 = vector.shape_cast %0 : vector<1x128x256xf32> to vector<128x256xf32>
    %c0_2 = arith.constant 0 : index
    %c0_3 = arith.constant 0 : index
    %c0_4 = arith.constant 0 : index
    %2 = vector.load %arg3[%c0_2, %c0_3, %c0_4] : memref<12x256x64xf32, #tpu.memory_space<vmem>>, vector<1x256x64xf32>
    %3 = vector.shape_cast %2 : vector<1x256x64xf32> to vector<256x64xf32>
    %cst = arith.constant dense<0.000000e+00> : vector<128x64xf32>
    %4 = tpu.matmul %1, %3, %cst {dimension_numbers = #tpu.dot_dimension_numbers<[1], [0], [0], [1], [0, 0, 1, 1], [], []>} : vector<128x256xf32>, vector<256x64xf32>, vector<128x64xf32> -> vector<128x64xf32>
    %c0_5 = arith.constant 0 : index
    %c0_6 = arith.constant 0 : index
    %c0_7 = arith.constant 0 : index
    %c0_8 = arith.constant 0 : index
    %5 = vector.load %arg4[%c0_5, %c0_6, %c0_7, %c0_8] : memref<1x12x128x64xf32, #tpu.memory_space<vmem>>, vector<1x1x128x64xf32>
    %6 = vector.shape_cast %5 : vector<1x1x128x64xf32> to vector<128x64xf32>
    %7 = vector.shape_cast %4 : vector<128x64xf32> to vector<1x1x128x64xf32>
    tpu.vector_store %arg4[%c0_5, %c0_6, %c0_7, %c0_8], %7 {strides = array<i32>} : memref<1x12x128x64xf32, #tpu.memory_space<vmem>>, vector<1x1x128x64xf32>,
    %c1 = arith.constant 1 : index
    %c0_9 = arith.constant 0 : index
    %c0_10 = arith.constant 0 : index
    %8 = vector.load %arg3[%c1, %c0_9, %c0_10] : memref<12x256x64xf32, #tpu.memory_space<vmem>>, vector<1x256x64xf32>
    %9 = vector.shape_cast %8 : vector<1x256x64xf32> to vector<256x64xf32>
    %cst_11 = arith.constant dense<0.000000e+00> : vector<128x64xf32>
    %10 = tpu.matmul %1, %9, %cst_11 {dimension_numbers = #tpu.dot_dimension_numbers<[1], [0], [0], [1], [0, 0, 1, 1], [], []>} : vector<128x256xf32>, vector<256x64xf32>, vector<128x64xf32> -> vector<128x64xf32>
    %c0_12 = arith.constant 0 : index
    %c1_13 = arith.constant 1 : index
    %c0_14 = arith.constant 0 : index
    %c0_15 = arith.constant 0 : index
    %11 = vector.load %arg4[%c0_12, %c1_13, %c0_14, %c0_15] : memref<1x12x128x64xf32, #tpu.memory_space<vmem>>, vector<1x1x128x64xf32>
    %12 = vector.shape_cast %11 : vector<1x1x128x64xf32> to vector<128x64xf32>
    %13 = vector.shape_cast %10 : vector<128x64xf32> to vector<1x1x128x64xf32>
    tpu.vector_store %arg4[%c0_12, %c1_13, %c0_14, %c0_15], %13 {strides = array<i32>} : memref<1x12x128x64xf32, #tpu.memory_space<vmem>>, vector<1x1x128x64xf32>,
    %c2 = arith.constant 2 : index
    %c0_16 = arith.constant 0 : index
    %c0_17 = arith.constant 0 : index
    %14 = vector.load %arg3[%c2, %c0_16, %c0_17] : memref<12x256x64xf32, #tpu.memory_space<vmem>>, vector<1x256x64xf32>
    %15 = vector.shape_cast %14 : vector<1x256x64xf32> to vector<256x64xf32>
    %cst_18 = arith.constant dense<0.000000e+00> : vector<128x64xf32>
    %16 = tpu.matmul %1, %15, %cst_18 {dimension_numbers = #tpu.dot_dimension_numbers<[1], [0], [0], [1], [0, 0, 1, 1], [], []>} : vector<128x256xf32>, vector<256x64xf32>, vector<128x64xf32> -> vector<128x64xf32>
    %c0_19 = arith.constant 0 : index
    %c2_20 = arith.constant 2 : index
    %c0_21 = arith.constant 0 : index
    %c0_22 = arith.constant 0 : index
    %17 = vector.load %arg4[%c0_19, %c2_20, %c0_21, %c0_22] : memref<1x12x128x64xf32, #tpu.memory_space<vmem>>, vector<1x1x128x64xf32>
    %18 = vector.shape_cast %17 : vector<1x1x128x64xf32> to vector<128x64xf32>
    %19 = vector.shape_cast %16 : vector<128x64xf32> to vector<1x1x128x64xf32>
    tpu.vector_store %arg4[%c0_19, %c2_20, %c0_21, %c0_22], %19 {strides = array<i32>} : memref<1x12x128x64xf32, #tpu.memory_space<vmem>>, vector<1x1x128x64xf32>,
    %c3 = arith.constant 3 : index
    %c0_23 = arith.constant 0 : index
    %c0_24 = arith.constant 0 : index
    %20 = vector.load %arg3[%c3, %c0_23, %c0_24] : memref<12x256x64xf32, #tpu.memory_space<vmem>>, vector<1x256x64xf32>
    %21 = vector.shape_cast %20 : vector<1x256x64xf32> to vector<256x64xf32>
    %cst_25 = arith.constant dense<0.000000e+00> : vector<128x64xf32>
    %22 = tpu.matmul %1, %21, %cst_25 {dimension_numbers = #tpu.dot_dimension_numbers<[1], [0], [0], [1], [0, 0, 1, 1], [], []>} : vector<128x256xf32>, vector<256x64xf32>, vector<128x64xf32> -> vector<128x64xf32>
    %c0_26 = arith.constant 0 : index
    %c3_27 = arith.constant 3 : index
    %c0_28 = arith.constant 0 : index
    %c0_29 = arith.constant 0 : index
    %23 = vector.load %arg4[%c0_26, %c3_27, %c0_28, %c0_29] : memref<1x12x128x64xf32, #tpu.memory_space<vmem>>, vector<1x1x128x64xf32>
    %24 = vector.shape_cast %23 : vector<1x1x128x64xf32> to vector<128x64xf32>
    %25 = vector.shape_cast %22 : vector<128x64xf32> to vector<1x1x128x64xf32>
    tpu.vector_store %arg4[%c0_26, %c3_27, %c0_28, %c0_29], %25 {strides = array<i32>} : memref<1x12x128x64xf32, #tpu.memory_space<vmem>>, vector<1x1x128x64xf32>,
    %c4 = arith.constant 4 : index
    %c0_30 = arith.constant 0 : index
    %c0_31 = arith.constant 0 : index
    %26 = vector.load %arg3[%c4, %c0_30, %c0_31] : memref<12x256x64xf32, #tpu.memory_space<vmem>>, vector<1x256x64xf32>
    %27 = vector.shape_cast %26 : vector<1x256x64xf32> to vector<256x64xf32>
    %cst_32 = arith.constant dense<0.000000e+00> : vector<128x64xf32>
    %28 = tpu.matmul %1, %27, %cst_32 {dimension_numbers = #tpu.dot_dimension_numbers<[1], [0], [0], [1], [0, 0, 1, 1], [], []>} : vector<128x256xf32>, vector<256x64xf32>, vector<128x64xf32> -> vector<128x64xf32>
    %c0_33 = arith.constant 0 : index
    %c4_34 = arith.constant 4 : index
    %c0_35 = arith.constant 0 : index
    %c0_36 = arith.constant 0 : index
    %29 = vector.load %arg4[%c0_33, %c4_34, %c0_35, %c0_36] : memref<1x12x128x64xf32, #tpu.memory_space<vmem>>, vector<1x1x128x64xf32>
    %30 = vector.shape_cast %29 : vector<1x1x128x64xf32> to vector<128x64xf32>
    %31 = vector.shape_cast %28 : vector<128x64xf32> to vector<1x1x128x64xf32>
    tpu.vector_store %arg4[%c0_33, %c4_34, %c0_35, %c0_36], %31 {strides = array<i32>} : memref<1x12x128x64xf32, #tpu.memory_space<vmem>>, vector<1x1x128x64xf32>,
    %c5 = arith.constant 5 : index
    %c0_37 = arith.constant 0 : index
    %c0_38 = arith.constant 0 : index
    %32 = vector.load %arg3[%c5, %c0_37, %c0_38] : memref<12x256x64xf32, #tpu.memory_space<vmem>>, vector<1x256x64xf32>
    %33 = vector.shape_cast %32 : vector<1x256x64xf32> to vector<256x64xf32>
    %cst_39 = arith.constant dense<0.000000e+00> : vector<128x64xf32>
    %34 = tpu.matmul %1, %33, %cst_39 {dimension_numbers = #tpu.dot_dimension_numbers<[1], [0], [0], [1], [0, 0, 1, 1], [], []>} : vector<128x256xf32>, vector<256x64xf32>, vector<128x64xf32> -> vector<128x64xf32>
    %c0_40 = arith.constant 0 : index
    %c5_41 = arith.constant 5 : index
    %c0_42 = arith.constant 0 : index
    %c0_43 = arith.constant 0 : index
    %35 = vector.load %arg4[%c0_40, %c5_41, %c0_42, %c0_43] : memref<1x12x128x64xf32, #tpu.memory_space<vmem>>, vector<1x1x128x64xf32>
    %36 = vector.shape_cast %35 : vector<1x1x128x64xf32> to vector<128x64xf32>
    %37 = vector.shape_cast %34 : vector<128x64xf32> to vector<1x1x128x64xf32>
    tpu.vector_store %arg4[%c0_40, %c5_41, %c0_42, %c0_43], %37 {strides = array<i32>} : memref<1x12x128x64xf32, #tpu.memory_space<vmem>>, vector<1x1x128x64xf32>,
    %c6 = arith.constant 6 : index
    %c0_44 = arith.constant 0 : index
    %c0_45 = arith.constant 0 : index
    %38 = vector.load %arg3[%c6, %c0_44, %c0_45] : memref<12x256x64xf32, #tpu.memory_space<vmem>>, vector<1x256x64xf32>
    %39 = vector.shape_cast %38 : vector<1x256x64xf32> to vector<256x64xf32>
    %cst_46 = arith.constant dense<0.000000e+00> : vector<128x64xf32>
    %40 = tpu.matmul %1, %39, %cst_46 {dimension_numbers = #tpu.dot_dimension_numbers<[1], [0], [0], [1], [0, 0, 1, 1], [], []>} : vector<128x256xf32>, vector<256x64xf32>, vector<128x64xf32> -> vector<128x64xf32>
    %c0_47 = arith.constant 0 : index
    %c6_48 = arith.constant 6 : index
    %c0_49 = arith.constant 0 : index
    %c0_50 = arith.constant 0 : index
    %41 = vector.load %arg4[%c0_47, %c6_48, %c0_49, %c0_50] : memref<1x12x128x64xf32, #tpu.memory_space<vmem>>, vector<1x1x128x64xf32>
    %42 = vector.shape_cast %41 : vector<1x1x128x64xf32> to vector<128x64xf32>
    %43 = vector.shape_cast %40 : vector<128x64xf32> to vector<1x1x128x64xf32>
    tpu.vector_store %arg4[%c0_47, %c6_48, %c0_49, %c0_50], %43 {strides = array<i32>} : memref<1x12x128x64xf32, #tpu.memory_space<vmem>>, vector<1x1x128x64xf32>,
    %c7 = arith.constant 7 : index
    %c0_51 = arith.constant 0 : index
    %c0_52 = arith.constant 0 : index
    %44 = vector.load %arg3[%c7, %c0_51, %c0_52] : memref<12x256x64xf32, #tpu.memory_space<vmem>>, vector<1x256x64xf32>
    %45 = vector.shape_cast %44 : vector<1x256x64xf32> to vector<256x64xf32>
    %cst_53 = arith.constant dense<0.000000e+00> : vector<128x64xf32>
    %46 = tpu.matmul %1, %45, %cst_53 {dimension_numbers = #tpu.dot_dimension_numbers<[1], [0], [0], [1], [0, 0, 1, 1], [], []>} : vector<128x256xf32>, vector<256x64xf32>, vector<128x64xf32> -> vector<128x64xf32>
    %c0_54 = arith.constant 0 : index
    %c7_55 = arith.constant 7 : index
    %c0_56 = arith.constant 0 : index
    %c0_57 = arith.constant 0 : index
    %47 = vector.load %arg4[%c0_54, %c7_55, %c0_56, %c0_57] : memref<1x12x128x64xf32, #tpu.memory_space<vmem>>, vector<1x1x128x64xf32>
    %48 = vector.shape_cast %47 : vector<1x1x128x64xf32> to vector<128x64xf32>
    %49 = vector.shape_cast %46 : vector<128x64xf32> to vector<1x1x128x64xf32>
    tpu.vector_store %arg4[%c0_54, %c7_55, %c0_56, %c0_57], %49 {strides = array<i32>} : memref<1x12x128x64xf32, #tpu.memory_space<vmem>>, vector<1x1x128x64xf32>,
    %c8 = arith.constant 8 : index
    %c0_58 = arith.constant 0 : index
    %c0_59 = arith.constant 0 : index
    %50 = vector.load %arg3[%c8, %c0_58, %c0_59] : memref<12x256x64xf32, #tpu.memory_space<vmem>>, vector<1x256x64xf32>
    %51 = vector.shape_cast %50 : vector<1x256x64xf32> to vector<256x64xf32>
    %cst_60 = arith.constant dense<0.000000e+00> : vector<128x64xf32>
    %52 = tpu.matmul %1, %51, %cst_60 {dimension_numbers = #tpu.dot_dimension_numbers<[1], [0], [0], [1], [0, 0, 1, 1], [], []>} : vector<128x256xf32>, vector<256x64xf32>, vector<128x64xf32> -> vector<128x64xf32>
    %c0_61 = arith.constant 0 : index
    %c8_62 = arith.constant 8 : index
    %c0_63 = arith.constant 0 : index
    %c0_64 = arith.constant 0 : index
    %53 = vector.load %arg4[%c0_61, %c8_62, %c0_63, %c0_64] : memref<1x12x128x64xf32, #tpu.memory_space<vmem>>, vector<1x1x128x64xf32>
    %54 = vector.shape_cast %53 : vector<1x1x128x64xf32> to vector<128x64xf32>
    %55 = vector.shape_cast %52 : vector<128x64xf32> to vector<1x1x128x64xf32>
    tpu.vector_store %arg4[%c0_61, %c8_62, %c0_63, %c0_64], %55 {strides = array<i32>} : memref<1x12x128x64xf32, #tpu.memory_space<vmem>>, vector<1x1x128x64xf32>,
    %c9 = arith.constant 9 : index
    %c0_65 = arith.constant 0 : index
    %c0_66 = arith.constant 0 : index
    %56 = vector.load %arg3[%c9, %c0_65, %c0_66] : memref<12x256x64xf32, #tpu.memory_space<vmem>>, vector<1x256x64xf32>
    %57 = vector.shape_cast %56 : vector<1x256x64xf32> to vector<256x64xf32>
    %cst_67 = arith.constant dense<0.000000e+00> : vector<128x64xf32>
    %58 = tpu.matmul %1, %57, %cst_67 {dimension_numbers = #tpu.dot_dimension_numbers<[1], [0], [0], [1], [0, 0, 1, 1], [], []>} : vector<128x256xf32>, vector<256x64xf32>, vector<128x64xf32> -> vector<128x64xf32>
    %c0_68 = arith.constant 0 : index
    %c9_69 = arith.constant 9 : index
    %c0_70 = arith.constant 0 : index
    %c0_71 = arith.constant 0 : index
    %59 = vector.load %arg4[%c0_68, %c9_69, %c0_70, %c0_71] : memref<1x12x128x64xf32, #tpu.memory_space<vmem>>, vector<1x1x128x64xf32>
    %60 = vector.shape_cast %59 : vector<1x1x128x64xf32> to vector<128x64xf32>
    %61 = vector.shape_cast %58 : vector<128x64xf32> to vector<1x1x128x64xf32>
    tpu.vector_store %arg4[%c0_68, %c9_69, %c0_70, %c0_71], %61 {strides = array<i32>} : memref<1x12x128x64xf32, #tpu.memory_space<vmem>>, vector<1x1x128x64xf32>,
    %c10 = arith.constant 10 : index
    %c0_72 = arith.constant 0 : index
    %c0_73 = arith.constant 0 : index
    %62 = vector.load %arg3[%c10, %c0_72, %c0_73] : memref<12x256x64xf32, #tpu.memory_space<vmem>>, vector<1x256x64xf32>
    %63 = vector.shape_cast %62 : vector<1x256x64xf32> to vector<256x64xf32>
    %cst_74 = arith.constant dense<0.000000e+00> : vector<128x64xf32>
    %64 = tpu.matmul %1, %63, %cst_74 {dimension_numbers = #tpu.dot_dimension_numbers<[1], [0], [0], [1], [0, 0, 1, 1], [], []>} : vector<128x256xf32>, vector<256x64xf32>, vector<128x64xf32> -> vector<128x64xf32>
    %c0_75 = arith.constant 0 : index
    %c10_76 = arith.constant 10 : index
    %c0_77 = arith.constant 0 : index
    %c0_78 = arith.constant 0 : index
    %65 = vector.load %arg4[%c0_75, %c10_76, %c0_77, %c0_78] : memref<1x12x128x64xf32, #tpu.memory_space<vmem>>, vector<1x1x128x64xf32>
    %66 = vector.shape_cast %65 : vector<1x1x128x64xf32> to vector<128x64xf32>
    %67 = vector.shape_cast %64 : vector<128x64xf32> to vector<1x1x128x64xf32>
    tpu.vector_store %arg4[%c0_75, %c10_76, %c0_77, %c0_78], %67 {strides = array<i32>} : memref<1x12x128x64xf32, #tpu.memory_space<vmem>>, vector<1x1x128x64xf32>,
    %c11 = arith.constant 11 : index
    %c0_79 = arith.constant 0 : index
    %c0_80 = arith.constant 0 : index
    %68 = vector.load %arg3[%c11, %c0_79, %c0_80] : memref<12x256x64xf32, #tpu.memory_space<vmem>>, vector<1x256x64xf32>
    %69 = vector.shape_cast %68 : vector<1x256x64xf32> to vector<256x64xf32>
    %cst_81 = arith.constant dense<0.000000e+00> : vector<128x64xf32>
    %70 = tpu.matmul %1, %69, %cst_81 {dimension_numbers = #tpu.dot_dimension_numbers<[1], [0], [0], [1], [0, 0, 1, 1], [], []>} : vector<128x256xf32>, vector<256x64xf32>, vector<128x64xf32> -> vector<128x64xf32>
    %c0_82 = arith.constant 0 : index
    %c11_83 = arith.constant 11 : index
    %c0_84 = arith.constant 0 : index
    %c0_85 = arith.constant 0 : index
    %71 = vector.load %arg4[%c0_82, %c11_83, %c0_84, %c0_85] : memref<1x12x128x64xf32, #tpu.memory_space<vmem>>, vector<1x1x128x64xf32>
    %72 = vector.shape_cast %71 : vector<1x1x128x64xf32> to vector<128x64xf32>
    %73 = vector.shape_cast %70 : vector<128x64xf32> to vector<1x1x128x64xf32>
    tpu.vector_store %arg4[%c0_82, %c11_83, %c0_84, %c0_85], %73 {strides = array<i32>} : memref<1x12x128x64xf32, #tpu.memory_space<vmem>>, vector<1x1x128x64xf32>,
    return
  }
  func.func @transform_0(%arg0: i32, %arg1: i32) -> (i32, i32, i32) {
    %c0_i32 = arith.constant 0 : i32
    %c0_i32_0 = arith.constant 0 : i32
    return %arg0, %arg1, %c0_i32 : i32, i32, i32
  }
  func.func @transform_1(%arg0: i32, %arg1: i32) -> (i32, i32, i32) {
    %c0_i32 = arith.constant 0 : i32
    %c0_i32_0 = arith.constant 0 : i32
    %c0_i32_1 = arith.constant 0 : i32
    %c0_i32_2 = arith.constant 0 : i32
    return %c0_i32, %c0_i32_0, %c0_i32_1 : i32, i32, i32
  }
  func.func @transform_2(%arg0: i32, %arg1: i32) -> (i32, i32, i32, i32) {
    %c0_i32 = arith.constant 0 : i32
    %c0_i32_0 = arith.constant 0 : i32
    %c0_i32_1 = arith.constant 0 : i32
    return %arg0, %c0_i32, %arg1, %c0_i32_0 : i32, i32, i32, i32
  }
}

</mosaic_0001>

<llo_original>
// kernel: tpu_custom_call.1
$region0: #{tpu_custom_call.1}
  #allocation0 [shape = 'u32[]', space=smem, size = 0x4, offset = 0x4, fixed_abs, tag = 'smem constant byte address 0x4 - core index']
  #allocation1 [shape = 'u32[72,128]{1,0:T(1,128)}', space=vmem, size = 0x9000, scoped, tag = 'internal scratch']
  %s0 = inlined_call_operand.vmem [shape: f32[2,256,256], index: 0, kind: input, shape index: {}]
  %s1 = inlined_call_operand.vmem [shape: f32[12,256,64], index: 1, kind: input, shape index: {}]
  %s2 = inlined_call_operand.vmem [shape: f32[2,12,256,64], index: 2, kind: output, shape index: {}]
  %s3 = sld [smem:[#allocation0]]
  $region75: #{tpu_custom_call.1} parent=0
    _
  %s5 = ssub.s32 1, %s3
  %s6 = scalar_select 0, %s5, %s3
  $region1: #{tpu_custom_call.1} parent=0
    #allocation2 [shape = 'u8[1572864]{0}', space=vmem, size = 0x180000, scoped, tag = 'output window, operand 0']
    loop: start=0, step=1, limit=6
    $region2: #{tpu_custom_call.1} parent=1 // loop_pre_header
      _
    $region3: #{tpu_custom_call.1} parent=1 // loop_header
      %s8 = sphi 0, %s12
      %p9 = scmp.ge.s32.totalorder %s8, 6
      %s15 = sphi 0, %s27
      %s16 = sphi 0, %s23
      %s17 = sphi 0, %s15
      %s18 = sphi 0, %s16
      %s19 = sphi 0, %s17
      %s20 = sphi 0, %s18
      %s32 = sphi 0, %s34
      %s35 = sphi 0, %s32
      %s36 = sphi 0, %s35
      %s52 = sphi 0, %s36
      %s56 = sphi 0, %s56
      %s58 = sphi 0, %s56
      %s59 = sphi 0, %s58
      %s73 = sphi 0, %s59
      %s81 = sphi 0, %s83
      %s84 = sphi 0, %s81
      %s85 = sphi 0, %s84
      %s101 = sphi 0, %s85
    $region4: #{tpu_custom_call.1} parent=1 // loop_header_branch
      %11 = sbr.rel (%p9) target = $region8
    $region5: #{tpu_custom_call.1} parent=1 // loop_body
      %s13 = ssub.s32 %s8, 1
      %s14 = ssub.s32 %s8, 2
      %s21 = sadd.s32 1, %s16
      %p22 = scmp.ge.s32.totalorder %s21, 2
      %s23 = scalar_select %p22, 0, %s21
      %s24 = sadd.s32 1, %s15
      %s25 = scalar_select %p22, %s24, %s15
      %p26 = scmp.ge.s32.totalorder %s25, 2
      %s27 = scalar_select %p26, 0, %s25
      %s28 = ssub.s32 %s15, %s27
      %s29 = ssub.s32 %s16, %s23
      %s30 = sor.u32 %s28, %s29
      %p31 = scmp.eq.s32.totalorder %s30, 0
      %s33 = sadd.s32 %s32, 1
      %s34 = scalar_select %p31, %s32, %s33
      %p37 = pneg %p31
      %p38 = scmp.eq.s32.totalorder %s8, 3
      %p39 = por %p37, %p38
      %p40 = scmp.ne.s32.totalorder %s32, %s35
      %p41 = scmp.eq.s32.totalorder %s8, 0
      %p42 = por %p40, %p41
      %p43 = scmp.ne.s32.totalorder %s32, %s35
      %p44 = scmp.eq.s32.totalorder %s13, 3
      %p45 = por %p43, %p44
      %p46 = scmp.ne.s32.totalorder %s35, %s36
      %p47 = scmp.eq.s32.totalorder %s13, 0
      %p48 = por %p46, %p47
      %p49 = scmp.ne.s32.totalorder %s35, %s36
      %p50 = scmp.eq.s32.totalorder %s14, 3
      %p51 = por %p49, %p50
      %p53 = scmp.ne.s32.totalorder %s36, %s52
      %p54 = scmp.eq.s32.totalorder %s14, 0
      %p55 = por %p53, %p54
      %s57 = sadd.s32 %s56, 1
      %p60 = scmp.eq.s32.totalorder %s8, 3
      %p61 = scmp.ne.s32.totalorder %s56, %s58
      %p62 = scmp.eq.s32.totalorder %s8, 0
      %p63 = por %p61, %p62
      %p64 = scmp.ne.s32.totalorder %s56, %s58
      %p65 = scmp.eq.s32.totalorder %s13, 3
      %p66 = por %p64, %p65
      %p67 = scmp.ne.s32.totalorder %s58, %s59
      %p68 = scmp.eq.s32.totalorder %s13, 0
      %p69 = por %p67, %p68
      %p70 = scmp.ne.s32.totalorder %s58, %s59
      %p71 = scmp.eq.s32.totalorder %s14, 3
      %p72 = por %p70, %p71
      %p74 = scmp.ne.s32.totalorder %s59, %s73
      %p75 = scmp.eq.s32.totalorder %s14, 0
      %p76 = por %p74, %p75
      %s77 = ssub.s32 %s15, %s27
      %s78 = ssub.s32 %s16, %s23
      %s79 = sor.u32 %s77, %s78
      %p80 = scmp.eq.s32.totalorder %s79, 0
      %s82 = sadd.s32 %s81, 1
      %s83 = scalar_select %p80, %s81, %s82
      %p86 = pneg %p80
      %p87 = scmp.eq.s32.totalorder %s8, 3
      %p88 = por %p86, %p87
      %p89 = scmp.ne.s32.totalorder %s81, %s84
      %p90 = scmp.eq.s32.totalorder %s8, 0
      %p91 = por %p89, %p90
      %p92 = scmp.ne.s32.totalorder %s81, %s84
      %p93 = scmp.eq.s32.totalorder %s13, 3
      %p94 = por %p92, %p93
      %p95 = scmp.ne.s32.totalorder %s84, %s85
      %p96 = scmp.eq.s32.totalorder %s13, 0
      %p97 = por %p95, %p96
      %p98 = scmp.ne.s32.totalorder %s84, %s85
      %p99 = scmp.eq.s32.totalorder %s14, 3
      %p100 = por %p98, %p99
      %p102 = scmp.ne.s32.totalorder %s85, %s101
      %p103 = scmp.eq.s32.totalorder %s14, 0
      %p104 = por %p102, %p103
      %p105 = scmp.le.s32.totalorder 1, %s8
      %p106 = scmp.lt.s32.totalorder %s8, 5
      %p107 = pnand %p105, %p106
      %p108 = pneg %p107
      // Predicated region
      $region9: #{tpu_custom_call.1} parent=5 // pred_check
        _
      $region10: #{tpu_custom_call.1} parent=5 // pred_check_branch
        %110 = sbr.rel (%p107) target = $region12
      $region11: #{tpu_custom_call.1} parent=5 // pred_region
        %s111 = ssub.s32 %s8, 1
        // Predicated region
        $region13: #{tpu_custom_call.1} parent=11 // pred_check
          %p112 = pneg %p69
        $region14: #{tpu_custom_call.1} parent=11 // pred_check_branch
          %114 = sbr.rel (%p112) target = $region16
        $region15: #{tpu_custom_call.1} parent=11 // pred_region
          _
        $region16: #{tpu_custom_call.1} parent=11 // pred_fallthru
          _
      $region12: #{tpu_custom_call.1} parent=5 // pred_fallthru
        _
      %p115 = scmp.lt.s32.totalorder %s8, 4
      // Predicated region
      $region17: #{tpu_custom_call.1} parent=5 // pred_check
        %p116 = pneg %p115
      $region18: #{tpu_custom_call.1} parent=5 // pred_check_branch
        %118 = sbr.rel (%p116) target = $region20
      $region19: #{tpu_custom_call.1} parent=5 // pred_region
        // Predicated region
        $region21: #{tpu_custom_call.1} parent=19 // pred_check
          %p119 = pneg %p42
        $region22: #{tpu_custom_call.1} parent=19 // pred_check_branch
          %121 = sbr.rel (%p119) target = $region24
        $region23: #{tpu_custom_call.1} parent=19 // pred_region
          %s122 = smul.u32 16, %s16
          %p123 = scmp.lt.s32.totalorder %s15, 1
          %s124 = scalar_select %p123, %s15, 1
          %p125 = scmp.lt.s32.totalorder %s122, 31
          %s126 = scalar_select %p125, %s122, 31
          %s127 = smul.addr %s126, 2
          %s128 = smul.addr %s124, 64
          %s129 = sadd.s32 %s127, %s128
          %s130 = smul.addr %s129, 8
          %s131 = scalar_lea.vmem %s0, %s130
          %s132 = smul.u32 16, %s16
        $region24: #{tpu_custom_call.1} parent=19 // pred_fallthru
          _
      $region20: #{tpu_custom_call.1} parent=5 // pred_fallthru
        _
      %p133 = scmp.le.s32.totalorder 1, %s8
      %p134 = scmp.lt.s32.totalorder %s8, 5
      %p135 = pnand %p133, %p134
      %p136 = pneg %p135
      // Predicated region
      $region25: #{tpu_custom_call.1} parent=5 // pred_check
        _
      $region26: #{tpu_custom_call.1} parent=5 // pred_check_branch
        %138 = sbr.rel (%p135) target = $region28
      $region27: #{tpu_custom_call.1} parent=5 // pred_region
        %s139 = ssub.s32 %s8, 1
        %s140 = smul.u32 16, %s18
        %p141 = scmp.lt.s32.totalorder %s17, 1
        %s142 = scalar_select %p141, %s17, 1
        %p143 = scmp.lt.s32.totalorder %s140, 31
        %s144 = scalar_select %p143, %s140, 31
        %s145 = smul.addr %s144, 2
        %s146 = smul.addr %s142, 64
        %s147 = sadd.s32 %s145, %s146
        %s148 = smul.addr %s147, 8
        %s149 = scalar_lea.vmem %s0, %s148
        %p150 = pneg %p48
        %p151 = pneg %p45
        %p152 = pneg %p69
        %p153 = pneg %p66
        %p154 = pneg %p97
        %p155 = pneg %p94
        %s156 = sand.u32 %s84, 1
        %s157 = sand.u32 %s84, 1
        %s158 = smul.addr %s157, 1536
        %s159 = scalar_lea.vmem [#allocation2], %s158
        %s160 = smul.u32 16, %s18
        %p161 = scmp.lt.s32.totalorder %s17, 1
        %s162 = scalar_select %p161, %s17, 1
        %p163 = scmp.lt.s32.totalorder %s160, 31
        %s164 = scalar_select %p163, %s160, 31
        %s165 = smul.addr %s164, 2
        %s166 = smul.addr %s162, 64
        %s167 = sadd.s32 %s165, %s166
        %s168 = smul.addr %s167, 8
        %s169 = scalar_lea.vmem %s0, %s168
        %s170 = smul.u32 16, %s18
        %s171 = smul.u32 16, %s18
        %v172 = vld [vmem:[%s169] sm:$0xff]
        %v173 = vld [vmem:[%s169 + $0x8] sm:$0xff]
        %v174 = vld [vmem:[%s169 + $0x10] sm:$0xff]
        %v175 = vld [vmem:[%s169 + $0x18] sm:$0xff]
        %v176 = vld [vmem:[%s169 + $0x20] sm:$0xff]
        %v177 = vld [vmem:[%s169 + $0x28] sm:$0xff]
        %v178 = vld [vmem:[%s169 + $0x30] sm:$0xff]
        %v179 = vld [vmem:[%s169 + $0x38] sm:$0xff]
        %v180 = vld [vmem:[%s169 + $0x40] sm:$0xff]
        %v181 = vld [vmem:[%s169 + $0x48] sm:$0xff]
        %v182 = vld [vmem:[%s169 + $0x50] sm:$0xff]
        %v183 = vld [vmem:[%s169 + $0x58] sm:$0xff]
        %v184 = vld [vmem:[%s169 + $0x60] sm:$0xff]
        %v185 = vld [vmem:[%s169 + $0x68] sm:$0xff]
        %v186 = vld [vmem:[%s169 + $0x70] sm:$0xff]
        %v187 = vld [vmem:[%s169 + $0x78] sm:$0xff]
        %v188 = vld [vmem:[%s169 + $0x80] sm:$0xff]
        %v189 = vld [vmem:[%s169 + $0x88] sm:$0xff]
        %v190 = vld [vmem:[%s169 + $0x90] sm:$0xff]
        %v191 = vld [vmem:[%s169 + $0x98] sm:$0xff]
        %v192 = vld [vmem:[%s169 + $0xa0] sm:$0xff]
        %v193 = vld [vmem:[%s169 + $0xa8] sm:$0xff]
        %v194 = vld [vmem:[%s169 + $0xb0] sm:$0xff]
        %v195 = vld [vmem:[%s169 + $0xb8] sm:$0xff]
        %v196 = vld [vmem:[%s169 + $0xc0] sm:$0xff]
        %v197 = vld [vmem:[%s169 + $0xc8] sm:$0xff]
        %v198 = vld [vmem:[%s169 + $0xd0] sm:$0xff]
        %v199 = vld [vmem:[%s169 + $0xd8] sm:$0xff]
        %v200 = vld [vmem:[%s169 + $0xe0] sm:$0xff]
        %v201 = vld [vmem:[%s169 + $0xe8] sm:$0xff]
        %v202 = vld [vmem:[%s169 + $0xf0] sm:$0xff]
        %v203 = vld [vmem:[%s169 + $0xf8] sm:$0xff]
        %v204 = vld [vmem:[%s1] sm:$0xff]
        %v205 = vld [vmem:[%s1 + $0x8] sm:$0xff]
        %v206 = vld [vmem:[%s1 + $0x10] sm:$0xff]
        %v207 = vld [vmem:[%s1 + $0x18] sm:$0xff]
        %v208 = vld [vmem:[%s1 + $0x20] sm:$0xff]
        %v209 = vld [vmem:[%s1 + $0x28] sm:$0xff]
        %v210 = vld [vmem:[%s1 + $0x30] sm:$0xff]
        %v211 = vld [vmem:[%s1 + $0x38] sm:$0xff]
        %v212 = vld [vmem:[%s1 + $0x40] sm:$0xff]
        %v213 = vld [vmem:[%s1 + $0x48] sm:$0xff]
        %v214 = vld [vmem:[%s1 + $0x50] sm:$0xff]
        %v215 = vld [vmem:[%s1 + $0x58] sm:$0xff]
        %v216 = vld [vmem:[%s1 + $0x60] sm:$0xff]
        %v217 = vld [vmem:[%s1 + $0x68] sm:$0xff]
        %v218 = vld [vmem:[%s1 + $0x70] sm:$0xff]
        %v219 = vld [vmem:[%s1 + $0x78] sm:$0xff]
        %v220 = vld [vmem:[%s1 + $0x80] sm:$0xff]
        %v221 = vld [vmem:[%s1 + $0x88] sm:$0xff]
        %v222 = vld [vmem:[%s1 + $0x90] sm:$0xff]
        %v223 = vld [vmem:[%s1 + $0x98] sm:$0xff]
        %v224 = vld [vmem:[%s1 + $0xa0] sm:$0xff]
        %v225 = vld [vmem:[%s1 + $0xa8] sm:$0xff]
        %v226 = vld [vmem:[%s1 + $0xb0] sm:$0xff]
        %v227 = vld [vmem:[%s1 + $0xb8] sm:$0xff]
        %v228 = vld [vmem:[%s1 + $0xc0] sm:$0xff]
        %v229 = vld [vmem:[%s1 + $0xc8] sm:$0xff]
        %v230 = vld [vmem:[%s1 + $0xd0] sm:$0xff]
        %v231 = vld [vmem:[%s1 + $0xd8] sm:$0xff]
        %v232 = vld [vmem:[%s1 + $0xe0] sm:$0xff]
        %v233 = vld [vmem:[%s1 + $0xe8] sm:$0xff]
        %v234 = vld [vmem:[%s1 + $0xf0] sm:$0xff]
        %v235 = vld [vmem:[%s1 + $0xf8] sm:$0xff]
        %236 = vmatpush.msra.mxu0 %v219
        %237 = vmatpush.msra.mxu0 %v218
        %238 = vmatpush.msra.mxu0 %v217
        %239 = vmatpush.msra.mxu0 %v216
        %240 = vmatpush.msra.mxu0 %v215
        %241 = vmatpush.msra.mxu0 %v214
        %242 = vmatpush.msra.mxu0 %v213
        %243 = vmatpush.msra.mxu0 %v212
        %244 = vmatpush.msra.mxu0 %v211
        %245 = vmatpush.msra.mxu0 %v210
        %246 = vmatpush.msra.mxu0 %v209
        %247 = vmatpush.msra.mxu0 %v208
        %248 = vmatpush.msra.mxu0 %v207
        %249 = vmatpush.msra.mxu0 %v206
        %250 = vmatpush.msra.mxu0 %v205
        %251 = vmatpush.msra.mxu0 %v204
        %252 = vmatmul.f32.gmra.mxu0 %v172
        %v253 = vpop.f32.mrf.mxu0
        %v254 = vadd.f32 0.0, %v253
        %255 = vmatmul.f32.gmra.mxu0 %v174
        %v256 = vpop.f32.mrf.mxu0
        %v257 = vadd.f32 0.0, %v256
        %258 = vmatmul.f32.gmra.mxu0 %v176
        %v259 = vpop.f32.mrf.mxu0
        %v260 = vadd.f32 0.0, %v259
        %261 = vmatmul.f32.gmra.mxu0 %v178
        %v262 = vpop.f32.mrf.mxu0
        %v263 = vadd.f32 0.0, %v262
        %264 = vmatmul.f32.gmra.mxu0 %v180
        %v265 = vpop.f32.mrf.mxu0
        %v266 = vadd.f32 0.0, %v265
        %267 = vmatmul.f32.gmra.mxu0 %v182
        %v268 = vpop.f32.mrf.mxu0
        %v269 = vadd.f32 0.0, %v268
        %270 = vmatmul.f32.gmra.mxu0 %v184
        %v271 = vpop.f32.mrf.mxu0
        %v272 = vadd.f32 0.0, %v271
        %273 = vmatmul.f32.gmra.mxu0 %v186
        %v274 = vpop.f32.mrf.mxu0
        %v275 = vadd.f32 0.0, %v274
        %276 = vmatmul.f32.gmra.mxu0 %v188
        %v277 = vpop.f32.mrf.mxu0
        %v278 = vadd.f32 0.0, %v277
        %279 = vmatmul.f32.gmra.mxu0 %v190
        %v280 = vpop.f32.mrf.mxu0
        %v281 = vadd.f32 0.0, %v280
        %282 = vmatmul.f32.gmra.mxu0 %v192
        %v283 = vpop.f32.mrf.mxu0
        %v284 = vadd.f32 0.0, %v283
        %285 = vmatmul.f32.gmra.mxu0 %v194
        %v286 = vpop.f32.mrf.mxu0
        %v287 = vadd.f32 0.0, %v286
        %288 = vmatmul.f32.gmra.mxu0 %v196
        %v289 = vpop.f32.mrf.mxu0
        %v290 = vadd.f32 0.0, %v289
        %291 = vmatmul.f32.gmra.mxu0 %v198
        %v292 = vpop.f32.mrf.mxu0
        %v293 = vadd.f32 0.0, %v292
        %294 = vmatmul.f32.gmra.mxu0 %v200
        %v295 = vpop.f32.mrf.mxu0
        %v296 = vadd.f32 0.0, %v295
        %297 = vmatmul.f32.gmra.mxu0 %v202
        %v298 = vpop.f32.mrf.mxu0
        %v299 = vadd.f32 0.0, %v298
        %300 = vdwg.mxu0
        %301 = vmatpush.msra.mxu0 %v235
        %302 = vmatpush.msra.mxu0 %v234
        %303 = vmatpush.msra.mxu0 %v233
        %304 = vmatpush.msra.mxu0 %v232
        %305 = vmatpush.msra.mxu0 %v231
        %306 = vmatpush.msra.mxu0 %v230
        %307 = vmatpush.msra.mxu0 %v229
        %308 = vmatpush.msra.mxu0 %v228
        %309 = vmatpush.msra.mxu0 %v227
        %310 = vmatpush.msra.mxu0 %v226
        %311 = vmatpush.msra.mxu0 %v225
        %312 = vmatpush.msra.mxu0 %v224
        %313 = vmatpush.msra.mxu0 %v223
        %314 = vmatpush.msra.mxu0 %v222
        %315 = vmatpush.msra.mxu0 %v221
        %316 = vmatpush.msra.mxu0 %v220
        %317 = vmatmul.f32.gmra.mxu0 %v173
        %v318 = vpop.f32.mrf.mxu0
        %v319 = vadd.f32 %v254, %v318
        %320 = vmatmul.f32.gmra.mxu0 %v175
        %v321 = vpop.f32.mrf.mxu0
        %v322 = vadd.f32 %v257, %v321
        %323 = vmatmul.f32.gmra.mxu0 %v177
        %v324 = vpop.f32.mrf.mxu0
        %v325 = vadd.f32 %v260, %v324
        %326 = vmatmul.f32.gmra.mxu0 %v179
        %v327 = vpop.f32.mrf.mxu0
        %v328 = vadd.f32 %v263, %v327
        %329 = vmatmul.f32.gmra.mxu0 %v181
        %v330 = vpop.f32.mrf.mxu0
        %v331 = vadd.f32 %v266, %v330
        %332 = vmatmul.f32.gmra.mxu0 %v183
        %v333 = vpop.f32.mrf.mxu0
        %v334 = vadd.f32 %v269, %v333
        %335 = vmatmul.f32.gmra.mxu0 %v185
        %v336 = vpop.f32.mrf.mxu0
        %v337 = vadd.f32 %v272, %v336
        %338 = vmatmul.f32.gmra.mxu0 %v187
        %v339 = vpop.f32.mrf.mxu0
        %v340 = vadd.f32 %v275, %v339
        %341 = vmatmul.f32.gmra.mxu0 %v189
        %v342 = vpop.f32.mrf.mxu0
        %v343 = vadd.f32 %v278, %v342
        %344 = vmatmul.f32.gmra.mxu0 %v191
        %v345 = vpop.f32.mrf.mxu0
        %v346 = vadd.f32 %v281, %v345
        %347 = vmatmul.f32.gmra.mxu0 %v193
        %v348 = vpop.f32.mrf.mxu0
        %v349 = vadd.f32 %v284, %v348
        %350 = vmatmul.f32.gmra.mxu0 %v195
        %v351 = vpop.f32.mrf.mxu0
        %v352 = vadd.f32 %v287, %v351
        %353 = vmatmul.f32.gmra.mxu0 %v197
        %v354 = vpop.f32.mrf.mxu0
        %v355 = vadd.f32 %v290, %v354
        %356 = vmatmul.f32.gmra.mxu0 %v199
        %v357 = vpop.f32.mrf.mxu0
        %v358 = vadd.f32 %v293, %v357
        %359 = vmatmul.f32.gmra.mxu0 %v201
        %v360 = vpop.f32.mrf.mxu0
        %v361 = vadd.f32 %v296, %v360
        %362 = vmatmul.f32.gmra.mxu0 %v203
        %v363 = vpop.f32.mrf.mxu0
        %v364 = vadd.f32 %v299, %v363
        %365 = vdwg.mxu0
        %vm366 = vcmask 523264
        %367 = vst.msk [vmem:[%s159] sm:$0xff] %vm366, %v319
        %368 = vst.msk [vmem:[%s159 + $0x8] sm:$0xff] %vm366, %v322
        %369 = vst.msk [vmem:[%s159 + $0x10] sm:$0xff] %vm366, %v325
        %370 = vst.msk [vmem:[%s159 + $0x18] sm:$0xff] %vm366, %v328
        %371 = vst.msk [vmem:[%s159 + $0x20] sm:$0xff] %vm366, %v331
        %372 = vst.msk [vmem:[%s159 + $0x28] sm:$0xff] %vm366, %v334
        %373 = vst.msk [vmem:[%s159 + $0x30] sm:$0xff] %vm366, %v337
        %374 = vst.msk [vmem:[%s159 + $0x38] sm:$0xff] %vm366, %v340
        %375 = vst.msk [vmem:[%s159 + $0x40] sm:$0xff] %vm366, %v343
        %376 = vst.msk [vmem:[%s159 + $0x48] sm:$0xff] %vm366, %v346
        %377 = vst.msk [vmem:[%s159 + $0x50] sm:$0xff] %vm366, %v349
        %378 = vst.msk [vmem:[%s159 + $0x58] sm:$0xff] %vm366, %v352
        %379 = vst.msk [vmem:[%s159 + $0x60] sm:$0xff] %vm366, %v355
        %380 = vst.msk [vmem:[%s159 + $0x68] sm:$0xff] %vm366, %v358
        %381 = vst.msk [vmem:[%s159 + $0x70] sm:$0xff] %vm366, %v361
        %382 = vst.msk [vmem:[%s159 + $0x78] sm:$0xff] %vm366, %v364
        %s383 = scalar_lea.vmem %s1, 256
        %v384 = vld [vmem:[%s383] sm:$0xff]
        %v385 = vld [vmem:[%s383 + $0x8] sm:$0xff]
        %v386 = vld [vmem:[%s383 + $0x10] sm:$0xff]
        %v387 = vld [vmem:[%s383 + $0x18] sm:$0xff]
        %v388 = vld [vmem:[%s383 + $0x20] sm:$0xff]
        %v389 = vld [vmem:[%s383 + $0x28] sm:$0xff]
        %v390 = vld [vmem:[%s383 + $0x30] sm:$0xff]
        %v391 = vld [vmem:[%s383 + $0x38] sm:$0xff]
        %v392 = vld [vmem:[%s383 + $0x40] sm:$0xff]
        %v393 = vld [vmem:[%s383 + $0x48] sm:$0xff]
        %v394 = vld [vmem:[%s383 + $0x50] sm:$0xff]
        %v395 = vld [vmem:[%s383 + $0x58] sm:$0xff]
        %v396 = vld [vmem:[%s383 + $0x60] sm:$0xff]
        %v397 = vld [vmem:[%s383 + $0x68] sm:$0xff]
        %v398 = vld [vmem:[%s383 + $0x70] sm:$0xff]
        %v399 = vld [vmem:[%s383 + $0x78] sm:$0xff]
        %v400 = vld [vmem:[%s383 + $0x80] sm:$0xff]
        %v401 = vld [vmem:[%s383 + $0x88] sm:$0xff]
        %v402 = vld [vmem:[%s383 + $0x90] sm:$0xff]
        %v403 = vld [vmem:[%s383 + $0x98] sm:$0xff]
        %v404 = vld [vmem:[%s383 + $0xa0] sm:$0xff]
        %v405 = vld [vmem:[%s383 + $0xa8] sm:$0xff]
        %v406 = vld [vmem:[%s383 + $0xb0] sm:$0xff]
        %v407 = vld [vmem:[%s383 + $0xb8] sm:$0xff]
        %v408 = vld [vmem:[%s383 + $0xc0] sm:$0xff]
        %v409 = vld [vmem:[%s383 + $0xc8] sm:$0xff]
        %v410 = vld [vmem:[%s383 + $0xd0] sm:$0xff]
        %v411 = vld [vmem:[%s383 + $0xd8] sm:$0xff]
        %v412 = vld [vmem:[%s383 + $0xe0] sm:$0xff]
        %v413 = vld [vmem:[%s383 + $0xe8] sm:$0xff]
        %v414 = vld [vmem:[%s383 + $0xf0] sm:$0xff]
        %v415 = vld [vmem:[%s383 + $0xf8] sm:$0xff]
        %416 = vmatpush.msra.mxu0 %v399
        %417 = vmatpush.msra.mxu0 %v398
        %418 = vmatpush.msra.mxu0 %v397
        %419 = vmatpush.msra.mxu0 %v396
        %420 = vmatpush.msra.mxu0 %v395
        %421 = vmatpush.msra.mxu0 %v394
        %422 = vmatpush.msra.mxu0 %v393
        %423 = vmatpush.msra.mxu0 %v392
        %424 = vmatpush.msra.mxu0 %v391
        %425 = vmatpush.msra.mxu0 %v390
        %426 = vmatpush.msra.mxu0 %v389
        %427 = vmatpush.msra.mxu0 %v388
        %428 = vmatpush.msra.mxu0 %v387
        %429 = vmatpush.msra.mxu0 %v386
        %430 = vmatpush.msra.mxu0 %v385
        %431 = vmatpush.msra.mxu0 %v384
        %432 = vmatmul.f32.gmra.mxu0 %v172
        %v433 = vpop.f32.mrf.mxu0
        %v434 = vadd.f32 0.0, %v433
        %435 = vmatmul.f32.gmra.mxu0 %v174
        %v436 = vpop.f32.mrf.mxu0
        %v437 = vadd.f32 0.0, %v436
        %438 = vmatmul.f32.gmra.mxu0 %v176
        %v439 = vpop.f32.mrf.mxu0
        %v440 = vadd.f32 0.0, %v439
        %441 = vmatmul.f32.gmra.mxu0 %v178
        %v442 = vpop.f32.mrf.mxu0
        %v443 = vadd.f32 0.0, %v442
        %444 = vmatmul.f32.gmra.mxu0 %v180
        %v445 = vpop.f32.mrf.mxu0
        %v446 = vadd.f32 0.0, %v445
        %447 = vmatmul.f32.gmra.mxu0 %v182
        %v448 = vpop.f32.mrf.mxu0
        %v449 = vadd.f32 0.0, %v448
        %450 = vmatmul.f32.gmra.mxu0 %v184
        %v451 = vpop.f32.mrf.mxu0
        %v452 = vadd.f32 0.0, %v451
        %453 = vmatmul.f32.gmra.mxu0 %v186
        %v454 = vpop.f32.mrf.mxu0
        %v455 = vadd.f32 0.0, %v454
        %456 = vmatmul.f32.gmra.mxu0 %v188
        %v457 = vpop.f32.mrf.mxu0
        %v458 = vadd.f32 0.0, %v457
        %459 = vmatmul.f32.gmra.mxu0 %v190
        %v460 = vpop.f32.mrf.mxu0
        %v461 = vadd.f32 0.0, %v460
        %462 = vmatmul.f32.gmra.mxu0 %v192
        %v463 = vpop.f32.mrf.mxu0
        %v464 = vadd.f32 0.0, %v463
        %465 = vmatmul.f32.gmra.mxu0 %v194
        %v466 = vpop.f32.mrf.mxu0
        %v467 = vadd.f32 0.0, %v466
        %468 = vmatmul.f32.gmra.mxu0 %v196
        %v469 = vpop.f32.mrf.mxu0
        %v470 = vadd.f32 0.0, %v469
        %471 = vmatmul.f32.gmra.mxu0 %v198
        %v472 = vpop.f32.mrf.mxu0
        %v473 = vadd.f32 0.0, %v472
        %474 = vmatmul.f32.gmra.mxu0 %v200
        %v475 = vpop.f32.mrf.mxu0
        %v476 = vadd.f32 0.0, %v475
        %477 = vmatmul.f32.gmra.mxu0 %v202
        %v478 = vpop.f32.mrf.mxu0
        %v479 = vadd.f32 0.0, %v478
        %480 = vdwg.mxu0
        %481 = vmatpush.msra.mxu0 %v415
        %482 = vmatpush.msra.mxu0 %v414
        %483 = vmatpush.msra.mxu0 %v413
        %484 = vmatpush.msra.mxu0 %v412
        %485 = vmatpush.msra.mxu0 %v411
        %486 = vmatpush.msra.mxu0 %v410
        %487 = vmatpush.msra.mxu0 %v409
        %488 = vmatpush.msra.mxu0 %v408
        %489 = vmatpush.msra.mxu0 %v407
        %490 = vmatpush.msra.mxu0 %v406
        %491 = vmatpush.msra.mxu0 %v405
        %492 = vmatpush.msra.mxu0 %v404
        %493 = vmatpush.msra.mxu0 %v403
        %494 = vmatpush.msra.mxu0 %v402
        %495 = vmatpush.msra.mxu0 %v401
        %496 = vmatpush.msra.mxu0 %v400
        %497 = vmatmul.f32.gmra.mxu0 %v173
        %v498 = vpop.f32.mrf.mxu0
        %v499 = vadd.f32 %v434, %v498
        %500 = vmatmul.f32.gmra.mxu0 %v175
        %v501 = vpop.f32.mrf.mxu0
        %v502 = vadd.f32 %v437, %v501
        %503 = vmatmul.f32.gmra.mxu0 %v177
        %v504 = vpop.f32.mrf.mxu0
        %v505 = vadd.f32 %v440, %v504
        %506 = vmatmul.f32.gmra.mxu0 %v179
        %v507 = vpop.f32.mrf.mxu0
        %v508 = vadd.f32 %v443, %v507
        %509 = vmatmul.f32.gmra.mxu0 %v181
        %v510 = vpop.f32.mrf.mxu0
        %v511 = vadd.f32 %v446, %v510
        %512 = vmatmul.f32.gmra.mxu0 %v183
        %v513 = vpop.f32.mrf.mxu0
        %v514 = vadd.f32 %v449, %v513
        %515 = vmatmul.f32.gmra.mxu0 %v185
        %v516 = vpop.f32.mrf.mxu0
        %v517 = vadd.f32 %v452, %v516
        %518 = vmatmul.f32.gmra.mxu0 %v187
        %v519 = vpop.f32.mrf.mxu0
        %v520 = vadd.f32 %v455, %v519
        %521 = vmatmul.f32.gmra.mxu0 %v189
        %v522 = vpop.f32.mrf.mxu0
        %v523 = vadd.f32 %v458, %v522
        %524 = vmatmul.f32.gmra.mxu0 %v191
        %v525 = vpop.f32.mrf.mxu0
        %v526 = vadd.f32 %v461, %v525
        %527 = vmatmul.f32.gmra.mxu0 %v193
        %v528 = vpop.f32.mrf.mxu0
        %v529 = vadd.f32 %v464, %v528
        %530 = vmatmul.f32.gmra.mxu0 %v195
        %v531 = vpop.f32.mrf.mxu0
        %v532 = vadd.f32 %v467, %v531
        %533 = vmatmul.f32.gmra.mxu0 %v197
        %v534 = vpop.f32.mrf.mxu0
        %v535 = vadd.f32 %v470, %v534
        %536 = vmatmul.f32.gmra.mxu0 %v199
        %v537 = vpop.f32.mrf.mxu0
        %v538 = vadd.f32 %v473, %v537
        %539 = vmatmul.f32.gmra.mxu0 %v201
        %v540 = vpop.f32.mrf.mxu0
        %v541 = vadd.f32 %v476, %v540
        %542 = vmatmul.f32.gmra.mxu0 %v203
        %v543 = vpop.f32.mrf.mxu0
        %v544 = vadd.f32 %v479, %v543
        %545 = vdwg.mxu0
        %s546 = scalar_lea.vmem %s159, 128 [#allocation2]
        %547 = vst.msk [vmem:[%s546] sm:$0xff] %vm366, %v499
        %548 = vst.msk [vmem:[%s546 + $0x8] sm:$0xff] %vm366, %v502
        %549 = vst.msk [vmem:[%s546 + $0x10] sm:$0xff] %vm366, %v505
        %550 = vst.msk [vmem:[%s546 + $0x18] sm:$0xff] %vm366, %v508
        %551 = vst.msk [vmem:[%s546 + $0x20] sm:$0xff] %vm366, %v511
        %552 = vst.msk [vmem:[%s546 + $0x28] sm:$0xff] %vm366, %v514
        %553 = vst.msk [vmem:[%s546 + $0x30] sm:$0xff] %vm366, %v517
        %554 = vst.msk [vmem:[%s546 + $0x38] sm:$0xff] %vm366, %v520
        %555 = vst.msk [vmem:[%s546 + $0x40] sm:$0xff] %vm366, %v523
        %556 = vst.msk [vmem:[%s546 + $0x48] sm:$0xff] %vm366, %v526
        %557 = vst.msk [vmem:[%s546 + $0x50] sm:$0xff] %vm366, %v529
        %558 = vst.msk [vmem:[%s546 + $0x58] sm:$0xff] %vm366, %v532
        %559 = vst.msk [vmem:[%s546 + $0x60] sm:$0xff] %vm366, %v535
        %560 = vst.msk [vmem:[%s546 + $0x68] sm:$0xff] %vm366, %v538
        %561 = vst.msk [vmem:[%s546 + $0x70] sm:$0xff] %vm366, %v541
        %562 = vst.msk [vmem:[%s546 + $0x78] sm:$0xff] %vm366, %v544
        %s563 = scalar_lea.vmem %s1, 512
        %v564 = vld [vmem:[%s563] sm:$0xff]
        %v565 = vld [vmem:[%s563 + $0x8] sm:$0xff]
        %v566 = vld [vmem:[%s563 + $0x10] sm:$0xff]
        %v567 = vld [vmem:[%s563 + $0x18] sm:$0xff]
        %v568 = vld [vmem:[%s563 + $0x20] sm:$0xff]
        %v569 = vld [vmem:[%s563 + $0x28] sm:$0xff]
        %v570 = vld [vmem:[%s563 + $0x30] sm:$0xff]
        %v571 = vld [vmem:[%s563 + $0x38] sm:$0xff]
        %v572 = vld [vmem:[%s563 + $0x40] sm:$0xff]
        %v573 = vld [vmem:[%s563 + $0x48] sm:$0xff]
        %v574 = vld [vmem:[%s563 + $0x50] sm:$0xff]
        %v575 = vld [vmem:[%s563 + $0x58] sm:$0xff]
        %v576 = vld [vmem:[%s563 + $0x60] sm:$0xff]
        %v577 = vld [vmem:[%s563 + $0x68] sm:$0xff]
        %v578 = vld [vmem:[%s563 + $0x70] sm:$0xff]
        %v579 = vld [vmem:[%s563 + $0x78] sm:$0xff]
        %v580 = vld [vmem:[%s563 + $0x80] sm:$0xff]
        %v581 = vld [vmem:[%s563 + $0x88] sm:$0xff]
        %v582 = vld [vmem:[%s563 + $0x90] sm:$0xff]
        %v583 = vld [vmem:[%s563 + $0x98] sm:$0xff]
        %v584 = vld [vmem:[%s563 + $0xa0] sm:$0xff]
        %v585 = vld [vmem:[%s563 + $0xa8] sm:$0xff]
        %v586 = vld [vmem:[%s563 + $0xb0] sm:$0xff]
        %v587 = vld [vmem:[%s563 + $0xb8] sm:$0xff]
        %v588 = vld [vmem:[%s563 + $0xc0] sm:$0xff]
        %v589 = vld [vmem:[%s563 + $0xc8] sm:$0xff]
        %v590 = vld [vmem:[%s563 + $0xd0] sm:$0xff]
        %v591 = vld [vmem:[%s563 + $0xd8] sm:$0xff]
        %v592 = vld [vmem:[%s563 + $0xe0] sm:$0xff]
        %v593 = vld [vmem:[%s563 + $0xe8] sm:$0xff]
        %v594 = vld [vmem:[%s563 + $0xf0] sm:$0xff]
        %v595 = vld [vmem:[%s563 + $0xf8] sm:$0xff]
        %596 = vmatpush.msra.mxu0 %v579
        %597 = vmatpush.msra.mxu0 %v578
        %598 = vmatpush.msra.mxu0 %v577
        %599 = vmatpush.msra.mxu0 %v576
        %600 = vmatpush.msra.mxu0 %v575
        %601 = vmatpush.msra.mxu0 %v574
        %602 = vmatpush.msra.mxu0 %v573
        %603 = vmatpush.msra.mxu0 %v572
        %604 = vmatpush.msra.mxu0 %v571
        %605 = vmatpush.msra.mxu0 %v570
        %606 = vmatpush.msra.mxu0 %v569
        %607 = vmatpush.msra.mxu0 %v568
        %608 = vmatpush.msra.mxu0 %v567
        %609 = vmatpush.msra.mxu0 %v566
        %610 = vmatpush.msra.mxu0 %v565
        %611 = vmatpush.msra.mxu0 %v564
        %612 = vmatmul.f32.gmra.mxu0 %v172
        %v613 = vpop.f32.mrf.mxu0
        %v614 = vadd.f32 0.0, %v613
        %615 = vmatmul.f32.gmra.mxu0 %v174
        %v616 = vpop.f32.mrf.mxu0
        %v617 = vadd.f32 0.0, %v616
        %618 = vmatmul.f32.gmra.mxu0 %v176
        %v619 = vpop.f32.mrf.mxu0
        %v620 = vadd.f32 0.0, %v619
        %621 = vmatmul.f32.gmra.mxu0 %v178
        %v622 = vpop.f32.mrf.mxu0
        %v623 = vadd.f32 0.0, %v622
        %624 = vmatmul.f32.gmra.mxu0 %v180
        %v625 = vpop.f32.mrf.mxu0
        %v626 = vadd.f32 0.0, %v625
        %627 = vmatmul.f32.gmra.mxu0 %v182
        %v628 = vpop.f32.mrf.mxu0
        %v629 = vadd.f32 0.0, %v628
        %630 = vmatmul.f32.gmra.mxu0 %v184
        %v631 = vpop.f32.mrf.mxu0
        %v632 = vadd.f32 0.0, %v631
        %633 = vmatmul.f32.gmra.mxu0 %v186
        %v634 = vpop.f32.mrf.mxu0
        %v635 = vadd.f32 0.0, %v634
        %636 = vmatmul.f32.gmra.mxu0 %v188
        %v637 = vpop.f32.mrf.mxu0
        %v638 = vadd.f32 0.0, %v637
        %639 = vmatmul.f32.gmra.mxu0 %v190
        %v640 = vpop.f32.mrf.mxu0
        %v641 = vadd.f32 0.0, %v640
        %642 = vmatmul.f32.gmra.mxu0 %v192
        %v643 = vpop.f32.mrf.mxu0
        %v644 = vadd.f32 0.0, %v643
        %645 = vmatmul.f32.gmra.mxu0 %v194
        %v646 = vpop.f32.mrf.mxu0
        %v647 = vadd.f32 0.0, %v646
        %648 = vmatmul.f32.gmra.mxu0 %v196
        %v649 = vpop.f32.mrf.mxu0
        %v650 = vadd.f32 0.0, %v649
        %651 = vmatmul.f32.gmra.mxu0 %v198
        %v652 = vpop.f32.mrf.mxu0
        %v653 = vadd.f32 0.0, %v652
        %654 = vmatmul.f32.gmra.mxu0 %v200
        %v655 = vpop.f32.mrf.mxu0
        %v656 = vadd.f32 0.0, %v655
        %657 = vmatmul.f32.gmra.mxu0 %v202
        %v658 = vpop.f32.mrf.mxu0
        %v659 = vadd.f32 0.0, %v658
        %660 = vdwg.mxu0
        %661 = vmatpush.msra.mxu0 %v595
        %662 = vmatpush.msra.mxu0 %v594
        %663 = vmatpush.msra.mxu0 %v593
        %664 = vmatpush.msra.mxu0 %v592
        %665 = vmatpush.msra.mxu0 %v591
        %666 = vmatpush.msra.mxu0 %v590
        %667 = vmatpush.msra.mxu0 %v589
        %668 = vmatpush.msra.mxu0 %v588
        %669 = vmatpush.msra.mxu0 %v587
        %670 = vmatpush.msra.mxu0 %v586
        %671 = vmatpush.msra.mxu0 %v585
        %672 = vmatpush.msra.mxu0 %v584
        %673 = vmatpush.msra.mxu0 %v583
        %674 = vmatpush.msra.mxu0 %v582
        %675 = vmatpush.msra.mxu0 %v581
        %676 = vmatpush.msra.mxu0 %v580
        %677 = vmatmul.f32.gmra.mxu0 %v173
        %v678 = vpop.f32.mrf.mxu0
        %v679 = vadd.f32 %v614, %v678
        %680 = vmatmul.f32.gmra.mxu0 %v175
        %v681 = vpop.f32.mrf.mxu0
        %v682 = vadd.f32 %v617, %v681
        %683 = vmatmul.f32.gmra.mxu0 %v177
        %v684 = vpop.f32.mrf.mxu0
        %v685 = vadd.f32 %v620, %v684
        %686 = vmatmul.f32.gmra.mxu0 %v179
        %v687 = vpop.f32.mrf.mxu0
        %v688 = vadd.f32 %v623, %v687
        %689 = vmatmul.f32.gmra.mxu0 %v181
        %v690 = vpop.f32.mrf.mxu0
        %v691 = vadd.f32 %v626, %v690
        %692 = vmatmul.f32.gmra.mxu0 %v183
        %v693 = vpop.f32.mrf.mxu0
        %v694 = vadd.f32 %v629, %v693
        %695 = vmatmul.f32.gmra.mxu0 %v185
        %v696 = vpop.f32.mrf.mxu0
        %v697 = vadd.f32 %v632, %v696
        %698 = vmatmul.f32.gmra.mxu0 %v187
        %v699 = vpop.f32.mrf.mxu0
        %v700 = vadd.f32 %v635, %v699
        %701 = vmatmul.f32.gmra.mxu0 %v189
        %v702 = vpop.f32.mrf.mxu0
        %v703 = vadd.f32 %v638, %v702
        %704 = vmatmul.f32.gmra.mxu0 %v191
        %v705 = vpop.f32.mrf.mxu0
        %v706 = vadd.f32 %v641, %v705
        %707 = vmatmul.f32.gmra.mxu0 %v193
        %v708 = vpop.f32.mrf.mxu0
        %v709 = vadd.f32 %v644, %v708
        %710 = vmatmul.f32.gmra.mxu0 %v195
        %v711 = vpop.f32.mrf.mxu0
        %v712 = vadd.f32 %v647, %v711
        %713 = vmatmul.f32.gmra.mxu0 %v197
        %v714 = vpop.f32.mrf.mxu0
        %v715 = vadd.f32 %v650, %v714
        %716 = vmatmul.f32.gmra.mxu0 %v199
        %v717 = vpop.f32.mrf.mxu0
        %v718 = vadd.f32 %v653, %v717
        %719 = vmatmul.f32.gmra.mxu0 %v201
        %v720 = vpop.f32.mrf.mxu0
        %v721 = vadd.f32 %v656, %v720
        %722 = vmatmul.f32.gmra.mxu0 %v203
        %v723 = vpop.f32.mrf.mxu0
        %v724 = vadd.f32 %v659, %v723
        %725 = vdwg.mxu0
        %s726 = scalar_lea.vmem %s159, 256 [#allocation2]
        %727 = vst.msk [vmem:[%s726] sm:$0xff] %vm366, %v679
        %728 = vst.msk [vmem:[%s726 + $0x8] sm:$0xff] %vm366, %v682
        %729 = vst.msk [vmem:[%s726 + $0x10] sm:$0xff] %vm366, %v685
        %730 = vst.msk [vmem:[%s726 + $0x18] sm:$0xff] %vm366, %v688
        %731 = vst.msk [vmem:[%s726 + $0x20] sm:$0xff] %vm366, %v691
        %732 = vst.msk [vmem:[%s726 + $0x28] sm:$0xff] %vm366, %v694
        %733 = vst.msk [vmem:[%s726 + $0x30] sm:$0xff] %vm366, %v697
        %734 = vst.msk [vmem:[%s726 + $0x38] sm:$0xff] %vm366, %v700
        %735 = vst.msk [vmem:[%s726 + $0x40] sm:$0xff] %vm366, %v703
        %736 = vst.msk [vmem:[%s726 + $0x48] sm:$0xff] %vm366, %v706
        %737 = vst.msk [vmem:[%s726 + $0x50] sm:$0xff] %vm366, %v709
        %738 = vst.msk [vmem:[%s726 + $0x58] sm:$0xff] %vm366, %v712
        %739 = vst.msk [vmem:[%s726 + $0x60] sm:$0xff] %vm366, %v715
        %740 = vst.msk [vmem:[%s726 + $0x68] sm:$0xff] %vm366, %v718
        %741 = vst.msk [vmem:[%s726 + $0x70] sm:$0xff] %vm366, %v721
        %742 = vst.msk [vmem:[%s726 + $0x78] sm:$0xff] %vm366, %v724
        %s743 = scalar_lea.vmem %s1, 768
        %v744 = vld [vmem:[%s743] sm:$0xff]
        %v745 = vld [vmem:[%s743 + $0x8] sm:$0xff]
        %v746 = vld [vmem:[%s743 + $0x10] sm:$0xff]
        %v747 = vld [vmem:[%s743 + $0x18] sm:$0xff]
        %v748 = vld [vmem:[%s743 + $0x20] sm:$0xff]
        %v749 = vld [vmem:[%s743 + $0x28] sm:$0xff]
        %v750 = vld [vmem:[%s743 + $0x30] sm:$0xff]
        %v751 = vld [vmem:[%s743 + $0x38] sm:$0xff]
        %v752 = vld [vmem:[%s743 + $0x40] sm:$0xff]
        %v753 = vld [vmem:[%s743 + $0x48] sm:$0xff]
        %v754 = vld [vmem:[%s743 + $0x50] sm:$0xff]
        %v755 = vld [vmem:[%s743 + $0x58] sm:$0xff]
        %v756 = vld [vmem:[%s743 + $0x60] sm:$0xff]
        %v757 = vld [vmem:[%s743 + $0x68] sm:$0xff]
        %v758 = vld [vmem:[%s743 + $0x70] sm:$0xff]
        %v759 = vld [vmem:[%s743 + $0x78] sm:$0xff]
        %v760 = vld [vmem:[%s743 + $0x80] sm:$0xff]
        %v761 = vld [vmem:[%s743 + $0x88] sm:$0xff]
        %v762 = vld [vmem:[%s743 + $0x90] sm:$0xff]
        %v763 = vld [vmem:[%s743 + $0x98] sm:$0xff]
        %v764 = vld [vmem:[%s743 + $0xa0] sm:$0xff]
        %v765 = vld [vmem:[%s743 + $0xa8] sm:$0xff]
        %v766 = vld [vmem:[%s743 + $0xb0] sm:$0xff]
        %v767 = vld [vmem:[%s743 + $0xb8] sm:$0xff]
        %v768 = vld [vmem:[%s743 + $0xc0] sm:$0xff]
        %v769 = vld [vmem:[%s743 + $0xc8] sm:$0xff]
        %v770 = vld [vmem:[%s743 + $0xd0] sm:$0xff]
        %v771 = vld [vmem:[%s743 + $0xd8] sm:$0xff]
        %v772 = vld [vmem:[%s743 + $0xe0] sm:$0xff]
        %v773 = vld [vmem:[%s743 + $0xe8] sm:$0xff]
        %v774 = vld [vmem:[%s743 + $0xf0] sm:$0xff]
        %v775 = vld [vmem:[%s743 + $0xf8] sm:$0xff]
        %776 = vmatpush.msra.mxu0 %v759
        %777 = vmatpush.msra.mxu0 %v758
        %778 = vmatpush.msra.mxu0 %v757
        %779 = vmatpush.msra.mxu0 %v756
        %780 = vmatpush.msra.mxu0 %v755
        %781 = vmatpush.msra.mxu0 %v754
        %782 = vmatpush.msra.mxu0 %v753
        %783 = vmatpush.msra.mxu0 %v752
        %784 = vmatpush.msra.mxu0 %v751
        %785 = vmatpush.msra.mxu0 %v750
        %786 = vmatpush.msra.mxu0 %v749
        %787 = vmatpush.msra.mxu0 %v748
        %788 = vmatpush.msra.mxu0 %v747
        %789 = vmatpush.msra.mxu0 %v746
        %790 = vmatpush.msra.mxu0 %v745
        %791 = vmatpush.msra.mxu0 %v744
        %792 = vmatmul.f32.gmra.mxu0 %v172
        %v793 = vpop.f32.mrf.mxu0
        %v794 = vadd.f32 0.0, %v793
        %795 = vmatmul.f32.gmra.mxu0 %v174
        %v796 = vpop.f32.mrf.mxu0
        %v797 = vadd.f32 0.0, %v796
        %798 = vmatmul.f32.gmra.mxu0 %v176
        %v799 = vpop.f32.mrf.mxu0
        %v800 = vadd.f32 0.0, %v799
        %801 = vmatmul.f32.gmra.mxu0 %v178
        %v802 = vpop.f32.mrf.mxu0
        %v803 = vadd.f32 0.0, %v802
        %804 = vmatmul.f32.gmra.mxu0 %v180
        %v805 = vpop.f32.mrf.mxu0
        %v806 = vadd.f32 0.0, %v805
        %807 = vmatmul.f32.gmra.mxu0 %v182
        %v808 = vpop.f32.mrf.mxu0
        %v809 = vadd.f32 0.0, %v808
        %810 = vmatmul.f32.gmra.mxu0 %v184
        %v811 = vpop.f32.mrf.mxu0
        %v812 = vadd.f32 0.0, %v811
        %813 = vmatmul.f32.gmra.mxu0 %v186
        %v814 = vpop.f32.mrf.mxu0
        %v815 = vadd.f32 0.0, %v814
        %816 = vmatmul.f32.gmra.mxu0 %v188
        %v817 = vpop.f32.mrf.mxu0
        %v818 = vadd.f32 0.0, %v817
        %819 = vmatmul.f32.gmra.mxu0 %v190
        %v820 = vpop.f32.mrf.mxu0
        %v821 = vadd.f32 0.0, %v820
        %822 = vmatmul.f32.gmra.mxu0 %v192
        %v823 = vpop.f32.mrf.mxu0
        %v824 = vadd.f32 0.0, %v823
        %825 = vmatmul.f32.gmra.mxu0 %v194
        %v826 = vpop.f32.mrf.mxu0
        %v827 = vadd.f32 0.0, %v826
        %828 = vmatmul.f32.gmra.mxu0 %v196
        %v829 = vpop.f32.mrf.mxu0
        %v830 = vadd.f32 0.0, %v829
        %831 = vmatmul.f32.gmra.mxu0 %v198
        %v832 = vpop.f32.mrf.mxu0
        %v833 = vadd.f32 0.0, %v832
        %834 = vmatmul.f32.gmra.mxu0 %v200
        %v835 = vpop.f32.mrf.mxu0
        %v836 = vadd.f32 0.0, %v835
        %837 = vmatmul.f32.gmra.mxu0 %v202
        %v838 = vpop.f32.mrf.mxu0
        %v839 = vadd.f32 0.0, %v838
        %840 = vdwg.mxu0
        %841 = vmatpush.msra.mxu0 %v775
        %842 = vmatpush.msra.mxu0 %v774
        %843 = vmatpush.msra.mxu0 %v773
        %844 = vmatpush.msra.mxu0 %v772
        %845 = vmatpush.msra.mxu0 %v771
        %846 = vmatpush.msra.mxu0 %v770
        %847 = vmatpush.msra.mxu0 %v769
        %848 = vmatpush.msra.mxu0 %v768
        %849 = vmatpush.msra.mxu0 %v767
        %850 = vmatpush.msra.mxu0 %v766
        %851 = vmatpush.msra.mxu0 %v765
        %852 = vmatpush.msra.mxu0 %v764
        %853 = vmatpush.msra.mxu0 %v763
        %854 = vmatpush.msra.mxu0 %v762
        %855 = vmatpush.msra.mxu0 %v761
        %856 = vmatpush.msra.mxu0 %v760
        %857 = vmatmul.f32.gmra.mxu0 %v173
        %v858 = vpop.f32.mrf.mxu0
        %v859 = vadd.f32 %v794, %v858
        %860 = vmatmul.f32.gmra.mxu0 %v175
        %v861 = vpop.f32.mrf.mxu0
        %v862 = vadd.f32 %v797, %v861
        %863 = vmatmul.f32.gmra.mxu0 %v177
        %v864 = vpop.f32.mrf.mxu0
        %v865 = vadd.f32 %v800, %v864
        %866 = vmatmul.f32.gmra.mxu0 %v179
        %v867 = vpop.f32.mrf.mxu0
        %v868 = vadd.f32 %v803, %v867
        %869 = vmatmul.f32.gmra.mxu0 %v181
        %v870 = vpop.f32.mrf.mxu0
        %v871 = vadd.f32 %v806, %v870
        %872 = vmatmul.f32.gmra.mxu0 %v183
        %v873 = vpop.f32.mrf.mxu0
        %v874 = vadd.f32 %v809, %v873
        %875 = vmatmul.f32.gmra.mxu0 %v185
        %v876 = vpop.f32.mrf.mxu0
        %v877 = vadd.f32 %v812, %v876
        %878 = vmatmul.f32.gmra.mxu0 %v187
        %v879 = vpop.f32.mrf.mxu0
        %v880 = vadd.f32 %v815, %v879
        %881 = vmatmul.f32.gmra.mxu0 %v189
        %v882 = vpop.f32.mrf.mxu0
        %v883 = vadd.f32 %v818, %v882
        %884 = vmatmul.f32.gmra.mxu0 %v191
        %v885 = vpop.f32.mrf.mxu0
        %v886 = vadd.f32 %v821, %v885
        %887 = vmatmul.f32.gmra.mxu0 %v193
        %v888 = vpop.f32.mrf.mxu0
        %v889 = vadd.f32 %v824, %v888
        %890 = vmatmul.f32.gmra.mxu0 %v195
        %v891 = vpop.f32.mrf.mxu0
        %v892 = vadd.f32 %v827, %v891
        %893 = vmatmul.f32.gmra.mxu0 %v197
        %v894 = vpop.f32.mrf.mxu0
        %v895 = vadd.f32 %v830, %v894
        %896 = vmatmul.f32.gmra.mxu0 %v199
        %v897 = vpop.f32.mrf.mxu0
        %v898 = vadd.f32 %v833, %v897
        %899 = vmatmul.f32.gmra.mxu0 %v201
        %v900 = vpop.f32.mrf.mxu0
        %v901 = vadd.f32 %v836, %v900
        %902 = vmatmul.f32.gmra.mxu0 %v203
        %v903 = vpop.f32.mrf.mxu0
        %v904 = vadd.f32 %v839, %v903
        %905 = vdwg.mxu0
        %s906 = scalar_lea.vmem %s159, 384 [#allocation2]
        %907 = vst.msk [vmem:[%s906] sm:$0xff] %vm366, %v859
        %908 = vst.msk [vmem:[%s906 + $0x8] sm:$0xff] %vm366, %v862
        %909 = vst.msk [vmem:[%s906 + $0x10] sm:$0xff] %vm366, %v865
        %910 = vst.msk [vmem:[%s906 + $0x18] sm:$0xff] %vm366, %v868
        %911 = vst.msk [vmem:[%s906 + $0x20] sm:$0xff] %vm366, %v871
        %912 = vst.msk [vmem:[%s906 + $0x28] sm:$0xff] %vm366, %v874
        %913 = vst.msk [vmem:[%s906 + $0x30] sm:$0xff] %vm366, %v877
        %914 = vst.msk [vmem:[%s906 + $0x38] sm:$0xff] %vm366, %v880
        %915 = vst.msk [vmem:[%s906 + $0x40] sm:$0xff] %vm366, %v883
        %916 = vst.msk [vmem:[%s906 + $0x48] sm:$0xff] %vm366, %v886
        %917 = vst.msk [vmem:[%s906 + $0x50] sm:$0xff] %vm366, %v889
        %918 = vst.msk [vmem:[%s906 + $0x58] sm:$0xff] %vm366, %v892
        %919 = vst.msk [vmem:[%s906 + $0x60] sm:$0xff] %vm366, %v895
        %920 = vst.msk [vmem:[%s906 + $0x68] sm:$0xff] %vm366, %v898
        %921 = vst.msk [vmem:[%s906 + $0x70] sm:$0xff] %vm366, %v901
        %922 = vst.msk [vmem:[%s906 + $0x78] sm:$0xff] %vm366, %v904
        %s923 = scalar_lea.vmem %s1, 1024
        %v924 = vld [vmem:[%s923] sm:$0xff]
        %v925 = vld [vmem:[%s923 + $0x8] sm:$0xff]
        %v926 = vld [vmem:[%s923 + $0x10] sm:$0xff]
        %v927 = vld [vmem:[%s923 + $0x18] sm:$0xff]
        %v928 = vld [vmem:[%s923 + $0x20] sm:$0xff]
        %v929 = vld [vmem:[%s923 + $0x28] sm:$0xff]
        %v930 = vld [vmem:[%s923 + $0x30] sm:$0xff]
        %v931 = vld [vmem:[%s923 + $0x38] sm:$0xff]
        %v932 = vld [vmem:[%s923 + $0x40] sm:$0xff]
        %v933 = vld [vmem:[%s923 + $0x48] sm:$0xff]
        %v934 = vld [vmem:[%s923 + $0x50] sm:$0xff]
        %v935 = vld [vmem:[%s923 + $0x58] sm:$0xff]
        %v936 = vld [vmem:[%s923 + $0x60] sm:$0xff]
        %v937 = vld [vmem:[%s923 + $0x68] sm:$0xff]
        %v938 = vld [vmem:[%s923 + $0x70] sm:$0xff]
        %v939 = vld [vmem:[%s923 + $0x78] sm:$0xff]
        %v940 = vld [vmem:[%s923 + $0x80] sm:$0xff]
        %v941 = vld [vmem:[%s923 + $0x88] sm:$0xff]
        %v942 = vld [vmem:[%s923 + $0x90] sm:$0xff]
        %v943 = vld [vmem:[%s923 + $0x98] sm:$0xff]
        %v944 = vld [vmem:[%s923 + $0xa0] sm:$0xff]
        %v945 = vld [vmem:[%s923 + $0xa8] sm:$0xff]
        %v946 = vld [vmem:[%s923 + $0xb0] sm:$0xff]
        %v947 = vld [vmem:[%s923 + $0xb8] sm:$0xff]
        %v948 = vld [vmem:[%s923 + $0xc0] sm:$0xff]
        %v949 = vld [vmem:[%s923 + $0xc8] sm:$0xff]
        %v950 = vld [vmem:[%s923 + $0xd0] sm:$0xff]
        %v951 = vld [vmem:[%s923 + $0xd8] sm:$0xff]
        %v952 = vld [vmem:[%s923 + $0xe0] sm:$0xff]
        %v953 = vld [vmem:[%s923 + $0xe8] sm:$0xff]
        %v954 = vld [vmem:[%s923 + $0xf0] sm:$0xff]
        %v955 = vld [vmem:[%s923 + $0xf8] sm:$0xff]
        %956 = vmatpush.msra.mxu0 %v939
        %957 = vmatpush.msra.mxu0 %v938
        %958 = vmatpush.msra.mxu0 %v937
        %959 = vmatpush.msra.mxu0 %v936
        %960 = vmatpush.msra.mxu0 %v935
        %961 = vmatpush.msra.mxu0 %v934
        %962 = vmatpush.msra.mxu0 %v933
        %963 = vmatpush.msra.mxu0 %v932
        %964 = vmatpush.msra.mxu0 %v931
        %965 = vmatpush.msra.mxu0 %v930
        %966 = vmatpush.msra.mxu0 %v929
        %967 = vmatpush.msra.mxu0 %v928
        %968 = vmatpush.msra.mxu0 %v927
        %969 = vmatpush.msra.mxu0 %v926
        %970 = vmatpush.msra.mxu0 %v925
        %971 = vmatpush.msra.mxu0 %v924
        %972 = vmatmul.f32.gmra.mxu0 %v172
        %v973 = vpop.f32.mrf.mxu0
        %v974 = vadd.f32 0.0, %v973
        %975 = vmatmul.f32.gmra.mxu0 %v174
        %v976 = vpop.f32.mrf.mxu0
        %v977 = vadd.f32 0.0, %v976
        %978 = vmatmul.f32.gmra.mxu0 %v176
        %v979 = vpop.f32.mrf.mxu0
        %v980 = vadd.f32 0.0, %v979
        %981 = vmatmul.f32.gmra.mxu0 %v178
        %v982 = vpop.f32.mrf.mxu0
        %v983 = vadd.f32 0.0, %v982
        %984 = vmatmul.f32.gmra.mxu0 %v180
        %v985 = vpop.f32.mrf.mxu0
        %v986 = vadd.f32 0.0, %v985
        %987 = vmatmul.f32.gmra.mxu0 %v182
        %v988 = vpop.f32.mrf.mxu0
        %v989 = vadd.f32 0.0, %v988
        %990 = vmatmul.f32.gmra.mxu0 %v184
        %v991 = vpop.f32.mrf.mxu0
        %v992 = vadd.f32 0.0, %v991
        %993 = vmatmul.f32.gmra.mxu0 %v186
        %v994 = vpop.f32.mrf.mxu0
        %v995 = vadd.f32 0.0, %v994
        %996 = vmatmul.f32.gmra.mxu0 %v188
        %v997 = vpop.f32.mrf.mxu0
        %v998 = vadd.f32 0.0, %v997
        %999 = vmatmul.f32.gmra.mxu0 %v190
        %v1000 = vpop.f32.mrf.mxu0
        %v1001 = vadd.f32 0.0, %v1000
        %1002 = vmatmul.f32.gmra.mxu0 %v192
        %v1003 = vpop.f32.mrf.mxu0
        %v1004 = vadd.f32 0.0, %v1003
        %1005 = vmatmul.f32.gmra.mxu0 %v194
        %v1006 = vpop.f32.mrf.mxu0
        %v1007 = vadd.f32 0.0, %v1006
        %1008 = vmatmul.f32.gmra.mxu0 %v196
        %v1009 = vpop.f32.mrf.mxu0
        %v1010 = vadd.f32 0.0, %v1009
        %1011 = vmatmul.f32.gmra.mxu0 %v198
        %v1012 = vpop.f32.mrf.mxu0
        %v1013 = vadd.f32 0.0, %v1012
        %1014 = vmatmul.f32.gmra.mxu0 %v200
        %v1015 = vpop.f32.mrf.mxu0
        %v1016 = vadd.f32 0.0, %v1015
        %1017 = vmatmul.f32.gmra.mxu0 %v202
        %v1018 = vpop.f32.mrf.mxu0
        %v1019 = vadd.f32 0.0, %v1018
        %1020 = vdwg.mxu0
        %1021 = vmatpush.msra.mxu0 %v955
        %1022 = vmatpush.msra.mxu0 %v954
        %1023 = vmatpush.msra.mxu0 %v953
        %1024 = vmatpush.msra.mxu0 %v952
        %1025 = vmatpush.msra.mxu0 %v951
        %1026 = vmatpush.msra.mxu0 %v950
        %1027 = vmatpush.msra.mxu0 %v949
        %1028 = vmatpush.msra.mxu0 %v948
        %1029 = vmatpush.msra.mxu0 %v947
        %1030 = vmatpush.msra.mxu0 %v946
        %1031 = vmatpush.msra.mxu0 %v945
        %1032 = vmatpush.msra.mxu0 %v944
        %1033 = vmatpush.msra.mxu0 %v943
        %1034 = vmatpush.msra.mxu0 %v942
        %1035 = vmatpush.msra.mxu0 %v941
        %1036 = vmatpush.msra.mxu0 %v940
        %1037 = vmatmul.f32.gmra.mxu0 %v173
        %v1038 = vpop.f32.mrf.mxu0
        %v1039 = vadd.f32 %v974, %v1038
        %1040 = vmatmul.f32.gmra.mxu0 %v175
        %v1041 = vpop.f32.mrf.mxu0
        %v1042 = vadd.f32 %v977, %v1041
        %1043 = vmatmul.f32.gmra.mxu0 %v177
        %v1044 = vpop.f32.mrf.mxu0
        %v1045 = vadd.f32 %v980, %v1044
        %1046 = vmatmul.f32.gmra.mxu0 %v179
        %v1047 = vpop.f32.mrf.mxu0
        %v1048 = vadd.f32 %v983, %v1047
        %1049 = vmatmul.f32.gmra.mxu0 %v181
        %v1050 = vpop.f32.mrf.mxu0
        %v1051 = vadd.f32 %v986, %v1050
        %1052 = vmatmul.f32.gmra.mxu0 %v183
        %v1053 = vpop.f32.mrf.mxu0
        %v1054 = vadd.f32 %v989, %v1053
        %1055 = vmatmul.f32.gmra.mxu0 %v185
        %v1056 = vpop.f32.mrf.mxu0
        %v1057 = vadd.f32 %v992, %v1056
        %1058 = vmatmul.f32.gmra.mxu0 %v187
        %v1059 = vpop.f32.mrf.mxu0
        %v1060 = vadd.f32 %v995, %v1059
        %1061 = vmatmul.f32.gmra.mxu0 %v189
        %v1062 = vpop.f32.mrf.mxu0
        %v1063 = vadd.f32 %v998, %v1062
        %1064 = vmatmul.f32.gmra.mxu0 %v191
        %v1065 = vpop.f32.mrf.mxu0
        %v1066 = vadd.f32 %v1001, %v1065
        %1067 = vmatmul.f32.gmra.mxu0 %v193
        %v1068 = vpop.f32.mrf.mxu0
        %v1069 = vadd.f32 %v1004, %v1068
        %1070 = vmatmul.f32.gmra.mxu0 %v195
        %v1071 = vpop.f32.mrf.mxu0
        %v1072 = vadd.f32 %v1007, %v1071
        %1073 = vmatmul.f32.gmra.mxu0 %v197
        %v1074 = vpop.f32.mrf.mxu0
        %v1075 = vadd.f32 %v1010, %v1074
        %1076 = vmatmul.f32.gmra.mxu0 %v199
        %v1077 = vpop.f32.mrf.mxu0
        %v1078 = vadd.f32 %v1013, %v1077
        %1079 = vmatmul.f32.gmra.mxu0 %v201
        %v1080 = vpop.f32.mrf.mxu0
        %v1081 = vadd.f32 %v1016, %v1080
        %1082 = vmatmul.f32.gmra.mxu0 %v203
        %v1083 = vpop.f32.mrf.mxu0
        %v1084 = vadd.f32 %v1019, %v1083
        %1085 = vdwg.mxu0
        %s1086 = scalar_lea.vmem %s159, 512 [#allocation2]
        %1087 = vst.msk [vmem:[%s1086] sm:$0xff] %vm366, %v1039
        %1088 = vst.msk [vmem:[%s1086 + $0x8] sm:$0xff] %vm366, %v1042
        %1089 = vst.msk [vmem:[%s1086 + $0x10] sm:$0xff] %vm366, %v1045
        %1090 = vst.msk [vmem:[%s1086 + $0x18] sm:$0xff] %vm366, %v1048
        %1091 = vst.msk [vmem:[%s1086 + $0x20] sm:$0xff] %vm366, %v1051
        %1092 = vst.msk [vmem:[%s1086 + $0x28] sm:$0xff] %vm366, %v1054
        %1093 = vst.msk [vmem:[%s1086 + $0x30] sm:$0xff] %vm366, %v1057
        %1094 = vst.msk [vmem:[%s1086 + $0x38] sm:$0xff] %vm366, %v1060
        %1095 = vst.msk [vmem:[%s1086 + $0x40] sm:$0xff] %vm366, %v1063
        %1096 = vst.msk [vmem:[%s1086 + $0x48] sm:$0xff] %vm366, %v1066
        %1097 = vst.msk [vmem:[%s1086 + $0x50] sm:$0xff] %vm366, %v1069
        %1098 = vst.msk [vmem:[%s1086 + $0x58] sm:$0xff] %vm366, %v1072
        %1099 = vst.msk [vmem:[%s1086 + $0x60] sm:$0xff] %vm366, %v1075
        %1100 = vst.msk [vmem:[%s1086 + $0x68] sm:$0xff] %vm366, %v1078
        %1101 = vst.msk [vmem:[%s1086 + $0x70] sm:$0xff] %vm366, %v1081
        %1102 = vst.msk [vmem:[%s1086 + $0x78] sm:$0xff] %vm366, %v1084
        %s1103 = scalar_lea.vmem %s1, 1280
        %v1104 = vld [vmem:[%s1103] sm:$0xff]
        %v1105 = vld [vmem:[%s1103 + $0x8] sm:$0xff]
        %v1106 = vld [vmem:[%s1103 + $0x10] sm:$0xff]
        %v1107 = vld [vmem:[%s1103 + $0x18] sm:$0xff]
        %v1108 = vld [vmem:[%s1103 + $0x20] sm:$0xff]
        %v1109 = vld [vmem:[%s1103 + $0x28] sm:$0xff]
        %v1110 = vld [vmem:[%s1103 + $0x30] sm:$0xff]
        %v1111 = vld [vmem:[%s1103 + $0x38] sm:$0xff]
        %v1112 = vld [vmem:[%s1103 + $0x40] sm:$0xff]
        %v1113 = vld [vmem:[%s1103 + $0x48] sm:$0xff]
        %v1114 = vld [vmem:[%s1103 + $0x50] sm:$0xff]
        %v1115 = vld [vmem:[%s1103 + $0x58] sm:$0xff]
        %v1116 = vld [vmem:[%s1103 + $0x60] sm:$0xff]
        %v1117 = vld [vmem:[%s1103 + $0x68] sm:$0xff]
        %v1118 = vld [vmem:[%s1103 + $0x70] sm:$0xff]
        %v1119 = vld [vmem:[%s1103 + $0x78] sm:$0xff]
        %v1120 = vld [vmem:[%s1103 + $0x80] sm:$0xff]
        %v1121 = vld [vmem:[%s1103 + $0x88] sm:$0xff]
        %v1122 = vld [vmem:[%s1103 + $0x90] sm:$0xff]
        %v1123 = vld [vmem:[%s1103 + $0x98] sm:$0xff]
        %v1124 = vld [vmem:[%s1103 + $0xa0] sm:$0xff]
        %v1125 = vld [vmem:[%s1103 + $0xa8] sm:$0xff]
        %v1126 = vld [vmem:[%s1103 + $0xb0] sm:$0xff]
        %v1127 = vld [vmem:[%s1103 + $0xb8] sm:$0xff]
        %v1128 = vld [vmem:[%s1103 + $0xc0] sm:$0xff]
        %v1129 = vld [vmem:[%s1103 + $0xc8] sm:$0xff]
        %v1130 = vld [vmem:[%s1103 + $0xd0] sm:$0xff]
        %v1131 = vld [vmem:[%s1103 + $0xd8] sm:$0xff]
        %v1132 = vld [vmem:[%s1103 + $0xe0] sm:$0xff]
        %v1133 = vld [vmem:[%s1103 + $0xe8] sm:$0xff]
        %v1134 = vld [vmem:[%s1103 + $0xf0] sm:$0xff]
        %v1135 = vld [vmem:[%s1103 + $0xf8] sm:$0xff]
        %1136 = vmatpush.msra.mxu0 %v1119
        %1137 = vmatpush.msra.mxu0 %v1118
        %1138 = vmatpush.msra.mxu0 %v1117
        %1139 = vmatpush.msra.mxu0 %v1116
        %1140 = vmatpush.msra.mxu0 %v1115
        %1141 = vmatpush.msra.mxu0 %v1114
        %1142 = vmatpush.msra.mxu0 %v1113
        %1143 = vmatpush.msra.mxu0 %v1112
        %1144 = vmatpush.msra.mxu0 %v1111
        %1145 = vmatpush.msra.mxu0 %v1110
        %1146 = vmatpush.msra.mxu0 %v1109
        %1147 = vmatpush.msra.mxu0 %v1108
        %1148 = vmatpush.msra.mxu0 %v1107
        %1149 = vmatpush.msra.mxu0 %v1106
        %1150 = vmatpush.msra.mxu0 %v1105
        %1151 = vmatpush.msra.mxu0 %v1104
        %1152 = vmatmul.f32.gmra.mxu0 %v172
        %v1153 = vpop.f32.mrf.mxu0
        %v1154 = vadd.f32 0.0, %v1153
        %1155 = vmatmul.f32.gmra.mxu0 %v174
        %v1156 = vpop.f32.mrf.mxu0
        %v1157 = vadd.f32 0.0, %v1156
        %1158 = vmatmul.f32.gmra.mxu0 %v176
        %v1159 = vpop.f32.mrf.mxu0
        %v1160 = vadd.f32 0.0, %v1159
        %1161 = vmatmul.f32.gmra.mxu0 %v178
        %v1162 = vpop.f32.mrf.mxu0
        %v1163 = vadd.f32 0.0, %v1162
        %1164 = vmatmul.f32.gmra.mxu0 %v180
        %v1165 = vpop.f32.mrf.mxu0
        %v1166 = vadd.f32 0.0, %v1165
        %1167 = vmatmul.f32.gmra.mxu0 %v182
        %v1168 = vpop.f32.mrf.mxu0
        %v1169 = vadd.f32 0.0, %v1168
        %1170 = vmatmul.f32.gmra.mxu0 %v184
        %v1171 = vpop.f32.mrf.mxu0
        %v1172 = vadd.f32 0.0, %v1171
        %1173 = vmatmul.f32.gmra.mxu0 %v186
        %v1174 = vpop.f32.mrf.mxu0
        %v1175 = vadd.f32 0.0, %v1174
        %1176 = vmatmul.f32.gmra.mxu0 %v188
        %v1177 = vpop.f32.mrf.mxu0
        %v1178 = vadd.f32 0.0, %v1177
        %1179 = vmatmul.f32.gmra.mxu0 %v190
        %v1180 = vpop.f32.mrf.mxu0
        %v1181 = vadd.f32 0.0, %v1180
        %1182 = vmatmul.f32.gmra.mxu0 %v192
        %v1183 = vpop.f32.mrf.mxu0
        %v1184 = vadd.f32 0.0, %v1183
        %1185 = vmatmul.f32.gmra.mxu0 %v194
        %v1186 = vpop.f32.mrf.mxu0
        %v1187 = vadd.f32 0.0, %v1186
        %1188 = vmatmul.f32.gmra.mxu0 %v196
        %v1189 = vpop.f32.mrf.mxu0
        %v1190 = vadd.f32 0.0, %v1189
        %1191 = vmatmul.f32.gmra.mxu0 %v198
        %v1192 = vpop.f32.mrf.mxu0
        %v1193 = vadd.f32 0.0, %v1192
        %1194 = vmatmul.f32.gmra.mxu0 %v200
        %v1195 = vpop.f32.mrf.mxu0
        %v1196 = vadd.f32 0.0, %v1195
        %1197 = vmatmul.f32.gmra.mxu0 %v202
        %v1198 = vpop.f32.mrf.mxu0
        %v1199 = vadd.f32 0.0, %v1198
        %1200 = vdwg.mxu0
        %1201 = vmatpush.msra.mxu0 %v1135
        %1202 = vmatpush.msra.mxu0 %v1134
        %1203 = vmatpush.msra.mxu0 %v1133
        %1204 = vmatpush.msra.mxu0 %v1132
        %1205 = vmatpush.msra.mxu0 %v1131
        %1206 = vmatpush.msra.mxu0 %v1130
        %1207 = vmatpush.msra.mxu0 %v1129
        %1208 = vmatpush.msra.mxu0 %v1128
        %1209 = vmatpush.msra.mxu0 %v1127
        %1210 = vmatpush.msra.mxu0 %v1126
        %1211 = vmatpush.msra.mxu0 %v1125
        %1212 = vmatpush.msra.mxu0 %v1124
        %1213 = vmatpush.msra.mxu0 %v1123
        %1214 = vmatpush.msra.mxu0 %v1122
        %1215 = vmatpush.msra.mxu0 %v1121
        %1216 = vmatpush.msra.mxu0 %v1120
        %1217 = vmatmul.f32.gmra.mxu0 %v173
        %v1218 = vpop.f32.mrf.mxu0
        %v1219 = vadd.f32 %v1154, %v1218
        %1220 = vmatmul.f32.gmra.mxu0 %v175
        %v1221 = vpop.f32.mrf.mxu0
        %v1222 = vadd.f32 %v1157, %v1221
        %1223 = vmatmul.f32.gmra.mxu0 %v177
        %v1224 = vpop.f32.mrf.mxu0
        %v1225 = vadd.f32 %v1160, %v1224
        %1226 = vmatmul.f32.gmra.mxu0 %v179
        %v1227 = vpop.f32.mrf.mxu0
        %v1228 = vadd.f32 %v1163, %v1227
        %1229 = vmatmul.f32.gmra.mxu0 %v181
        %v1230 = vpop.f32.mrf.mxu0
        %v1231 = vadd.f32 %v1166, %v1230
        %1232 = vmatmul.f32.gmra.mxu0 %v183
        %v1233 = vpop.f32.mrf.mxu0
        %v1234 = vadd.f32 %v1169, %v1233
        %1235 = vmatmul.f32.gmra.mxu0 %v185
        %v1236 = vpop.f32.mrf.mxu0
        %v1237 = vadd.f32 %v1172, %v1236
        %1238 = vmatmul.f32.gmra.mxu0 %v187
        %v1239 = vpop.f32.mrf.mxu0
        %v1240 = vadd.f32 %v1175, %v1239
        %1241 = vmatmul.f32.gmra.mxu0 %v189
        %v1242 = vpop.f32.mrf.mxu0
        %v1243 = vadd.f32 %v1178, %v1242
        %1244 = vmatmul.f32.gmra.mxu0 %v191
        %v1245 = vpop.f32.mrf.mxu0
        %v1246 = vadd.f32 %v1181, %v1245
        %1247 = vmatmul.f32.gmra.mxu0 %v193
        %v1248 = vpop.f32.mrf.mxu0
        %v1249 = vadd.f32 %v1184, %v1248
        %1250 = vmatmul.f32.gmra.mxu0 %v195
        %v1251 = vpop.f32.mrf.mxu0
        %v1252 = vadd.f32 %v1187, %v1251
        %1253 = vmatmul.f32.gmra.mxu0 %v197
        %v1254 = vpop.f32.mrf.mxu0
        %v1255 = vadd.f32 %v1190, %v1254
        %1256 = vmatmul.f32.gmra.mxu0 %v199
        %v1257 = vpop.f32.mrf.mxu0
        %v1258 = vadd.f32 %v1193, %v1257
        %1259 = vmatmul.f32.gmra.mxu0 %v201
        %v1260 = vpop.f32.mrf.mxu0
        %v1261 = vadd.f32 %v1196, %v1260
        %1262 = vmatmul.f32.gmra.mxu0 %v203
        %v1263 = vpop.f32.mrf.mxu0
        %v1264 = vadd.f32 %v1199, %v1263
        %1265 = vdwg.mxu0
        %s1266 = scalar_lea.vmem %s159, 640 [#allocation2]
        %1267 = vst.msk [vmem:[%s1266] sm:$0xff] %vm366, %v1219
        %1268 = vst.msk [vmem:[%s1266 + $0x8] sm:$0xff] %vm366, %v1222
        %1269 = vst.msk [vmem:[%s1266 + $0x10] sm:$0xff] %vm366, %v1225
        %1270 = vst.msk [vmem:[%s1266 + $0x18] sm:$0xff] %vm366, %v1228
        %1271 = vst.msk [vmem:[%s1266 + $0x20] sm:$0xff] %vm366, %v1231
        %1272 = vst.msk [vmem:[%s1266 + $0x28] sm:$0xff] %vm366, %v1234
        %1273 = vst.msk [vmem:[%s1266 + $0x30] sm:$0xff] %vm366, %v1237
        %1274 = vst.msk [vmem:[%s1266 + $0x38] sm:$0xff] %vm366, %v1240
        %1275 = vst.msk [vmem:[%s1266 + $0x40] sm:$0xff] %vm366, %v1243
        %1276 = vst.msk [vmem:[%s1266 + $0x48] sm:$0xff] %vm366, %v1246
        %1277 = vst.msk [vmem:[%s1266 + $0x50] sm:$0xff] %vm366, %v1249
        %1278 = vst.msk [vmem:[%s1266 + $0x58] sm:$0xff] %vm366, %v1252
        %1279 = vst.msk [vmem:[%s1266 + $0x60] sm:$0xff] %vm366, %v1255
        %1280 = vst.msk [vmem:[%s1266 + $0x68] sm:$0xff] %vm366, %v1258
        %1281 = vst.msk [vmem:[%s1266 + $0x70] sm:$0xff] %vm366, %v1261
        %1282 = vst.msk [vmem:[%s1266 + $0x78] sm:$0xff] %vm366, %v1264
        %s1283 = scalar_lea.vmem %s1, 1536
        %v1284 = vld [vmem:[%s1283] sm:$0xff]
        %v1285 = vld [vmem:[%s1283 + $0x8] sm:$0xff]
        %v1286 = vld [vmem:[%s1283 + $0x10] sm:$0xff]
        %v1287 = vld [vmem:[%s1283 + $0x18] sm:$0xff]
        %v1288 = vld [vmem:[%s1283 + $0x20] sm:$0xff]
        %v1289 = vld [vmem:[%s1283 + $0x28] sm:$0xff]
        %v1290 = vld [vmem:[%s1283 + $0x30] sm:$0xff]
        %v1291 = vld [vmem:[%s1283 + $0x38] sm:$0xff]
        %v1292 = vld [vmem:[%s1283 + $0x40] sm:$0xff]
        %v1293 = vld [vmem:[%s1283 + $0x48] sm:$0xff]
        %v1294 = vld [vmem:[%s1283 + $0x50] sm:$0xff]
        %v1295 = vld [vmem:[%s1283 + $0x58] sm:$0xff]
        %v1296 = vld [vmem:[%s1283 + $0x60] sm:$0xff]
        %v1297 = vld [vmem:[%s1283 + $0x68] sm:$0xff]
        %v1298 = vld [vmem:[%s1283 + $0x70] sm:$0xff]
        %v1299 = vld [vmem:[%s1283 + $0x78] sm:$0xff]
        %v1300 = vld [vmem:[%s1283 + $0x80] sm:$0xff]
        %v1301 = vld [vmem:[%s1283 + $0x88] sm:$0xff]
        %v1302 = vld [vmem:[%s1283 + $0x90] sm:$0xff]
        %v1303 = vld [vmem:[%s1283 + $0x98] sm:$0xff]
        %v1304 = vld [vmem:[%s1283 + $0xa0] sm:$0xff]
        %v1305 = vld [vmem:[%s1283 + $0xa8] sm:$0xff]
        %v1306 = vld [vmem:[%s1283 + $0xb0] sm:$0xff]
        %v1307 = vld [vmem:[%s1283 + $0xb8] sm:$0xff]
        %v1308 = vld [vmem:[%s1283 + $0xc0] sm:$0xff]
        %v1309 = vld [vmem:[%s1283 + $0xc8] sm:$0xff]
        %v1310 = vld [vmem:[%s1283 + $0xd0] sm:$0xff]
        %v1311 = vld [vmem:[%s1283 + $0xd8] sm:$0xff]
        %v1312 = vld [vmem:[%s1283 + $0xe0] sm:$0xff]
        %v1313 = vld [vmem:[%s1283 + $0xe8] sm:$0xff]
        %v1314 = vld [vmem:[%s1283 + $0xf0] sm:$0xff]
        %v1315 = vld [vmem:[%s1283 + $0xf8] sm:$0xff]
        %1316 = vmatpush.msra.mxu0 %v1299
        %1317 = vmatpush.msra.mxu0 %v1298
        %1318 = vmatpush.msra.mxu0 %v1297
        %1319 = vmatpush.msra.mxu0 %v1296
        %1320 = vmatpush.msra.mxu0 %v1295
        %1321 = vmatpush.msra.mxu0 %v1294
        %1322 = vmatpush.msra.mxu0 %v1293
        %1323 = vmatpush.msra.mxu0 %v1292
        %1324 = vmatpush.msra.mxu0 %v1291
        %1325 = vmatpush.msra.mxu0 %v1290
        %1326 = vmatpush.msra.mxu0 %v1289
        %1327 = vmatpush.msra.mxu0 %v1288
        %1328 = vmatpush.msra.mxu0 %v1287
        %1329 = vmatpush.msra.mxu0 %v1286
        %1330 = vmatpush.msra.mxu0 %v1285
        %1331 = vmatpush.msra.mxu0 %v1284
        %1332 = vmatmul.f32.gmra.mxu0 %v172
        %v1333 = vpop.f32.mrf.mxu0
        %v1334 = vadd.f32 0.0, %v1333
        %1335 = vmatmul.f32.gmra.mxu0 %v174
        %v1336 = vpop.f32.mrf.mxu0
        %v1337 = vadd.f32 0.0, %v1336
        %1338 = vmatmul.f32.gmra.mxu0 %v176
        %v1339 = vpop.f32.mrf.mxu0
        %v1340 = vadd.f32 0.0, %v1339
        %1341 = vmatmul.f32.gmra.mxu0 %v178
        %v1342 = vpop.f32.mrf.mxu0
        %v1343 = vadd.f32 0.0, %v1342
        %1344 = vmatmul.f32.gmra.mxu0 %v180
        %v1345 = vpop.f32.mrf.mxu0
        %v1346 = vadd.f32 0.0, %v1345
        %1347 = vmatmul.f32.gmra.mxu0 %v182
        %v1348 = vpop.f32.mrf.mxu0
        %v1349 = vadd.f32 0.0, %v1348
        %1350 = vmatmul.f32.gmra.mxu0 %v184
        %v1351 = vpop.f32.mrf.mxu0
        %v1352 = vadd.f32 0.0, %v1351
        %1353 = vmatmul.f32.gmra.mxu0 %v186
        %v1354 = vpop.f32.mrf.mxu0
        %v1355 = vadd.f32 0.0, %v1354
        %1356 = vmatmul.f32.gmra.mxu0 %v188
        %v1357 = vpop.f32.mrf.mxu0
        %v1358 = vadd.f32 0.0, %v1357
        %1359 = vmatmul.f32.gmra.mxu0 %v190
        %v1360 = vpop.f32.mrf.mxu0
        %v1361 = vadd.f32 0.0, %v1360
        %1362 = vmatmul.f32.gmra.mxu0 %v192
        %v1363 = vpop.f32.mrf.mxu0
        %v1364 = vadd.f32 0.0, %v1363
        %1365 = vmatmul.f32.gmra.mxu0 %v194
        %v1366 = vpop.f32.mrf.mxu0
        %v1367 = vadd.f32 0.0, %v1366
        %1368 = vmatmul.f32.gmra.mxu0 %v196
        %v1369 = vpop.f32.mrf.mxu0
        %v1370 = vadd.f32 0.0, %v1369
        %1371 = vmatmul.f32.gmra.mxu0 %v198
        %v1372 = vpop.f32.mrf.mxu0
        %v1373 = vadd.f32 0.0, %v1372
        %1374 = vmatmul.f32.gmra.mxu0 %v200
        %v1375 = vpop.f32.mrf.mxu0
        %v1376 = vadd.f32 0.0, %v1375
        %1377 = vmatmul.f32.gmra.mxu0 %v202
        %v1378 = vpop.f32.mrf.mxu0
        %v1379 = vadd.f32 0.0, %v1378
        %1380 = vdwg.mxu0
        %1381 = vmatpush.msra.mxu0 %v1315
        %1382 = vmatpush.msra.mxu0 %v1314
        %1383 = vmatpush.msra.mxu0 %v1313
        %1384 = vmatpush.msra.mxu0 %v1312
        %1385 = vmatpush.msra.mxu0 %v1311
        %1386 = vmatpush.msra.mxu0 %v1310
        %1387 = vmatpush.msra.mxu0 %v1309
        %1388 = vmatpush.msra.mxu0 %v1308
        %1389 = vmatpush.msra.mxu0 %v1307
        %1390 = vmatpush.msra.mxu0 %v1306
        %1391 = vmatpush.msra.mxu0 %v1305
        %1392 = vmatpush.msra.mxu0 %v1304
        %1393 = vmatpush.msra.mxu0 %v1303
        %1394 = vmatpush.msra.mxu0 %v1302
        %1395 = vmatpush.msra.mxu0 %v1301
        %1396 = vmatpush.msra.mxu0 %v1300
        %1397 = vmatmul.f32.gmra.mxu0 %v173
        %v1398 = vpop.f32.mrf.mxu0
        %v1399 = vadd.f32 %v1334, %v1398
        %1400 = vmatmul.f32.gmra.mxu0 %v175
        %v1401 = vpop.f32.mrf.mxu0
        %v1402 = vadd.f32 %v1337, %v1401
        %1403 = vmatmul.f32.gmra.mxu0 %v177
        %v1404 = vpop.f32.mrf.mxu0
        %v1405 = vadd.f32 %v1340, %v1404
        %1406 = vmatmul.f32.gmra.mxu0 %v179
        %v1407 = vpop.f32.mrf.mxu0
        %v1408 = vadd.f32 %v1343, %v1407
        %1409 = vmatmul.f32.gmra.mxu0 %v181
        %v1410 = vpop.f32.mrf.mxu0
        %v1411 = vadd.f32 %v1346, %v1410
        %1412 = vmatmul.f32.gmra.mxu0 %v183
        %v1413 = vpop.f32.mrf.mxu0
        %v1414 = vadd.f32 %v1349, %v1413
        %1415 = vmatmul.f32.gmra.mxu0 %v185
        %v1416 = vpop.f32.mrf.mxu0
        %v1417 = vadd.f32 %v1352, %v1416
        %1418 = vmatmul.f32.gmra.mxu0 %v187
        %v1419 = vpop.f32.mrf.mxu0
        %v1420 = vadd.f32 %v1355, %v1419
        %1421 = vmatmul.f32.gmra.mxu0 %v189
        %v1422 = vpop.f32.mrf.mxu0
        %v1423 = vadd.f32 %v1358, %v1422
        %1424 = vmatmul.f32.gmra.mxu0 %v191
        %v1425 = vpop.f32.mrf.mxu0
        %v1426 = vadd.f32 %v1361, %v1425
        %1427 = vmatmul.f32.gmra.mxu0 %v193
        %v1428 = vpop.f32.mrf.mxu0
        %v1429 = vadd.f32 %v1364, %v1428
        %1430 = vmatmul.f32.gmra.mxu0 %v195
        %v1431 = vpop.f32.mrf.mxu0
        %v1432 = vadd.f32 %v1367, %v1431
        %1433 = vmatmul.f32.gmra.mxu0 %v197
        %v1434 = vpop.f32.mrf.mxu0
        %v1435 = vadd.f32 %v1370, %v1434
        %1436 = vmatmul.f32.gmra.mxu0 %v199
        %v1437 = vpop.f32.mrf.mxu0
        %v1438 = vadd.f32 %v1373, %v1437
        %1439 = vmatmul.f32.gmra.mxu0 %v201
        %v1440 = vpop.f32.mrf.mxu0
        %v1441 = vadd.f32 %v1376, %v1440
        %1442 = vmatmul.f32.gmra.mxu0 %v203
        %v1443 = vpop.f32.mrf.mxu0
        %v1444 = vadd.f32 %v1379, %v1443
        %1445 = vdwg.mxu0
        %s1446 = scalar_lea.vmem %s159, 768 [#allocation2]
        %1447 = vst.msk [vmem:[%s1446] sm:$0xff] %vm366, %v1399
        %1448 = vst.msk [vmem:[%s1446 + $0x8] sm:$0xff] %vm366, %v1402
        %1449 = vst.msk [vmem:[%s1446 + $0x10] sm:$0xff] %vm366, %v1405
        %1450 = vst.msk [vmem:[%s1446 + $0x18] sm:$0xff] %vm366, %v1408
        %1451 = vst.msk [vmem:[%s1446 + $0x20] sm:$0xff] %vm366, %v1411
        %1452 = vst.msk [vmem:[%s1446 + $0x28] sm:$0xff] %vm366, %v1414
        %1453 = vst.msk [vmem:[%s1446 + $0x30] sm:$0xff] %vm366, %v1417
        %1454 = vst.msk [vmem:[%s1446 + $0x38] sm:$0xff] %vm366, %v1420
        %1455 = vst.msk [vmem:[%s1446 + $0x40] sm:$0xff] %vm366, %v1423
        %1456 = vst.msk [vmem:[%s1446 + $0x48] sm:$0xff] %vm366, %v1426
        %1457 = vst.msk [vmem:[%s1446 + $0x50] sm:$0xff] %vm366, %v1429
        %1458 = vst.msk [vmem:[%s1446 + $0x58] sm:$0xff] %vm366, %v1432
        %1459 = vst.msk [vmem:[%s1446 + $0x60] sm:$0xff] %vm366, %v1435
        %1460 = vst.msk [vmem:[%s1446 + $0x68] sm:$0xff] %vm366, %v1438
        %1461 = vst.msk [vmem:[%s1446 + $0x70] sm:$0xff] %vm366, %v1441
        %1462 = vst.msk [vmem:[%s1446 + $0x78] sm:$0xff] %vm366, %v1444
        %s1463 = scalar_lea.vmem %s1, 1792
        %v1464 = vld [vmem:[%s1463] sm:$0xff]
        %v1465 = vld [vmem:[%s1463 + $0x8] sm:$0xff]
        %v1466 = vld [vmem:[%s1463 + $0x10] sm:$0xff]
        %v1467 = vld [vmem:[%s1463 + $0x18] sm:$0xff]
        %v1468 = vld [vmem:[%s1463 + $0x20] sm:$0xff]
        %v1469 = vld [vmem:[%s1463 + $0x28] sm:$0xff]
        %v1470 = vld [vmem:[%s1463 + $0x30] sm:$0xff]
        %v1471 = vld [vmem:[%s1463 + $0x38] sm:$0xff]
        %v1472 = vld [vmem:[%s1463 + $0x40] sm:$0xff]
        %v1473 = vld [vmem:[%s1463 + $0x48] sm:$0xff]
        %v1474 = vld [vmem:[%s1463 + $0x50] sm:$0xff]
        %v1475 = vld [vmem:[%s1463 + $0x58] sm:$0xff]
        %v1476 = vld [vmem:[%s1463 + $0x60] sm:$0xff]
        %v1477 = vld [vmem:[%s1463 + $0x68] sm:$0xff]
        %v1478 = vld [vmem:[%s1463 + $0x70] sm:$0xff]
        %v1479 = vld [vmem:[%s1463 + $0x78] sm:$0xff]
        %v1480 = vld [vmem:[%s1463 + $0x80] sm:$0xff]
        %v1481 = vld [vmem:[%s1463 + $0x88] sm:$0xff]
        %v1482 = vld [vmem:[%s1463 + $0x90] sm:$0xff]
        %v1483 = vld [vmem:[%s1463 + $0x98] sm:$0xff]
        %v1484 = vld [vmem:[%s1463 + $0xa0] sm:$0xff]
        %v1485 = vld [vmem:[%s1463 + $0xa8] sm:$0xff]
        %v1486 = vld [vmem:[%s1463 + $0xb0] sm:$0xff]
        %v1487 = vld [vmem:[%s1463 + $0xb8] sm:$0xff]
        %v1488 = vld [vmem:[%s1463 + $0xc0] sm:$0xff]
        %v1489 = vld [vmem:[%s1463 + $0xc8] sm:$0xff]
        %v1490 = vld [vmem:[%s1463 + $0xd0] sm:$0xff]
        %v1491 = vld [vmem:[%s1463 + $0xd8] sm:$0xff]
        %v1492 = vld [vmem:[%s1463 + $0xe0] sm:$0xff]
        %v1493 = vld [vmem:[%s1463 + $0xe8] sm:$0xff]
        %v1494 = vld [vmem:[%s1463 + $0xf0] sm:$0xff]
        %v1495 = vld [vmem:[%s1463 + $0xf8] sm:$0xff]
        %1496 = vmatpush.msra.mxu0 %v1479
        %1497 = vmatpush.msra.mxu0 %v1478
        %1498 = vmatpush.msra.mxu0 %v1477
        %1499 = vmatpush.msra.mxu0 %v1476
        %1500 = vmatpush.msra.mxu0 %v1475
        %1501 = vmatpush.msra.mxu0 %v1474
        %1502 = vmatpush.msra.mxu0 %v1473
        %1503 = vmatpush.msra.mxu0 %v1472
        %1504 = vmatpush.msra.mxu0 %v1471
        %1505 = vmatpush.msra.mxu0 %v1470
        %1506 = vmatpush.msra.mxu0 %v1469
        %1507 = vmatpush.msra.mxu0 %v1468
        %1508 = vmatpush.msra.mxu0 %v1467
        %1509 = vmatpush.msra.mxu0 %v1466
        %1510 = vmatpush.msra.mxu0 %v1465
        %1511 = vmatpush.msra.mxu0 %v1464
        %1512 = vmatmul.f32.gmra.mxu0 %v172
        %v1513 = vpop.f32.mrf.mxu0
        %v1514 = vadd.f32 0.0, %v1513
        %1515 = vmatmul.f32.gmra.mxu0 %v174
        %v1516 = vpop.f32.mrf.mxu0
        %v1517 = vadd.f32 0.0, %v1516
        %1518 = vmatmul.f32.gmra.mxu0 %v176
        %v1519 = vpop.f32.mrf.mxu0
        %v1520 = vadd.f32 0.0, %v1519
        %1521 = vmatmul.f32.gmra.mxu0 %v178
        %v1522 = vpop.f32.mrf.mxu0
        %v1523 = vadd.f32 0.0, %v1522
        %1524 = vmatmul.f32.gmra.mxu0 %v180
        %v1525 = vpop.f32.mrf.mxu0
        %v1526 = vadd.f32 0.0, %v1525
        %1527 = vmatmul.f32.gmra.mxu0 %v182
        %v1528 = vpop.f32.mrf.mxu0
        %v1529 = vadd.f32 0.0, %v1528
        %1530 = vmatmul.f32.gmra.mxu0 %v184
        %v1531 = vpop.f32.mrf.mxu0
        %v1532 = vadd.f32 0.0, %v1531
        %1533 = vmatmul.f32.gmra.mxu0 %v186
        %v1534 = vpop.f32.mrf.mxu0
        %v1535 = vadd.f32 0.0, %v1534
        %1536 = vmatmul.f32.gmra.mxu0 %v188
        %v1537 = vpop.f32.mrf.mxu0
        %v1538 = vadd.f32 0.0, %v1537
        %1539 = vmatmul.f32.gmra.mxu0 %v190
        %v1540 = vpop.f32.mrf.mxu0
        %v1541 = vadd.f32 0.0, %v1540
        %1542 = vmatmul.f32.gmra.mxu0 %v192
        %v1543 = vpop.f32.mrf.mxu0
        %v1544 = vadd.f32 0.0, %v1543
        %1545 = vmatmul.f32.gmra.mxu0 %v194
        %v1546 = vpop.f32.mrf.mxu0
        %v1547 = vadd.f32 0.0, %v1546
        %1548 = vmatmul.f32.gmra.mxu0 %v196
        %v1549 = vpop.f32.mrf.mxu0
        %v1550 = vadd.f32 0.0, %v1549
        %1551 = vmatmul.f32.gmra.mxu0 %v198
        %v1552 = vpop.f32.mrf.mxu0
        %v1553 = vadd.f32 0.0, %v1552
        %1554 = vmatmul.f32.gmra.mxu0 %v200
        %v1555 = vpop.f32.mrf.mxu0
        %v1556 = vadd.f32 0.0, %v1555
        %1557 = vmatmul.f32.gmra.mxu0 %v202
        %v1558 = vpop.f32.mrf.mxu0
        %v1559 = vadd.f32 0.0, %v1558
        %1560 = vdwg.mxu0
        %1561 = vmatpush.msra.mxu0 %v1495
        %1562 = vmatpush.msra.mxu0 %v1494
        %1563 = vmatpush.msra.mxu0 %v1493
        %1564 = vmatpush.msra.mxu0 %v1492
        %1565 = vmatpush.msra.mxu0 %v1491
        %1566 = vmatpush.msra.mxu0 %v1490
        %1567 = vmatpush.msra.mxu0 %v1489
        %1568 = vmatpush.msra.mxu0 %v1488
        %1569 = vmatpush.msra.mxu0 %v1487
        %1570 = vmatpush.msra.mxu0 %v1486
        %1571 = vmatpush.msra.mxu0 %v1485
        %1572 = vmatpush.msra.mxu0 %v1484
        %1573 = vmatpush.msra.mxu0 %v1483
        %1574 = vmatpush.msra.mxu0 %v1482
        %1575 = vmatpush.msra.mxu0 %v1481
        %1576 = vmatpush.msra.mxu0 %v1480
        %1577 = vmatmul.f32.gmra.mxu0 %v173
        %v1578 = vpop.f32.mrf.mxu0
        %v1579 = vadd.f32 %v1514, %v1578
        %1580 = vmatmul.f32.gmra.mxu0 %v175
        %v1581 = vpop.f32.mrf.mxu0
        %v1582 = vadd.f32 %v1517, %v1581
        %1583 = vmatmul.f32.gmra.mxu0 %v177
        %v1584 = vpop.f32.mrf.mxu0
        %v1585 = vadd.f32 %v1520, %v1584
        %1586 = vmatmul.f32.gmra.mxu0 %v179
        %v1587 = vpop.f32.mrf.mxu0
        %v1588 = vadd.f32 %v1523, %v1587
        %1589 = vmatmul.f32.gmra.mxu0 %v181
        %v1590 = vpop.f32.mrf.mxu0
        %v1591 = vadd.f32 %v1526, %v1590
        %1592 = vmatmul.f32.gmra.mxu0 %v183
        %v1593 = vpop.f32.mrf.mxu0
        %v1594 = vadd.f32 %v1529, %v1593
        %1595 = vmatmul.f32.gmra.mxu0 %v185
        %v1596 = vpop.f32.mrf.mxu0
        %v1597 = vadd.f32 %v1532, %v1596
        %1598 = vmatmul.f32.gmra.mxu0 %v187
        %v1599 = vpop.f32.mrf.mxu0
        %v1600 = vadd.f32 %v1535, %v1599
        %1601 = vmatmul.f32.gmra.mxu0 %v189
        %v1602 = vpop.f32.mrf.mxu0
        %v1603 = vadd.f32 %v1538, %v1602
        %1604 = vmatmul.f32.gmra.mxu0 %v191
        %v1605 = vpop.f32.mrf.mxu0
        %v1606 = vadd.f32 %v1541, %v1605
        %1607 = vmatmul.f32.gmra.mxu0 %v193
        %v1608 = vpop.f32.mrf.mxu0
        %v1609 = vadd.f32 %v1544, %v1608
        %1610 = vmatmul.f32.gmra.mxu0 %v195
        %v1611 = vpop.f32.mrf.mxu0
        %v1612 = vadd.f32 %v1547, %v1611
        %1613 = vmatmul.f32.gmra.mxu0 %v197
        %v1614 = vpop.f32.mrf.mxu0
        %v1615 = vadd.f32 %v1550, %v1614
        %1616 = vmatmul.f32.gmra.mxu0 %v199
        %v1617 = vpop.f32.mrf.mxu0
        %v1618 = vadd.f32 %v1553, %v1617
        %1619 = vmatmul.f32.gmra.mxu0 %v201
        %v1620 = vpop.f32.mrf.mxu0
        %v1621 = vadd.f32 %v1556, %v1620
        %1622 = vmatmul.f32.gmra.mxu0 %v203
        %v1623 = vpop.f32.mrf.mxu0
        %v1624 = vadd.f32 %v1559, %v1623
        %1625 = vdwg.mxu0
        %s1626 = scalar_lea.vmem %s159, 896 [#allocation2]
        %1627 = vst.msk [vmem:[%s1626] sm:$0xff] %vm366, %v1579
        %1628 = vst.msk [vmem:[%s1626 + $0x8] sm:$0xff] %vm366, %v1582
        %1629 = vst.msk [vmem:[%s1626 + $0x10] sm:$0xff] %vm366, %v1585
        %1630 = vst.msk [vmem:[%s1626 + $0x18] sm:$0xff] %vm366, %v1588
        %1631 = vst.msk [vmem:[%s1626 + $0x20] sm:$0xff] %vm366, %v1591
        %1632 = vst.msk [vmem:[%s1626 + $0x28] sm:$0xff] %vm366, %v1594
        %1633 = vst.msk [vmem:[%s1626 + $0x30] sm:$0xff] %vm366, %v1597
        %1634 = vst.msk [vmem:[%s1626 + $0x38] sm:$0xff] %vm366, %v1600
        %1635 = vst.msk [vmem:[%s1626 + $0x40] sm:$0xff] %vm366, %v1603
        %1636 = vst.msk [vmem:[%s1626 + $0x48] sm:$0xff] %vm366, %v1606
        %1637 = vst.msk [vmem:[%s1626 + $0x50] sm:$0xff] %vm366, %v1609
        %1638 = vst.msk [vmem:[%s1626 + $0x58] sm:$0xff] %vm366, %v1612
        %1639 = vst.msk [vmem:[%s1626 + $0x60] sm:$0xff] %vm366, %v1615
        %1640 = vst.msk [vmem:[%s1626 + $0x68] sm:$0xff] %vm366, %v1618
        %1641 = vst.msk [vmem:[%s1626 + $0x70] sm:$0xff] %vm366, %v1621
        %1642 = vst.msk [vmem:[%s1626 + $0x78] sm:$0xff] %vm366, %v1624
        %s1643 = scalar_lea.vmem %s1, 2048
        %v1644 = vld [vmem:[%s1643] sm:$0xff]
        %v1645 = vld [vmem:[%s1643 + $0x8] sm:$0xff]
        %v1646 = vld [vmem:[%s1643 + $0x10] sm:$0xff]
        %v1647 = vld [vmem:[%s1643 + $0x18] sm:$0xff]
        %v1648 = vld [vmem:[%s1643 + $0x20] sm:$0xff]
        %v1649 = vld [vmem:[%s1643 + $0x28] sm:$0xff]
        %v1650 = vld [vmem:[%s1643 + $0x30] sm:$0xff]
        %v1651 = vld [vmem:[%s1643 + $0x38] sm:$0xff]
        %v1652 = vld [vmem:[%s1643 + $0x40] sm:$0xff]
        %v1653 = vld [vmem:[%s1643 + $0x48] sm:$0xff]
        %v1654 = vld [vmem:[%s1643 + $0x50] sm:$0xff]
        %v1655 = vld [vmem:[%s1643 + $0x58] sm:$0xff]
        %v1656 = vld [vmem:[%s1643 + $0x60] sm:$0xff]
        %v1657 = vld [vmem:[%s1643 + $0x68] sm:$0xff]
        %v1658 = vld [vmem:[%s1643 + $0x70] sm:$0xff]
        %v1659 = vld [vmem:[%s1643 + $0x78] sm:$0xff]
        %v1660 = vld [vmem:[%s1643 + $0x80] sm:$0xff]
        %v1661 = vld [vmem:[%s1643 + $0x88] sm:$0xff]
        %v1662 = vld [vmem:[%s1643 + $0x90] sm:$0xff]
        %v1663 = vld [vmem:[%s1643 + $0x98] sm:$0xff]
        %v1664 = vld [vmem:[%s1643 + $0xa0] sm:$0xff]
        %v1665 = vld [vmem:[%s1643 + $0xa8] sm:$0xff]
        %v1666 = vld [vmem:[%s1643 + $0xb0] sm:$0xff]
        %v1667 = vld [vmem:[%s1643 + $0xb8] sm:$0xff]
        %v1668 = vld [vmem:[%s1643 + $0xc0] sm:$0xff]
        %v1669 = vld [vmem:[%s1643 + $0xc8] sm:$0xff]
        %v1670 = vld [vmem:[%s1643 + $0xd0] sm:$0xff]
        %v1671 = vld [vmem:[%s1643 + $0xd8] sm:$0xff]
        %v1672 = vld [vmem:[%s1643 + $0xe0] sm:$0xff]
        %v1673 = vld [vmem:[%s1643 + $0xe8] sm:$0xff]
        %v1674 = vld [vmem:[%s1643 + $0xf0] sm:$0xff]
        %v1675 = vld [vmem:[%s1643 + $0xf8] sm:$0xff]
        %1676 = vmatpush.msra.mxu0 %v1659
        %1677 = vmatpush.msra.mxu0 %v1658
        %1678 = vmatpush.msra.mxu0 %v1657
        %1679 = vmatpush.msra.mxu0 %v1656
        %1680 = vmatpush.msra.mxu0 %v1655
        %1681 = vmatpush.msra.mxu0 %v1654
        %1682 = vmatpush.msra.mxu0 %v1653
        %1683 = vmatpush.msra.mxu0 %v1652
        %1684 = vmatpush.msra.mxu0 %v1651
        %1685 = vmatpush.msra.mxu0 %v1650
        %1686 = vmatpush.msra.mxu0 %v1649
        %1687 = vmatpush.msra.mxu0 %v1648
        %1688 = vmatpush.msra.mxu0 %v1647
        %1689 = vmatpush.msra.mxu0 %v1646
        %1690 = vmatpush.msra.mxu0 %v1645
        %1691 = vmatpush.msra.mxu0 %v1644
        %1692 = vmatmul.f32.gmra.mxu0 %v172
        %v1693 = vpop.f32.mrf.mxu0
        %v1694 = vadd.f32 0.0, %v1693
        %1695 = vmatmul.f32.gmra.mxu0 %v174
        %v1696 = vpop.f32.mrf.mxu0
        %v1697 = vadd.f32 0.0, %v1696
        %1698 = vmatmul.f32.gmra.mxu0 %v176
        %v1699 = vpop.f32.mrf.mxu0
        %v1700 = vadd.f32 0.0, %v1699
        %1701 = vmatmul.f32.gmra.mxu0 %v178
        %v1702 = vpop.f32.mrf.mxu0
        %v1703 = vadd.f32 0.0, %v1702
        %1704 = vmatmul.f32.gmra.mxu0 %v180
        %v1705 = vpop.f32.mrf.mxu0
        %v1706 = vadd.f32 0.0, %v1705
        %1707 = vmatmul.f32.gmra.mxu0 %v182
        %v1708 = vpop.f32.mrf.mxu0
        %v1709 = vadd.f32 0.0, %v1708
        %1710 = vmatmul.f32.gmra.mxu0 %v184
        %v1711 = vpop.f32.mrf.mxu0
        %v1712 = vadd.f32 0.0, %v1711
        %1713 = vmatmul.f32.gmra.mxu0 %v186
        %v1714 = vpop.f32.mrf.mxu0
        %v1715 = vadd.f32 0.0, %v1714
        %1716 = vmatmul.f32.gmra.mxu0 %v188
        %v1717 = vpop.f32.mrf.mxu0
        %v1718 = vadd.f32 0.0, %v1717
        %1719 = vmatmul.f32.gmra.mxu0 %v190
        %v1720 = vpop.f32.mrf.mxu0
        %v1721 = vadd.f32 0.0, %v1720
        %1722 = vmatmul.f32.gmra.mxu0 %v192
        %v1723 = vpop.f32.mrf.mxu0
        %v1724 = vadd.f32 0.0, %v1723
        %1725 = vmatmul.f32.gmra.mxu0 %v194
        %v1726 = vpop.f32.mrf.mxu0
        %v1727 = vadd.f32 0.0, %v1726
        %1728 = vmatmul.f32.gmra.mxu0 %v196
        %v1729 = vpop.f32.mrf.mxu0
        %v1730 = vadd.f32 0.0, %v1729
        %1731 = vmatmul.f32.gmra.mxu0 %v198
        %v1732 = vpop.f32.mrf.mxu0
        %v1733 = vadd.f32 0.0, %v1732
        %1734 = vmatmul.f32.gmra.mxu0 %v200
        %v1735 = vpop.f32.mrf.mxu0
        %v1736 = vadd.f32 0.0, %v1735
        %1737 = vmatmul.f32.gmra.mxu0 %v202
        %v1738 = vpop.f32.mrf.mxu0
        %v1739 = vadd.f32 0.0, %v1738
        %1740 = vdwg.mxu0
        %1741 = vmatpush.msra.mxu0 %v1675
        %1742 = vmatpush.msra.mxu0 %v1674
        %1743 = vmatpush.msra.mxu0 %v1673
        %1744 = vmatpush.msra.mxu0 %v1672
        %1745 = vmatpush.msra.mxu0 %v1671
        %1746 = vmatpush.msra.mxu0 %v1670
        %1747 = vmatpush.msra.mxu0 %v1669
        %1748 = vmatpush.msra.mxu0 %v1668
        %1749 = vmatpush.msra.mxu0 %v1667
        %1750 = vmatpush.msra.mxu0 %v1666
        %1751 = vmatpush.msra.mxu0 %v1665
        %1752 = vmatpush.msra.mxu0 %v1664
        %1753 = vmatpush.msra.mxu0 %v1663
        %1754 = vmatpush.msra.mxu0 %v1662
        %1755 = vmatpush.msra.mxu0 %v1661
        %1756 = vmatpush.msra.mxu0 %v1660
        %1757 = vmatmul.f32.gmra.mxu0 %v173
        %v1758 = vpop.f32.mrf.mxu0
        %v1759 = vadd.f32 %v1694, %v1758
        %1760 = vmatmul.f32.gmra.mxu0 %v175
        %v1761 = vpop.f32.mrf.mxu0
        %v1762 = vadd.f32 %v1697, %v1761
        %1763 = vmatmul.f32.gmra.mxu0 %v177
        %v1764 = vpop.f32.mrf.mxu0
        %v1765 = vadd.f32 %v1700, %v1764
        %1766 = vmatmul.f32.gmra.mxu0 %v179
        %v1767 = vpop.f32.mrf.mxu0
        %v1768 = vadd.f32 %v1703, %v1767
        %1769 = vmatmul.f32.gmra.mxu0 %v181
        %v1770 = vpop.f32.mrf.mxu0
        %v1771 = vadd.f32 %v1706, %v1770
        %1772 = vmatmul.f32.gmra.mxu0 %v183
        %v1773 = vpop.f32.mrf.mxu0
        %v1774 = vadd.f32 %v1709, %v1773
        %1775 = vmatmul.f32.gmra.mxu0 %v185
        %v1776 = vpop.f32.mrf.mxu0
        %v1777 = vadd.f32 %v1712, %v1776
        %1778 = vmatmul.f32.gmra.mxu0 %v187
        %v1779 = vpop.f32.mrf.mxu0
        %v1780 = vadd.f32 %v1715, %v1779
        %1781 = vmatmul.f32.gmra.mxu0 %v189
        %v1782 = vpop.f32.mrf.mxu0
        %v1783 = vadd.f32 %v1718, %v1782
        %1784 = vmatmul.f32.gmra.mxu0 %v191
        %v1785 = vpop.f32.mrf.mxu0
        %v1786 = vadd.f32 %v1721, %v1785
        %1787 = vmatmul.f32.gmra.mxu0 %v193
        %v1788 = vpop.f32.mrf.mxu0
        %v1789 = vadd.f32 %v1724, %v1788
        %1790 = vmatmul.f32.gmra.mxu0 %v195
        %v1791 = vpop.f32.mrf.mxu0
        %v1792 = vadd.f32 %v1727, %v1791
        %1793 = vmatmul.f32.gmra.mxu0 %v197
        %v1794 = vpop.f32.mrf.mxu0
        %v1795 = vadd.f32 %v1730, %v1794
        %1796 = vmatmul.f32.gmra.mxu0 %v199
        %v1797 = vpop.f32.mrf.mxu0
        %v1798 = vadd.f32 %v1733, %v1797
        %1799 = vmatmul.f32.gmra.mxu0 %v201
        %v1800 = vpop.f32.mrf.mxu0
        %v1801 = vadd.f32 %v1736, %v1800
        %1802 = vmatmul.f32.gmra.mxu0 %v203
        %v1803 = vpop.f32.mrf.mxu0
        %v1804 = vadd.f32 %v1739, %v1803
        %1805 = vdwg.mxu0
        %s1806 = scalar_lea.vmem %s159, 1024 [#allocation2]
        %1807 = vst.msk [vmem:[%s1806] sm:$0xff] %vm366, %v1759
        %1808 = vst.msk [vmem:[%s1806 + $0x8] sm:$0xff] %vm366, %v1762
        %1809 = vst.msk [vmem:[%s1806 + $0x10] sm:$0xff] %vm366, %v1765
        %1810 = vst.msk [vmem:[%s1806 + $0x18] sm:$0xff] %vm366, %v1768
        %1811 = vst.msk [vmem:[%s1806 + $0x20] sm:$0xff] %vm366, %v1771
        %1812 = vst.msk [vmem:[%s1806 + $0x28] sm:$0xff] %vm366, %v1774
        %1813 = vst.msk [vmem:[%s1806 + $0x30] sm:$0xff] %vm366, %v1777
        %1814 = vst.msk [vmem:[%s1806 + $0x38] sm:$0xff] %vm366, %v1780
        %1815 = vst.msk [vmem:[%s1806 + $0x40] sm:$0xff] %vm366, %v1783
        %1816 = vst.msk [vmem:[%s1806 + $0x48] sm:$0xff] %vm366, %v1786
        %1817 = vst.msk [vmem:[%s1806 + $0x50] sm:$0xff] %vm366, %v1789
        %1818 = vst.msk [vmem:[%s1806 + $0x58] sm:$0xff] %vm366, %v1792
        %1819 = vst.msk [vmem:[%s1806 + $0x60] sm:$0xff] %vm366, %v1795
        %1820 = vst.msk [vmem:[%s1806 + $0x68] sm:$0xff] %vm366, %v1798
        %1821 = vst.msk [vmem:[%s1806 + $0x70] sm:$0xff] %vm366, %v1801
        %1822 = vst.msk [vmem:[%s1806 + $0x78] sm:$0xff] %vm366, %v1804
        %s1823 = scalar_lea.vmem %s1, 2304
        %v1824 = vld [vmem:[%s1823] sm:$0xff]
        %v1825 = vld [vmem:[%s1823 + $0x8] sm:$0xff]
        %v1826 = vld [vmem:[%s1823 + $0x10] sm:$0xff]
        %v1827 = vld [vmem:[%s1823 + $0x18] sm:$0xff]
        %v1828 = vld [vmem:[%s1823 + $0x20] sm:$0xff]
        %v1829 = vld [vmem:[%s1823 + $0x28] sm:$0xff]
        %v1830 = vld [vmem:[%s1823 + $0x30] sm:$0xff]
        %v1831 = vld [vmem:[%s1823 + $0x38] sm:$0xff]
        %v1832 = vld [vmem:[%s1823 + $0x40] sm:$0xff]
        %v1833 = vld [vmem:[%s1823 + $0x48] sm:$0xff]
        %v1834 = vld [vmem:[%s1823 + $0x50] sm:$0xff]
        %v1835 = vld [vmem:[%s1823 + $0x58] sm:$0xff]
        %v1836 = vld [vmem:[%s1823 + $0x60] sm:$0xff]
        %v1837 = vld [vmem:[%s1823 + $0x68] sm:$0xff]
        %v1838 = vld [vmem:[%s1823 + $0x70] sm:$0xff]
        %v1839 = vld [vmem:[%s1823 + $0x78] sm:$0xff]
        %v1840 = vld [vmem:[%s1823 + $0x80] sm:$0xff]
        %v1841 = vld [vmem:[%s1823 + $0x88] sm:$0xff]
        %v1842 = vld [vmem:[%s1823 + $0x90] sm:$0xff]
        %v1843 = vld [vmem:[%s1823 + $0x98] sm:$0xff]
        %v1844 = vld [vmem:[%s1823 + $0xa0] sm:$0xff]
        %v1845 = vld [vmem:[%s1823 + $0xa8] sm:$0xff]
        %v1846 = vld [vmem:[%s1823 + $0xb0] sm:$0xff]
        %v1847 = vld [vmem:[%s1823 + $0xb8] sm:$0xff]
        %v1848 = vld [vmem:[%s1823 + $0xc0] sm:$0xff]
        %v1849 = vld [vmem:[%s1823 + $0xc8] sm:$0xff]
        %v1850 = vld [vmem:[%s1823 + $0xd0] sm:$0xff]
        %v1851 = vld [vmem:[%s1823 + $0xd8] sm:$0xff]
        %v1852 = vld [vmem:[%s1823 + $0xe0] sm:$0xff]
        %v1853 = vld [vmem:[%s1823 + $0xe8] sm:$0xff]
        %v1854 = vld [vmem:[%s1823 + $0xf0] sm:$0xff]
        %v1855 = vld [vmem:[%s1823 + $0xf8] sm:$0xff]
        %1856 = vmatpush.msra.mxu0 %v1839
        %1857 = vmatpush.msra.mxu0 %v1838
        %1858 = vmatpush.msra.mxu0 %v1837
        %1859 = vmatpush.msra.mxu0 %v1836
        %1860 = vmatpush.msra.mxu0 %v1835
        %1861 = vmatpush.msra.mxu0 %v1834
        %1862 = vmatpush.msra.mxu0 %v1833
        %1863 = vmatpush.msra.mxu0 %v1832
        %1864 = vmatpush.msra.mxu0 %v1831
        %1865 = vmatpush.msra.mxu0 %v1830
        %1866 = vmatpush.msra.mxu0 %v1829
        %1867 = vmatpush.msra.mxu0 %v1828
        %1868 = vmatpush.msra.mxu0 %v1827
        %1869 = vmatpush.msra.mxu0 %v1826
        %1870 = vmatpush.msra.mxu0 %v1825
        %1871 = vmatpush.msra.mxu0 %v1824
        %1872 = vmatmul.f32.gmra.mxu0 %v172
        %v1873 = vpop.f32.mrf.mxu0
        %v1874 = vadd.f32 0.0, %v1873
        %1875 = vmatmul.f32.gmra.mxu0 %v174
        %v1876 = vpop.f32.mrf.mxu0
        %v1877 = vadd.f32 0.0, %v1876
        %1878 = vmatmul.f32.gmra.mxu0 %v176
        %v1879 = vpop.f32.mrf.mxu0
        %v1880 = vadd.f32 0.0, %v1879
        %1881 = vmatmul.f32.gmra.mxu0 %v178
        %v1882 = vpop.f32.mrf.mxu0
        %v1883 = vadd.f32 0.0, %v1882
        %1884 = vmatmul.f32.gmra.mxu0 %v180
        %v1885 = vpop.f32.mrf.mxu0
        %v1886 = vadd.f32 0.0, %v1885
        %1887 = vmatmul.f32.gmra.mxu0 %v182
        %v1888 = vpop.f32.mrf.mxu0
        %v1889 = vadd.f32 0.0, %v1888
        %1890 = vmatmul.f32.gmra.mxu0 %v184
        %v1891 = vpop.f32.mrf.mxu0
        %v1892 = vadd.f32 0.0, %v1891
        %1893 = vmatmul.f32.gmra.mxu0 %v186
        %v1894 = vpop.f32.mrf.mxu0
        %v1895 = vadd.f32 0.0, %v1894
        %1896 = vmatmul.f32.gmra.mxu0 %v188
        %v1897 = vpop.f32.mrf.mxu0
        %v1898 = vadd.f32 0.0, %v1897
        %1899 = vmatmul.f32.gmra.mxu0 %v190
        %v1900 = vpop.f32.mrf.mxu0
        %v1901 = vadd.f32 0.0, %v1900
        %1902 = vmatmul.f32.gmra.mxu0 %v192
        %v1903 = vpop.f32.mrf.mxu0
        %v1904 = vadd.f32 0.0, %v1903
        %1905 = vmatmul.f32.gmra.mxu0 %v194
        %v1906 = vpop.f32.mrf.mxu0
        %v1907 = vadd.f32 0.0, %v1906
        %1908 = vmatmul.f32.gmra.mxu0 %v196
        %v1909 = vpop.f32.mrf.mxu0
        %v1910 = vadd.f32 0.0, %v1909
        %1911 = vmatmul.f32.gmra.mxu0 %v198
        %v1912 = vpop.f32.mrf.mxu0
        %v1913 = vadd.f32 0.0, %v1912
        %1914 = vmatmul.f32.gmra.mxu0 %v200
        %v1915 = vpop.f32.mrf.mxu0
        %v1916 = vadd.f32 0.0, %v1915
        %1917 = vmatmul.f32.gmra.mxu0 %v202
        %v1918 = vpop.f32.mrf.mxu0
        %v1919 = vadd.f32 0.0, %v1918
        %1920 = vdwg.mxu0
        %1921 = vmatpush.msra.mxu0 %v1855
        %1922 = vmatpush.msra.mxu0 %v1854
        %1923 = vmatpush.msra.mxu0 %v1853
        %1924 = vmatpush.msra.mxu0 %v1852
        %1925 = vmatpush.msra.mxu0 %v1851
        %1926 = vmatpush.msra.mxu0 %v1850
        %1927 = vmatpush.msra.mxu0 %v1849
        %1928 = vmatpush.msra.mxu0 %v1848
        %1929 = vmatpush.msra.mxu0 %v1847
        %1930 = vmatpush.msra.mxu0 %v1846
        %1931 = vmatpush.msra.mxu0 %v1845
        %1932 = vmatpush.msra.mxu0 %v1844
        %1933 = vmatpush.msra.mxu0 %v1843
        %1934 = vmatpush.msra.mxu0 %v1842
        %1935 = vmatpush.msra.mxu0 %v1841
        %1936 = vmatpush.msra.mxu0 %v1840
        %1937 = vmatmul.f32.gmra.mxu0 %v173
        %v1938 = vpop.f32.mrf.mxu0
        %v1939 = vadd.f32 %v1874, %v1938
        %1940 = vmatmul.f32.gmra.mxu0 %v175
        %v1941 = vpop.f32.mrf.mxu0
        %v1942 = vadd.f32 %v1877, %v1941
        %1943 = vmatmul.f32.gmra.mxu0 %v177
        %v1944 = vpop.f32.mrf.mxu0
        %v1945 = vadd.f32 %v1880, %v1944
        %1946 = vmatmul.f32.gmra.mxu0 %v179
        %v1947 = vpop.f32.mrf.mxu0
        %v1948 = vadd.f32 %v1883, %v1947
        %1949 = vmatmul.f32.gmra.mxu0 %v181
        %v1950 = vpop.f32.mrf.mxu0
        %v1951 = vadd.f32 %v1886, %v1950
        %1952 = vmatmul.f32.gmra.mxu0 %v183
        %v1953 = vpop.f32.mrf.mxu0
        %v1954 = vadd.f32 %v1889, %v1953
        %1955 = vmatmul.f32.gmra.mxu0 %v185
        %v1956 = vpop.f32.mrf.mxu0
        %v1957 = vadd.f32 %v1892, %v1956
        %1958 = vmatmul.f32.gmra.mxu0 %v187
        %v1959 = vpop.f32.mrf.mxu0
        %v1960 = vadd.f32 %v1895, %v1959
        %1961 = vmatmul.f32.gmra.mxu0 %v189
        %v1962 = vpop.f32.mrf.mxu0
        %v1963 = vadd.f32 %v1898, %v1962
        %1964 = vmatmul.f32.gmra.mxu0 %v191
        %v1965 = vpop.f32.mrf.mxu0
        %v1966 = vadd.f32 %v1901, %v1965
        %1967 = vmatmul.f32.gmra.mxu0 %v193
        %v1968 = vpop.f32.mrf.mxu0
        %v1969 = vadd.f32 %v1904, %v1968
        %1970 = vmatmul.f32.gmra.mxu0 %v195
        %v1971 = vpop.f32.mrf.mxu0
        %v1972 = vadd.f32 %v1907, %v1971
        %1973 = vmatmul.f32.gmra.mxu0 %v197
        %v1974 = vpop.f32.mrf.mxu0
        %v1975 = vadd.f32 %v1910, %v1974
        %1976 = vmatmul.f32.gmra.mxu0 %v199
        %v1977 = vpop.f32.mrf.mxu0
        %v1978 = vadd.f32 %v1913, %v1977
        %1979 = vmatmul.f32.gmra.mxu0 %v201
        %v1980 = vpop.f32.mrf.mxu0
        %v1981 = vadd.f32 %v1916, %v1980
        %1982 = vmatmul.f32.gmra.mxu0 %v203
        %v1983 = vpop.f32.mrf.mxu0
        %v1984 = vadd.f32 %v1919, %v1983
        %1985 = vdwg.mxu0
        %s1986 = scalar_lea.vmem %s159, 1152 [#allocation2]
        %1987 = vst.msk [vmem:[%s1986] sm:$0xff] %vm366, %v1939
        %1988 = vst.msk [vmem:[%s1986 + $0x8] sm:$0xff] %vm366, %v1942
        %1989 = vst.msk [vmem:[%s1986 + $0x10] sm:$0xff] %vm366, %v1945
        %1990 = vst.msk [vmem:[%s1986 + $0x18] sm:$0xff] %vm366, %v1948
        %1991 = vst.msk [vmem:[%s1986 + $0x20] sm:$0xff] %vm366, %v1951
        %1992 = vst.msk [vmem:[%s1986 + $0x28] sm:$0xff] %vm366, %v1954
        %1993 = vst.msk [vmem:[%s1986 + $0x30] sm:$0xff] %vm366, %v1957
        %1994 = vst.msk [vmem:[%s1986 + $0x38] sm:$0xff] %vm366, %v1960
        %1995 = vst.msk [vmem:[%s1986 + $0x40] sm:$0xff] %vm366, %v1963
        %1996 = vst.msk [vmem:[%s1986 + $0x48] sm:$0xff] %vm366, %v1966
        %1997 = vst.msk [vmem:[%s1986 + $0x50] sm:$0xff] %vm366, %v1969
        %1998 = vst.msk [vmem:[%s1986 + $0x58] sm:$0xff] %vm366, %v1972
        %1999 = vst.msk [vmem:[%s1986 + $0x60] sm:$0xff] %vm366, %v1975
        %2000 = vst.msk [vmem:[%s1986 + $0x68] sm:$0xff] %vm366, %v1978
        %2001 = vst.msk [vmem:[%s1986 + $0x70] sm:$0xff] %vm366, %v1981
        %2002 = vst.msk [vmem:[%s1986 + $0x78] sm:$0xff] %vm366, %v1984
        %s2003 = scalar_lea.vmem %s1, 2560
        %v2004 = vld [vmem:[%s2003] sm:$0xff]
        %v2005 = vld [vmem:[%s2003 + $0x8] sm:$0xff]
        %v2006 = vld [vmem:[%s2003 + $0x10] sm:$0xff]
        %v2007 = vld [vmem:[%s2003 + $0x18] sm:$0xff]
        %v2008 = vld [vmem:[%s2003 + $0x20] sm:$0xff]
        %v2009 = vld [vmem:[%s2003 + $0x28] sm:$0xff]
        %v2010 = vld [vmem:[%s2003 + $0x30] sm:$0xff]
        %v2011 = vld [vmem:[%s2003 + $0x38] sm:$0xff]
        %v2012 = vld [vmem:[%s2003 + $0x40] sm:$0xff]
        %v2013 = vld [vmem:[%s2003 + $0x48] sm:$0xff]
        %v2014 = vld [vmem:[%s2003 + $0x50] sm:$0xff]
        %v2015 = vld [vmem:[%s2003 + $0x58] sm:$0xff]
        %v2016 = vld [vmem:[%s2003 + $0x60] sm:$0xff]
        %v2017 = vld [vmem:[%s2003 + $0x68] sm:$0xff]
        %v2018 = vld [vmem:[%s2003 + $0x70] sm:$0xff]
        %v2019 = vld [vmem:[%s2003 + $0x78] sm:$0xff]
        %v2020 = vld [vmem:[%s2003 + $0x80] sm:$0xff]
        %v2021 = vld [vmem:[%s2003 + $0x88] sm:$0xff]
        %v2022 = vld [vmem:[%s2003 + $0x90] sm:$0xff]
        %v2023 = vld [vmem:[%s2003 + $0x98] sm:$0xff]
        %v2024 = vld [vmem:[%s2003 + $0xa0] sm:$0xff]
        %v2025 = vld [vmem:[%s2003 + $0xa8] sm:$0xff]
        %v2026 = vld [vmem:[%s2003 + $0xb0] sm:$0xff]
        %v2027 = vld [vmem:[%s2003 + $0xb8] sm:$0xff]
        %v2028 = vld [vmem:[%s2003 + $0xc0] sm:$0xff]
        %v2029 = vld [vmem:[%s2003 + $0xc8] sm:$0xff]
        %v2030 = vld [vmem:[%s2003 + $0xd0] sm:$0xff]
        %v2031 = vld [vmem:[%s2003 + $0xd8] sm:$0xff]
        %v2032 = vld [vmem:[%s2003 + $0xe0] sm:$0xff]
        %v2033 = vld [vmem:[%s2003 + $0xe8] sm:$0xff]
        %v2034 = vld [vmem:[%s2003 + $0xf0] sm:$0xff]
        %v2035 = vld [vmem:[%s2003 + $0xf8] sm:$0xff]
        %2036 = vmatpush.msra.mxu0 %v2019
        %2037 = vmatpush.msra.mxu0 %v2018
        %2038 = vmatpush.msra.mxu0 %v2017
        %2039 = vmatpush.msra.mxu0 %v2016
        %2040 = vmatpush.msra.mxu0 %v2015
        %2041 = vmatpush.msra.mxu0 %v2014
        %2042 = vmatpush.msra.mxu0 %v2013
        %2043 = vmatpush.msra.mxu0 %v2012
        %2044 = vmatpush.msra.mxu0 %v2011
        %2045 = vmatpush.msra.mxu0 %v2010
        %2046 = vmatpush.msra.mxu0 %v2009
        %2047 = vmatpush.msra.mxu0 %v2008
        %2048 = vmatpush.msra.mxu0 %v2007
        %2049 = vmatpush.msra.mxu0 %v2006
        %2050 = vmatpush.msra.mxu0 %v2005
        %2051 = vmatpush.msra.mxu0 %v2004
        %2052 = vmatmul.f32.gmra.mxu0 %v172
        %v2053 = vpop.f32.mrf.mxu0
        %v2054 = vadd.f32 0.0, %v2053
        %2055 = vmatmul.f32.gmra.mxu0 %v174
        %v2056 = vpop.f32.mrf.mxu0
        %v2057 = vadd.f32 0.0, %v2056
        %2058 = vmatmul.f32.gmra.mxu0 %v176
        %v2059 = vpop.f32.mrf.mxu0
        %v2060 = vadd.f32 0.0, %v2059
        %2061 = vmatmul.f32.gmra.mxu0 %v178
        %v2062 = vpop.f32.mrf.mxu0
        %v2063 = vadd.f32 0.0, %v2062
        %2064 = vmatmul.f32.gmra.mxu0 %v180
        %v2065 = vpop.f32.mrf.mxu0
        %v2066 = vadd.f32 0.0, %v2065
        %2067 = vmatmul.f32.gmra.mxu0 %v182
        %v2068 = vpop.f32.mrf.mxu0
        %v2069 = vadd.f32 0.0, %v2068
        %2070 = vmatmul.f32.gmra.mxu0 %v184
        %v2071 = vpop.f32.mrf.mxu0
        %v2072 = vadd.f32 0.0, %v2071
        %2073 = vmatmul.f32.gmra.mxu0 %v186
        %v2074 = vpop.f32.mrf.mxu0
        %v2075 = vadd.f32 0.0, %v2074
        %2076 = vmatmul.f32.gmra.mxu0 %v188
        %v2077 = vpop.f32.mrf.mxu0
        %v2078 = vadd.f32 0.0, %v2077
        %2079 = vmatmul.f32.gmra.mxu0 %v190
        %v2080 = vpop.f32.mrf.mxu0
        %v2081 = vadd.f32 0.0, %v2080
        %2082 = vmatmul.f32.gmra.mxu0 %v192
        %v2083 = vpop.f32.mrf.mxu0
        %v2084 = vadd.f32 0.0, %v2083
        %2085 = vmatmul.f32.gmra.mxu0 %v194
        %v2086 = vpop.f32.mrf.mxu0
        %v2087 = vadd.f32 0.0, %v2086
        %2088 = vmatmul.f32.gmra.mxu0 %v196
        %v2089 = vpop.f32.mrf.mxu0
        %v2090 = vadd.f32 0.0, %v2089
        %2091 = vmatmul.f32.gmra.mxu0 %v198
        %v2092 = vpop.f32.mrf.mxu0
        %v2093 = vadd.f32 0.0, %v2092
        %2094 = vmatmul.f32.gmra.mxu0 %v200
        %v2095 = vpop.f32.mrf.mxu0
        %v2096 = vadd.f32 0.0, %v2095
        %2097 = vmatmul.f32.gmra.mxu0 %v202
        %v2098 = vpop.f32.mrf.mxu0
        %v2099 = vadd.f32 0.0, %v2098
        %2100 = vdwg.mxu0
        %2101 = vmatpush.msra.mxu0 %v2035
        %2102 = vmatpush.msra.mxu0 %v2034
        %2103 = vmatpush.msra.mxu0 %v2033
        %2104 = vmatpush.msra.mxu0 %v2032
        %2105 = vmatpush.msra.mxu0 %v2031
        %2106 = vmatpush.msra.mxu0 %v2030
        %2107 = vmatpush.msra.mxu0 %v2029
        %2108 = vmatpush.msra.mxu0 %v2028
        %2109 = vmatpush.msra.mxu0 %v2027
        %2110 = vmatpush.msra.mxu0 %v2026
        %2111 = vmatpush.msra.mxu0 %v2025
        %2112 = vmatpush.msra.mxu0 %v2024
        %2113 = vmatpush.msra.mxu0 %v2023
        %2114 = vmatpush.msra.mxu0 %v2022
        %2115 = vmatpush.msra.mxu0 %v2021
        %2116 = vmatpush.msra.mxu0 %v2020
        %2117 = vmatmul.f32.gmra.mxu0 %v173
        %v2118 = vpop.f32.mrf.mxu0
        %v2119 = vadd.f32 %v2054, %v2118
        %2120 = vmatmul.f32.gmra.mxu0 %v175
        %v2121 = vpop.f32.mrf.mxu0
        %v2122 = vadd.f32 %v2057, %v2121
        %2123 = vmatmul.f32.gmra.mxu0 %v177
        %v2124 = vpop.f32.mrf.mxu0
        %v2125 = vadd.f32 %v2060, %v2124
        %2126 = vmatmul.f32.gmra.mxu0 %v179
        %v2127 = vpop.f32.mrf.mxu0
        %v2128 = vadd.f32 %v2063, %v2127
        %2129 = vmatmul.f32.gmra.mxu0 %v181
        %v2130 = vpop.f32.mrf.mxu0
        %v2131 = vadd.f32 %v2066, %v2130
        %2132 = vmatmul.f32.gmra.mxu0 %v183
        %v2133 = vpop.f32.mrf.mxu0
        %v2134 = vadd.f32 %v2069, %v2133
        %2135 = vmatmul.f32.gmra.mxu0 %v185
        %v2136 = vpop.f32.mrf.mxu0
        %v2137 = vadd.f32 %v2072, %v2136
        %2138 = vmatmul.f32.gmra.mxu0 %v187
        %v2139 = vpop.f32.mrf.mxu0
        %v2140 = vadd.f32 %v2075, %v2139
        %2141 = vmatmul.f32.gmra.mxu0 %v189
        %v2142 = vpop.f32.mrf.mxu0
        %v2143 = vadd.f32 %v2078, %v2142
        %2144 = vmatmul.f32.gmra.mxu0 %v191
        %v2145 = vpop.f32.mrf.mxu0
        %v2146 = vadd.f32 %v2081, %v2145
        %2147 = vmatmul.f32.gmra.mxu0 %v193
        %v2148 = vpop.f32.mrf.mxu0
        %v2149 = vadd.f32 %v2084, %v2148
        %2150 = vmatmul.f32.gmra.mxu0 %v195
        %v2151 = vpop.f32.mrf.mxu0
        %v2152 = vadd.f32 %v2087, %v2151
        %2153 = vmatmul.f32.gmra.mxu0 %v197
        %v2154 = vpop.f32.mrf.mxu0
        %v2155 = vadd.f32 %v2090, %v2154
        %2156 = vmatmul.f32.gmra.mxu0 %v199
        %v2157 = vpop.f32.mrf.mxu0
        %v2158 = vadd.f32 %v2093, %v2157
        %2159 = vmatmul.f32.gmra.mxu0 %v201
        %v2160 = vpop.f32.mrf.mxu0
        %v2161 = vadd.f32 %v2096, %v2160
        %2162 = vmatmul.f32.gmra.mxu0 %v203
        %v2163 = vpop.f32.mrf.mxu0
        %v2164 = vadd.f32 %v2099, %v2163
        %2165 = vdwg.mxu0
        %s2166 = scalar_lea.vmem %s159, 1280 [#allocation2]
        %2167 = vst.msk [vmem:[%s2166] sm:$0xff] %vm366, %v2119
        %2168 = vst.msk [vmem:[%s2166 + $0x8] sm:$0xff] %vm366, %v2122
        %2169 = vst.msk [vmem:[%s2166 + $0x10] sm:$0xff] %vm366, %v2125
        %2170 = vst.msk [vmem:[%s2166 + $0x18] sm:$0xff] %vm366, %v2128
        %2171 = vst.msk [vmem:[%s2166 + $0x20] sm:$0xff] %vm366, %v2131
        %2172 = vst.msk [vmem:[%s2166 + $0x28] sm:$0xff] %vm366, %v2134
        %2173 = vst.msk [vmem:[%s2166 + $0x30] sm:$0xff] %vm366, %v2137
        %2174 = vst.msk [vmem:[%s2166 + $0x38] sm:$0xff] %vm366, %v2140
        %2175 = vst.msk [vmem:[%s2166 + $0x40] sm:$0xff] %vm366, %v2143
        %2176 = vst.msk [vmem:[%s2166 + $0x48] sm:$0xff] %vm366, %v2146
        %2177 = vst.msk [vmem:[%s2166 + $0x50] sm:$0xff] %vm366, %v2149
        %2178 = vst.msk [vmem:[%s2166 + $0x58] sm:$0xff] %vm366, %v2152
        %2179 = vst.msk [vmem:[%s2166 + $0x60] sm:$0xff] %vm366, %v2155
        %2180 = vst.msk [vmem:[%s2166 + $0x68] sm:$0xff] %vm366, %v2158
        %2181 = vst.msk [vmem:[%s2166 + $0x70] sm:$0xff] %vm366, %v2161
        %2182 = vst.msk [vmem:[%s2166 + $0x78] sm:$0xff] %vm366, %v2164
        %s2183 = scalar_lea.vmem %s1, 2816
        %v2184 = vld [vmem:[%s2183] sm:$0xff]
        %v2185 = vld [vmem:[%s2183 + $0x8] sm:$0xff]
        %v2186 = vld [vmem:[%s2183 + $0x10] sm:$0xff]
        %v2187 = vld [vmem:[%s2183 + $0x18] sm:$0xff]
        %v2188 = vld [vmem:[%s2183 + $0x20] sm:$0xff]
        %v2189 = vld [vmem:[%s2183 + $0x28] sm:$0xff]
        %v2190 = vld [vmem:[%s2183 + $0x30] sm:$0xff]
        %v2191 = vld [vmem:[%s2183 + $0x38] sm:$0xff]
        %v2192 = vld [vmem:[%s2183 + $0x40] sm:$0xff]
        %v2193 = vld [vmem:[%s2183 + $0x48] sm:$0xff]
        %v2194 = vld [vmem:[%s2183 + $0x50] sm:$0xff]
        %v2195 = vld [vmem:[%s2183 + $0x58] sm:$0xff]
        %v2196 = vld [vmem:[%s2183 + $0x60] sm:$0xff]
        %v2197 = vld [vmem:[%s2183 + $0x68] sm:$0xff]
        %v2198 = vld [vmem:[%s2183 + $0x70] sm:$0xff]
        %v2199 = vld [vmem:[%s2183 + $0x78] sm:$0xff]
        %v2200 = vld [vmem:[%s2183 + $0x80] sm:$0xff]
        %v2201 = vld [vmem:[%s2183 + $0x88] sm:$0xff]
        %v2202 = vld [vmem:[%s2183 + $0x90] sm:$0xff]
        %v2203 = vld [vmem:[%s2183 + $0x98] sm:$0xff]
        %v2204 = vld [vmem:[%s2183 + $0xa0] sm:$0xff]
        %v2205 = vld [vmem:[%s2183 + $0xa8] sm:$0xff]
        %v2206 = vld [vmem:[%s2183 + $0xb0] sm:$0xff]
        %v2207 = vld [vmem:[%s2183 + $0xb8] sm:$0xff]
        %v2208 = vld [vmem:[%s2183 + $0xc0] sm:$0xff]
        %v2209 = vld [vmem:[%s2183 + $0xc8] sm:$0xff]
        %v2210 = vld [vmem:[%s2183 + $0xd0] sm:$0xff]
        %v2211 = vld [vmem:[%s2183 + $0xd8] sm:$0xff]
        %v2212 = vld [vmem:[%s2183 + $0xe0] sm:$0xff]
        %v2213 = vld [vmem:[%s2183 + $0xe8] sm:$0xff]
        %v2214 = vld [vmem:[%s2183 + $0xf0] sm:$0xff]
        %v2215 = vld [vmem:[%s2183 + $0xf8] sm:$0xff]
        %2216 = vmatpush.msra.mxu0 %v2199
        %2217 = vmatpush.msra.mxu0 %v2198
        %2218 = vmatpush.msra.mxu0 %v2197
        %2219 = vmatpush.msra.mxu0 %v2196
        %2220 = vmatpush.msra.mxu0 %v2195
        %2221 = vmatpush.msra.mxu0 %v2194
        %2222 = vmatpush.msra.mxu0 %v2193
        %2223 = vmatpush.msra.mxu0 %v2192
        %2224 = vmatpush.msra.mxu0 %v2191
        %2225 = vmatpush.msra.mxu0 %v2190
        %2226 = vmatpush.msra.mxu0 %v2189
        %2227 = vmatpush.msra.mxu0 %v2188
        %2228 = vmatpush.msra.mxu0 %v2187
        %2229 = vmatpush.msra.mxu0 %v2186
        %2230 = vmatpush.msra.mxu0 %v2185
        %2231 = vmatpush.msra.mxu0 %v2184
        %2232 = vmatmul.f32.gmra.mxu0 %v172
        %v2233 = vpop.f32.mrf.mxu0
        %v2234 = vadd.f32 0.0, %v2233
        %2235 = vmatmul.f32.gmra.mxu0 %v174
        %v2236 = vpop.f32.mrf.mxu0
        %v2237 = vadd.f32 0.0, %v2236
        %2238 = vmatmul.f32.gmra.mxu0 %v176
        %v2239 = vpop.f32.mrf.mxu0
        %v2240 = vadd.f32 0.0, %v2239
        %2241 = vmatmul.f32.gmra.mxu0 %v178
        %v2242 = vpop.f32.mrf.mxu0
        %v2243 = vadd.f32 0.0, %v2242
        %2244 = vmatmul.f32.gmra.mxu0 %v180
        %v2245 = vpop.f32.mrf.mxu0
        %v2246 = vadd.f32 0.0, %v2245
        %2247 = vmatmul.f32.gmra.mxu0 %v182
        %v2248 = vpop.f32.mrf.mxu0
        %v2249 = vadd.f32 0.0, %v2248
        %2250 = vmatmul.f32.gmra.mxu0 %v184
        %v2251 = vpop.f32.mrf.mxu0
        %v2252 = vadd.f32 0.0, %v2251
        %2253 = vmatmul.f32.gmra.mxu0 %v186
        %v2254 = vpop.f32.mrf.mxu0
        %v2255 = vadd.f32 0.0, %v2254
        %2256 = vmatmul.f32.gmra.mxu0 %v188
        %v2257 = vpop.f32.mrf.mxu0
        %v2258 = vadd.f32 0.0, %v2257
        %2259 = vmatmul.f32.gmra.mxu0 %v190
        %v2260 = vpop.f32.mrf.mxu0
        %v2261 = vadd.f32 0.0, %v2260
        %2262 = vmatmul.f32.gmra.mxu0 %v192
        %v2263 = vpop.f32.mrf.mxu0
        %v2264 = vadd.f32 0.0, %v2263
        %2265 = vmatmul.f32.gmra.mxu0 %v194
        %v2266 = vpop.f32.mrf.mxu0
        %v2267 = vadd.f32 0.0, %v2266
        %2268 = vmatmul.f32.gmra.mxu0 %v196
        %v2269 = vpop.f32.mrf.mxu0
        %v2270 = vadd.f32 0.0, %v2269
        %2271 = vmatmul.f32.gmra.mxu0 %v198
        %v2272 = vpop.f32.mrf.mxu0
        %v2273 = vadd.f32 0.0, %v2272
        %2274 = vmatmul.f32.gmra.mxu0 %v200
        %v2275 = vpop.f32.mrf.mxu0
        %v2276 = vadd.f32 0.0, %v2275
        %2277 = vmatmul.f32.gmra.mxu0 %v202
        %v2278 = vpop.f32.mrf.mxu0
        %v2279 = vadd.f32 0.0, %v2278
        %2280 = vdwg.mxu0
        %2281 = vmatpush.msra.mxu0 %v2215
        %2282 = vmatpush.msra.mxu0 %v2214
        %2283 = vmatpush.msra.mxu0 %v2213
        %2284 = vmatpush.msra.mxu0 %v2212
        %2285 = vmatpush.msra.mxu0 %v2211
        %2286 = vmatpush.msra.mxu0 %v2210
        %2287 = vmatpush.msra.mxu0 %v2209
        %2288 = vmatpush.msra.mxu0 %v2208
        %2289 = vmatpush.msra.mxu0 %v2207
        %2290 = vmatpush.msra.mxu0 %v2206
        %2291 = vmatpush.msra.mxu0 %v2205
        %2292 = vmatpush.msra.mxu0 %v2204
        %2293 = vmatpush.msra.mxu0 %v2203
        %2294 = vmatpush.msra.mxu0 %v2202
        %2295 = vmatpush.msra.mxu0 %v2201
        %2296 = vmatpush.msra.mxu0 %v2200
        %2297 = vmatmul.f32.gmra.mxu0 %v173
        %v2298 = vpop.f32.mrf.mxu0
        %v2299 = vadd.f32 %v2234, %v2298
        %2300 = vmatmul.f32.gmra.mxu0 %v175
        %v2301 = vpop.f32.mrf.mxu0
        %v2302 = vadd.f32 %v2237, %v2301
        %2303 = vmatmul.f32.gmra.mxu0 %v177
        %v2304 = vpop.f32.mrf.mxu0
        %v2305 = vadd.f32 %v2240, %v2304
        %2306 = vmatmul.f32.gmra.mxu0 %v179
        %v2307 = vpop.f32.mrf.mxu0
        %v2308 = vadd.f32 %v2243, %v2307
        %2309 = vmatmul.f32.gmra.mxu0 %v181
        %v2310 = vpop.f32.mrf.mxu0
        %v2311 = vadd.f32 %v2246, %v2310
        %2312 = vmatmul.f32.gmra.mxu0 %v183
        %v2313 = vpop.f32.mrf.mxu0
        %v2314 = vadd.f32 %v2249, %v2313
        %2315 = vmatmul.f32.gmra.mxu0 %v185
        %v2316 = vpop.f32.mrf.mxu0
        %v2317 = vadd.f32 %v2252, %v2316
        %2318 = vmatmul.f32.gmra.mxu0 %v187
        %v2319 = vpop.f32.mrf.mxu0
        %v2320 = vadd.f32 %v2255, %v2319
        %2321 = vmatmul.f32.gmra.mxu0 %v189
        %v2322 = vpop.f32.mrf.mxu0
        %v2323 = vadd.f32 %v2258, %v2322
        %2324 = vmatmul.f32.gmra.mxu0 %v191
        %v2325 = vpop.f32.mrf.mxu0
        %v2326 = vadd.f32 %v2261, %v2325
        %2327 = vmatmul.f32.gmra.mxu0 %v193
        %v2328 = vpop.f32.mrf.mxu0
        %v2329 = vadd.f32 %v2264, %v2328
        %2330 = vmatmul.f32.gmra.mxu0 %v195
        %v2331 = vpop.f32.mrf.mxu0
        %v2332 = vadd.f32 %v2267, %v2331
        %2333 = vmatmul.f32.gmra.mxu0 %v197
        %v2334 = vpop.f32.mrf.mxu0
        %v2335 = vadd.f32 %v2270, %v2334
        %2336 = vmatmul.f32.gmra.mxu0 %v199
        %v2337 = vpop.f32.mrf.mxu0
        %v2338 = vadd.f32 %v2273, %v2337
        %2339 = vmatmul.f32.gmra.mxu0 %v201
        %v2340 = vpop.f32.mrf.mxu0
        %v2341 = vadd.f32 %v2276, %v2340
        %2342 = vmatmul.f32.gmra.mxu0 %v203
        %v2343 = vpop.f32.mrf.mxu0
        %v2344 = vadd.f32 %v2279, %v2343
        %2345 = vdwg.mxu0
        %s2346 = scalar_lea.vmem %s159, 1408 [#allocation2]
        %2347 = vst.msk [vmem:[%s2346] sm:$0xff] %vm366, %v2299
        %2348 = vst.msk [vmem:[%s2346 + $0x8] sm:$0xff] %vm366, %v2302
        %2349 = vst.msk [vmem:[%s2346 + $0x10] sm:$0xff] %vm366, %v2305
        %2350 = vst.msk [vmem:[%s2346 + $0x18] sm:$0xff] %vm366, %v2308
        %2351 = vst.msk [vmem:[%s2346 + $0x20] sm:$0xff] %vm366, %v2311
        %2352 = vst.msk [vmem:[%s2346 + $0x28] sm:$0xff] %vm366, %v2314
        %2353 = vst.msk [vmem:[%s2346 + $0x30] sm:$0xff] %vm366, %v2317
        %2354 = vst.msk [vmem:[%s2346 + $0x38] sm:$0xff] %vm366, %v2320
        %2355 = vst.msk [vmem:[%s2346 + $0x40] sm:$0xff] %vm366, %v2323
        %2356 = vst.msk [vmem:[%s2346 + $0x48] sm:$0xff] %vm366, %v2326
        %2357 = vst.msk [vmem:[%s2346 + $0x50] sm:$0xff] %vm366, %v2329
        %2358 = vst.msk [vmem:[%s2346 + $0x58] sm:$0xff] %vm366, %v2332
        %2359 = vst.msk [vmem:[%s2346 + $0x60] sm:$0xff] %vm366, %v2335
        %2360 = vst.msk [vmem:[%s2346 + $0x68] sm:$0xff] %vm366, %v2338
        %2361 = vst.msk [vmem:[%s2346 + $0x70] sm:$0xff] %vm366, %v2341
        %2362 = vst.msk [vmem:[%s2346 + $0x78] sm:$0xff] %vm366, %v2344
        %s2363 = sand.u32 %s84, 1
        %s2364 = sand.u32 %s84, 1
        %s2365 = smul.addr %s2364, 1536
        %s2366 = scalar_lea.vmem [#allocation2], %s2365
        // Predicated region
        $region29: #{tpu_custom_call.1} parent=27 // pred_check
          %p2367 = pneg %p94
        $region30: #{tpu_custom_call.1} parent=27 // pred_check_branch
          %2369 = sbr.rel (%p2367) target = $region32
        $region31: #{tpu_custom_call.1} parent=27 // pred_region
          %s2370 = smul.u32 16, %s18
          %s2371 = smul.addr %s17, 384
          %s2372 = sadd.s32 %s2370, %s2371
          %s2373 = smul.addr %s2372, 8
          %s2374 = scalar_lea.vmem %s2, %s2373
          // Predicated region
          $region33: #{tpu_custom_call.1} parent=31 // pred_check
            _
          $region34: #{tpu_custom_call.1} parent=31 // pred_check_branch
            %2376 = sbr.rel (0) target = $region36
          $region35: #{tpu_custom_call.1} parent=31 // pred_region
            // Predicated region
            $region37: #{tpu_custom_call.1} parent=35 // pred_check
              _
            $region38: #{tpu_custom_call.1} parent=35 // pred_check_branch
              %2378 = sbr.rel (0) target = $region40
            $region39: #{tpu_custom_call.1} parent=35 // pred_region
              // Predicated region
              $region52: #{tpu_custom_call.1} parent=39 // pred_check
                _
              $region53: #{tpu_custom_call.1} parent=39 // pred_check_branch
                %2776 = sbr.rel (0) target = $region55
              $region54: #{tpu_custom_call.1} parent=39 // pred_region
                loop: start=0, step=1, limit=1
                $region56: #{tpu_custom_call.1} parent=54 // loop_pre_header
                  _
                $region57: #{tpu_custom_call.1} parent=54 // loop_header
                  %s2778 = sphi 0, %s2782
                  %p2779 = scmp.ge.s32.totalorder %s2778, 1
                  %s2783 = sphi %s2366, %s2366
                  %s2784 = sphi %s2374, %s2374
                $region58: #{tpu_custom_call.1} parent=54 // loop_header_branch
                  %2781 = sbr.rel (%p2779) target = $region62
                $region59: #{tpu_custom_call.1} parent=54 // loop_body
                  %v2785 = vld [vmem:[%s2783] sm:$0xff]
                  %2786 = vst [vmem:[%s2784] sm:$0xff] %v2785
                  %v2787 = vld [vmem:[%s2783 + $0x8] sm:$0xff]
                  %2788 = vst [vmem:[%s2784 + $0x8] sm:$0xff] %v2787
                  %v2789 = vld [vmem:[%s2783 + $0x10] sm:$0xff]
                  %2790 = vst [vmem:[%s2784 + $0x10] sm:$0xff] %v2789
                  %v2791 = vld [vmem:[%s2783 + $0x18] sm:$0xff]
                  %2792 = vst [vmem:[%s2784 + $0x18] sm:$0xff] %v2791
                  %v2793 = vld [vmem:[%s2783 + $0x20] sm:$0xff]
                  %2794 = vst [vmem:[%s2784 + $0x20] sm:$0xff] %v2793
                  %v2795 = vld [vmem:[%s2783 + $0x28] sm:$0xff]
                  %2796 = vst [vmem:[%s2784 + $0x28] sm:$0xff] %v2795
                  %v2797 = vld [vmem:[%s2783 + $0x30] sm:$0xff]
                  %2798 = vst [vmem:[%s2784 + $0x30] sm:$0xff] %v2797
                  %v2799 = vld [vmem:[%s2783 + $0x38] sm:$0xff]
                  %2800 = vst [vmem:[%s2784 + $0x38] sm:$0xff] %v2799
                  %v2801 = vld [vmem:[%s2783 + $0x40] sm:$0xff]
                  %2802 = vst [vmem:[%s2784 + $0x40] sm:$0xff] %v2801
                  %v2803 = vld [vmem:[%s2783 + $0x48] sm:$0xff]
                  %2804 = vst [vmem:[%s2784 + $0x48] sm:$0xff] %v2803
                  %v2805 = vld [vmem:[%s2783 + $0x50] sm:$0xff]
                  %2806 = vst [vmem:[%s2784 + $0x50] sm:$0xff] %v2805
                  %v2807 = vld [vmem:[%s2783 + $0x58] sm:$0xff]
                  %2808 = vst [vmem:[%s2784 + $0x58] sm:$0xff] %v2807
                  %v2809 = vld [vmem:[%s2783 + $0x60] sm:$0xff]
                  %2810 = vst [vmem:[%s2784 + $0x60] sm:$0xff] %v2809
                  %v2811 = vld [vmem:[%s2783 + $0x68] sm:$0xff]
                  %2812 = vst [vmem:[%s2784 + $0x68] sm:$0xff] %v2811
                  %v2813 = vld [vmem:[%s2783 + $0x70] sm:$0xff]
                  %2814 = vst [vmem:[%s2784 + $0x70] sm:$0xff] %v2813
                  %v2815 = vld [vmem:[%s2783 + $0x78] sm:$0xff]
                  %2816 = vst [vmem:[%s2784 + $0x78] sm:$0xff] %v2815
                  %v2817 = vld [vmem:[%s2783 + $0x80] sm:$0xff]
                  %2818 = vst [vmem:[%s2784 + $0x100] sm:$0xff] %v2817
                  %v2819 = vld [vmem:[%s2783 + $0x88] sm:$0xff]
                  %2820 = vst [vmem:[%s2784 + $0x108] sm:$0xff] %v2819
                  %v2821 = vld [vmem:[%s2783 + $0x90] sm:$0xff]
                  %2822 = vst [vmem:[%s2784 + $0x110] sm:$0xff] %v2821
                  %v2823 = vld [vmem:[%s2783 + $0x98] sm:$0xff]
                  %2824 = vst [vmem:[%s2784 + $0x118] sm:$0xff] %v2823
                  %v2825 = vld [vmem:[%s2783 + $0xa0] sm:$0xff]
                  %2826 = vst [vmem:[%s2784 + $0x120] sm:$0xff] %v2825
                  %v2827 = vld [vmem:[%s2783 + $0xa8] sm:$0xff]
                  %2828 = vst [vmem:[%s2784 + $0x128] sm:$0xff] %v2827
                  %v2829 = vld [vmem:[%s2783 + $0xb0] sm:$0xff]
                  %2830 = vst [vmem:[%s2784 + $0x130] sm:$0xff] %v2829
                  %v2831 = vld [vmem:[%s2783 + $0xb8] sm:$0xff]
                  %2832 = vst [vmem:[%s2784 + $0x138] sm:$0xff] %v2831
                  %v2833 = vld [vmem:[%s2783 + $0xc0] sm:$0xff]
                  %2834 = vst [vmem:[%s2784 + $0x140] sm:$0xff] %v2833
                  %v2835 = vld [vmem:[%s2783 + $0xc8] sm:$0xff]
                  %2836 = vst [vmem:[%s2784 + $0x148] sm:$0xff] %v2835
                  %v2837 = vld [vmem:[%s2783 + $0xd0] sm:$0xff]
                  %2838 = vst [vmem:[%s2784 + $0x150] sm:$0xff] %v2837
                  %v2839 = vld [vmem:[%s2783 + $0xd8] sm:$0xff]
                  %2840 = vst [vmem:[%s2784 + $0x158] sm:$0xff] %v2839
                  %v2841 = vld [vmem:[%s2783 + $0xe0] sm:$0xff]
                  %2842 = vst [vmem:[%s2784 + $0x160] sm:$0xff] %v2841
                  %v2843 = vld [vmem:[%s2783 + $0xe8] sm:$0xff]
                  %2844 = vst [vmem:[%s2784 + $0x168] sm:$0xff] %v2843
                  %v2845 = vld [vmem:[%s2783 + $0xf0] sm:$0xff]
                  %2846 = vst [vmem:[%s2784 + $0x170] sm:$0xff] %v2845
                  %v2847 = vld [vmem:[%s2783 + $0xf8] sm:$0xff]
                  %2848 = vst [vmem:[%s2784 + $0x178] sm:$0xff] %v2847
                  %v2849 = vld [vmem:[%s2783 + $0x100] sm:$0xff]
                  %2850 = vst [vmem:[%s2784 + $0x200] sm:$0xff] %v2849
                  %v2851 = vld [vmem:[%s2783 + $0x108] sm:$0xff]
                  %2852 = vst [vmem:[%s2784 + $0x208] sm:$0xff] %v2851
                  %v2853 = vld [vmem:[%s2783 + $0x110] sm:$0xff]
                  %2854 = vst [vmem:[%s2784 + $0x210] sm:$0xff] %v2853
                  %v2855 = vld [vmem:[%s2783 + $0x118] sm:$0xff]
                  %2856 = vst [vmem:[%s2784 + $0x218] sm:$0xff] %v2855
                  %v2857 = vld [vmem:[%s2783 + $0x120] sm:$0xff]
                  %2858 = vst [vmem:[%s2784 + $0x220] sm:$0xff] %v2857
                  %v2859 = vld [vmem:[%s2783 + $0x128] sm:$0xff]
                  %2860 = vst [vmem:[%s2784 + $0x228] sm:$0xff] %v2859
                  %v2861 = vld [vmem:[%s2783 + $0x130] sm:$0xff]
                  %2862 = vst [vmem:[%s2784 + $0x230] sm:$0xff] %v2861
                  %v2863 = vld [vmem:[%s2783 + $0x138] sm:$0xff]
                  %2864 = vst [vmem:[%s2784 + $0x238] sm:$0xff] %v2863
                  %v2865 = vld [vmem:[%s2783 + $0x140] sm:$0xff]
                  %2866 = vst [vmem:[%s2784 + $0x240] sm:$0xff] %v2865
                  %v2867 = vld [vmem:[%s2783 + $0x148] sm:$0xff]
                  %2868 = vst [vmem:[%s2784 + $0x248] sm:$0xff] %v2867
                  %v2869 = vld [vmem:[%s2783 + $0x150] sm:$0xff]
                  %2870 = vst [vmem:[%s2784 + $0x250] sm:$0xff] %v2869
                  %v2871 = vld [vmem:[%s2783 + $0x158] sm:$0xff]
                  %2872 = vst [vmem:[%s2784 + $0x258] sm:$0xff] %v2871
                  %v2873 = vld [vmem:[%s2783 + $0x160] sm:$0xff]
                  %2874 = vst [vmem:[%s2784 + $0x260] sm:$0xff] %v2873
                  %v2875 = vld [vmem:[%s2783 + $0x168] sm:$0xff]
                  %2876 = vst [vmem:[%s2784 + $0x268] sm:$0xff] %v2875
                  %v2877 = vld [vmem:[%s2783 + $0x170] sm:$0xff]
                  %2878 = vst [vmem:[%s2784 + $0x270] sm:$0xff] %v2877
                  %v2879 = vld [vmem:[%s2783 + $0x178] sm:$0xff]
                  %2880 = vst [vmem:[%s2784 + $0x278] sm:$0xff] %v2879
                  %v2881 = vld [vmem:[%s2783 + $0x180] sm:$0xff]
                  %2882 = vst [vmem:[%s2784 + $0x300] sm:$0xff] %v2881
                  %v2883 = vld [vmem:[%s2783 + $0x188] sm:$0xff]
                  %2884 = vst [vmem:[%s2784 + $0x308] sm:$0xff] %v2883
                  %v2885 = vld [vmem:[%s2783 + $0x190] sm:$0xff]
                  %2886 = vst [vmem:[%s2784 + $0x310] sm:$0xff] %v2885
                  %v2887 = vld [vmem:[%s2783 + $0x198] sm:$0xff]
                  %2888 = vst [vmem:[%s2784 + $0x318] sm:$0xff] %v2887
                  %v2889 = vld [vmem:[%s2783 + $0x1a0] sm:$0xff]
                  %2890 = vst [vmem:[%s2784 + $0x320] sm:$0xff] %v2889
                  %v2891 = vld [vmem:[%s2783 + $0x1a8] sm:$0xff]
                  %2892 = vst [vmem:[%s2784 + $0x328] sm:$0xff] %v2891
                  %v2893 = vld [vmem:[%s2783 + $0x1b0] sm:$0xff]
                  %2894 = vst [vmem:[%s2784 + $0x330] sm:$0xff] %v2893
                  %v2895 = vld [vmem:[%s2783 + $0x1b8] sm:$0xff]
                  %2896 = vst [vmem:[%s2784 + $0x338] sm:$0xff] %v2895
                  %v2897 = vld [vmem:[%s2783 + $0x1c0] sm:$0xff]
                  %2898 = vst [vmem:[%s2784 + $0x340] sm:$0xff] %v2897
                  %v2899 = vld [vmem:[%s2783 + $0x1c8] sm:$0xff]
                  %2900 = vst [vmem:[%s2784 + $0x348] sm:$0xff] %v2899
                  %v2901 = vld [vmem:[%s2783 + $0x1d0] sm:$0xff]
                  %2902 = vst [vmem:[%s2784 + $0x350] sm:$0xff] %v2901
                  %v2903 = vld [vmem:[%s2783 + $0x1d8] sm:$0xff]
                  %2904 = vst [vmem:[%s2784 + $0x358] sm:$0xff] %v2903
                  %v2905 = vld [vmem:[%s2783 + $0x1e0] sm:$0xff]
                  %2906 = vst [vmem:[%s2784 + $0x360] sm:$0xff] %v2905
                  %v2907 = vld [vmem:[%s2783 + $0x1e8] sm:$0xff]
                  %2908 = vst [vmem:[%s2784 + $0x368] sm:$0xff] %v2907
                  %v2909 = vld [vmem:[%s2783 + $0x1f0] sm:$0xff]
                  %2910 = vst [vmem:[%s2784 + $0x370] sm:$0xff] %v2909
                  %v2911 = vld [vmem:[%s2783 + $0x1f8] sm:$0xff]
                  %2912 = vst [vmem:[%s2784 + $0x378] sm:$0xff] %v2911
                  %v2913 = vld [vmem:[%s2783 + $0x200] sm:$0xff]
                  %2914 = vst [vmem:[%s2784 + $0x400] sm:$0xff] %v2913
                  %v2915 = vld [vmem:[%s2783 + $0x208] sm:$0xff]
                  %2916 = vst [vmem:[%s2784 + $0x408] sm:$0xff] %v2915
                  %v2917 = vld [vmem:[%s2783 + $0x210] sm:$0xff]
                  %2918 = vst [vmem:[%s2784 + $0x410] sm:$0xff] %v2917
                  %v2919 = vld [vmem:[%s2783 + $0x218] sm:$0xff]
                  %2920 = vst [vmem:[%s2784 + $0x418] sm:$0xff] %v2919
                  %v2921 = vld [vmem:[%s2783 + $0x220] sm:$0xff]
                  %2922 = vst [vmem:[%s2784 + $0x420] sm:$0xff] %v2921
                  %v2923 = vld [vmem:[%s2783 + $0x228] sm:$0xff]
                  %2924 = vst [vmem:[%s2784 + $0x428] sm:$0xff] %v2923
                  %v2925 = vld [vmem:[%s2783 + $0x230] sm:$0xff]
                  %2926 = vst [vmem:[%s2784 + $0x430] sm:$0xff] %v2925
                  %v2927 = vld [vmem:[%s2783 + $0x238] sm:$0xff]
                  %2928 = vst [vmem:[%s2784 + $0x438] sm:$0xff] %v2927
                  %v2929 = vld [vmem:[%s2783 + $0x240] sm:$0xff]
                  %2930 = vst [vmem:[%s2784 + $0x440] sm:$0xff] %v2929
                  %v2931 = vld [vmem:[%s2783 + $0x248] sm:$0xff]
                  %2932 = vst [vmem:[%s2784 + $0x448] sm:$0xff] %v2931
                  %v2933 = vld [vmem:[%s2783 + $0x250] sm:$0xff]
                  %2934 = vst [vmem:[%s2784 + $0x450] sm:$0xff] %v2933
                  %v2935 = vld [vmem:[%s2783 + $0x258] sm:$0xff]
                  %2936 = vst [vmem:[%s2784 + $0x458] sm:$0xff] %v2935
                  %v2937 = vld [vmem:[%s2783 + $0x260] sm:$0xff]
                  %2938 = vst [vmem:[%s2784 + $0x460] sm:$0xff] %v2937
                  %v2939 = vld [vmem:[%s2783 + $0x268] sm:$0xff]
                  %2940 = vst [vmem:[%s2784 + $0x468] sm:$0xff] %v2939
                  %v2941 = vld [vmem:[%s2783 + $0x270] sm:$0xff]
                  %2942 = vst [vmem:[%s2784 + $0x470] sm:$0xff] %v2941
                  %v2943 = vld [vmem:[%s2783 + $0x278] sm:$0xff]
                  %2944 = vst [vmem:[%s2784 + $0x478] sm:$0xff] %v2943
                  %v2945 = vld [vmem:[%s2783 + $0x280] sm:$0xff]
                  %2946 = vst [vmem:[%s2784 + $0x500] sm:$0xff] %v2945
                  %v2947 = vld [vmem:[%s2783 + $0x288] sm:$0xff]
                  %2948 = vst [vmem:[%s2784 + $0x508] sm:$0xff] %v2947
                  %v2949 = vld [vmem:[%s2783 + $0x290] sm:$0xff]
                  %2950 = vst [vmem:[%s2784 + $0x510] sm:$0xff] %v2949
                  %v2951 = vld [vmem:[%s2783 + $0x298] sm:$0xff]
                  %2952 = vst [vmem:[%s2784 + $0x518] sm:$0xff] %v2951
                  %v2953 = vld [vmem:[%s2783 + $0x2a0] sm:$0xff]
                  %2954 = vst [vmem:[%s2784 + $0x520] sm:$0xff] %v2953
                  %v2955 = vld [vmem:[%s2783 + $0x2a8] sm:$0xff]
                  %2956 = vst [vmem:[%s2784 + $0x528] sm:$0xff] %v2955
                  %v2957 = vld [vmem:[%s2783 + $0x2b0] sm:$0xff]
                  %2958 = vst [vmem:[%s2784 + $0x530] sm:$0xff] %v2957
                  %v2959 = vld [vmem:[%s2783 + $0x2b8] sm:$0xff]
                  %2960 = vst [vmem:[%s2784 + $0x538] sm:$0xff] %v2959
                  %v2961 = vld [vmem:[%s2783 + $0x2c0] sm:$0xff]
                  %2962 = vst [vmem:[%s2784 + $0x540] sm:$0xff] %v2961
                  %v2963 = vld [vmem:[%s2783 + $0x2c8] sm:$0xff]
                  %2964 = vst [vmem:[%s2784 + $0x548] sm:$0xff] %v2963
                  %v2965 = vld [vmem:[%s2783 + $0x2d0] sm:$0xff]
                  %2966 = vst [vmem:[%s2784 + $0x550] sm:$0xff] %v2965
                  %v2967 = vld [vmem:[%s2783 + $0x2d8] sm:$0xff]
                  %2968 = vst [vmem:[%s2784 + $0x558] sm:$0xff] %v2967
                  %v2969 = vld [vmem:[%s2783 + $0x2e0] sm:$0xff]
                  %2970 = vst [vmem:[%s2784 + $0x560] sm:$0xff] %v2969
                  %v2971 = vld [vmem:[%s2783 + $0x2e8] sm:$0xff]
                  %2972 = vst [vmem:[%s2784 + $0x568] sm:$0xff] %v2971
                  %v2973 = vld [vmem:[%s2783 + $0x2f0] sm:$0xff]
                  %2974 = vst [vmem:[%s2784 + $0x570] sm:$0xff] %v2973
                  %v2975 = vld [vmem:[%s2783 + $0x2f8] sm:$0xff]
                  %2976 = vst [vmem:[%s2784 + $0x578] sm:$0xff] %v2975
                  %v2977 = vld [vmem:[%s2783 + $0x300] sm:$0xff]
                  %2978 = vst [vmem:[%s2784 + $0x600] sm:$0xff] %v2977
                  %v2979 = vld [vmem:[%s2783 + $0x308] sm:$0xff]
                  %2980 = vst [vmem:[%s2784 + $0x608] sm:$0xff] %v2979
                  %v2981 = vld [vmem:[%s2783 + $0x310] sm:$0xff]
                  %2982 = vst [vmem:[%s2784 + $0x610] sm:$0xff] %v2981
                  %v2983 = vld [vmem:[%s2783 + $0x318] sm:$0xff]
                  %2984 = vst [vmem:[%s2784 + $0x618] sm:$0xff] %v2983
                  %v2985 = vld [vmem:[%s2783 + $0x320] sm:$0xff]
                  %2986 = vst [vmem:[%s2784 + $0x620] sm:$0xff] %v2985
                  %v2987 = vld [vmem:[%s2783 + $0x328] sm:$0xff]
                  %2988 = vst [vmem:[%s2784 + $0x628] sm:$0xff] %v2987
                  %v2989 = vld [vmem:[%s2783 + $0x330] sm:$0xff]
                  %2990 = vst [vmem:[%s2784 + $0x630] sm:$0xff] %v2989
                  %v2991 = vld [vmem:[%s2783 + $0x338] sm:$0xff]
                  %2992 = vst [vmem:[%s2784 + $0x638] sm:$0xff] %v2991
                  %v2993 = vld [vmem:[%s2783 + $0x340] sm:$0xff]
                  %2994 = vst [vmem:[%s2784 + $0x640] sm:$0xff] %v2993
                  %v2995 = vld [vmem:[%s2783 + $0x348] sm:$0xff]
                  %2996 = vst [vmem:[%s2784 + $0x648] sm:$0xff] %v2995
                  %v2997 = vld [vmem:[%s2783 + $0x350] sm:$0xff]
                  %2998 = vst [vmem:[%s2784 + $0x650] sm:$0xff] %v2997
                  %v2999 = vld [vmem:[%s2783 + $0x358] sm:$0xff]
                  %3000 = vst [vmem:[%s2784 + $0x658] sm:$0xff] %v2999
                  %v3001 = vld [vmem:[%s2783 + $0x360] sm:$0xff]
                  %3002 = vst [vmem:[%s2784 + $0x660] sm:$0xff] %v3001
                  %v3003 = vld [vmem:[%s2783 + $0x368] sm:$0xff]
                  %3004 = vst [vmem:[%s2784 + $0x668] sm:$0xff] %v3003
                  %v3005 = vld [vmem:[%s2783 + $0x370] sm:$0xff]
                  %3006 = vst [vmem:[%s2784 + $0x670] sm:$0xff] %v3005
                  %v3007 = vld [vmem:[%s2783 + $0x378] sm:$0xff]
                  %3008 = vst [vmem:[%s2784 + $0x678] sm:$0xff] %v3007
                  %v3009 = vld [vmem:[%s2783 + $0x380] sm:$0xff]
                  %3010 = vst [vmem:[%s2784 + $0x700] sm:$0xff] %v3009
                  %v3011 = vld [vmem:[%s2783 + $0x388] sm:$0xff]
                  %3012 = vst [vmem:[%s2784 + $0x708] sm:$0xff] %v3011
                  %v3013 = vld [vmem:[%s2783 + $0x390] sm:$0xff]
                  %3014 = vst [vmem:[%s2784 + $0x710] sm:$0xff] %v3013
                  %v3015 = vld [vmem:[%s2783 + $0x398] sm:$0xff]
                  %3016 = vst [vmem:[%s2784 + $0x718] sm:$0xff] %v3015
                  %v3017 = vld [vmem:[%s2783 + $0x3a0] sm:$0xff]
                  %3018 = vst [vmem:[%s2784 + $0x720] sm:$0xff] %v3017
                  %v3019 = vld [vmem:[%s2783 + $0x3a8] sm:$0xff]
                  %3020 = vst [vmem:[%s2784 + $0x728] sm:$0xff] %v3019
                  %v3021 = vld [vmem:[%s2783 + $0x3b0] sm:$0xff]
                  %3022 = vst [vmem:[%s2784 + $0x730] sm:$0xff] %v3021
                  %v3023 = vld [vmem:[%s2783 + $0x3b8] sm:$0xff]
                  %3024 = vst [vmem:[%s2784 + $0x738] sm:$0xff] %v3023
                  %v3025 = vld [vmem:[%s2783 + $0x3c0] sm:$0xff]
                  %3026 = vst [vmem:[%s2784 + $0x740] sm:$0xff] %v3025
                  %v3027 = vld [vmem:[%s2783 + $0x3c8] sm:$0xff]
                  %3028 = vst [vmem:[%s2784 + $0x748] sm:$0xff] %v3027
                  %v3029 = vld [vmem:[%s2783 + $0x3d0] sm:$0xff]
                  %3030 = vst [vmem:[%s2784 + $0x750] sm:$0xff] %v3029
                  %v3031 = vld [vmem:[%s2783 + $0x3d8] sm:$0xff]
                  %3032 = vst [vmem:[%s2784 + $0x758] sm:$0xff] %v3031
                  %v3033 = vld [vmem:[%s2783 + $0x3e0] sm:$0xff]
                  %3034 = vst [vmem:[%s2784 + $0x760] sm:$0xff] %v3033
                  %v3035 = vld [vmem:[%s2783 + $0x3e8] sm:$0xff]
                  %3036 = vst [vmem:[%s2784 + $0x768] sm:$0xff] %v3035
                  %v3037 = vld [vmem:[%s2783 + $0x3f0] sm:$0xff]
                  %3038 = vst [vmem:[%s2784 + $0x770] sm:$0xff] %v3037
                  %v3039 = vld [vmem:[%s2783 + $0x3f8] sm:$0xff]
                  %3040 = vst [vmem:[%s2784 + $0x778] sm:$0xff] %v3039
                  %v3041 = vld [vmem:[%s2783 + $0x400] sm:$0xff]
                  %3042 = vst [vmem:[%s2784 + $0x800] sm:$0xff] %v3041
                  %v3043 = vld [vmem:[%s2783 + $0x408] sm:$0xff]
                  %3044 = vst [vmem:[%s2784 + $0x808] sm:$0xff] %v3043
                  %v3045 = vld [vmem:[%s2783 + $0x410] sm:$0xff]
                  %3046 = vst [vmem:[%s2784 + $0x810] sm:$0xff] %v3045
                  %v3047 = vld [vmem:[%s2783 + $0x418] sm:$0xff]
                  %3048 = vst [vmem:[%s2784 + $0x818] sm:$0xff] %v3047
                  %v3049 = vld [vmem:[%s2783 + $0x420] sm:$0xff]
                  %3050 = vst [vmem:[%s2784 + $0x820] sm:$0xff] %v3049
                  %v3051 = vld [vmem:[%s2783 + $0x428] sm:$0xff]
                  %3052 = vst [vmem:[%s2784 + $0x828] sm:$0xff] %v3051
                  %v3053 = vld [vmem:[%s2783 + $0x430] sm:$0xff]
                  %3054 = vst [vmem:[%s2784 + $0x830] sm:$0xff] %v3053
                  %v3055 = vld [vmem:[%s2783 + $0x438] sm:$0xff]
                  %3056 = vst [vmem:[%s2784 + $0x838] sm:$0xff] %v3055
                  %v3057 = vld [vmem:[%s2783 + $0x440] sm:$0xff]
                  %3058 = vst [vmem:[%s2784 + $0x840] sm:$0xff] %v3057
                  %v3059 = vld [vmem:[%s2783 + $0x448] sm:$0xff]
                  %3060 = vst [vmem:[%s2784 + $0x848] sm:$0xff] %v3059
                  %v3061 = vld [vmem:[%s2783 + $0x450] sm:$0xff]
                  %3062 = vst [vmem:[%s2784 + $0x850] sm:$0xff] %v3061
                  %v3063 = vld [vmem:[%s2783 + $0x458] sm:$0xff]
                  %3064 = vst [vmem:[%s2784 + $0x858] sm:$0xff] %v3063
                  %v3065 = vld [vmem:[%s2783 + $0x460] sm:$0xff]
                  %3066 = vst [vmem:[%s2784 + $0x860] sm:$0xff] %v3065
                  %v3067 = vld [vmem:[%s2783 + $0x468] sm:$0xff]
                  %3068 = vst [vmem:[%s2784 + $0x868] sm:$0xff] %v3067
                  %v3069 = vld [vmem:[%s2783 + $0x470] sm:$0xff]
                  %3070 = vst [vmem:[%s2784 + $0x870] sm:$0xff] %v3069
                  %v3071 = vld [vmem:[%s2783 + $0x478] sm:$0xff]
                  %3072 = vst [vmem:[%s2784 + $0x878] sm:$0xff] %v3071
                  %v3073 = vld [vmem:[%s2783 + $0x480] sm:$0xff]
                  %3074 = vst [vmem:[%s2784 + $0x900] sm:$0xff] %v3073
                  %v3075 = vld [vmem:[%s2783 + $0x488] sm:$0xff]
                  %3076 = vst [vmem:[%s2784 + $0x908] sm:$0xff] %v3075
                  %v3077 = vld [vmem:[%s2783 + $0x490] sm:$0xff]
                  %3078 = vst [vmem:[%s2784 + $0x910] sm:$0xff] %v3077
                  %v3079 = vld [vmem:[%s2783 + $0x498] sm:$0xff]
                  %3080 = vst [vmem:[%s2784 + $0x918] sm:$0xff] %v3079
                  %v3081 = vld [vmem:[%s2783 + $0x4a0] sm:$0xff]
                  %3082 = vst [vmem:[%s2784 + $0x920] sm:$0xff] %v3081
                  %v3083 = vld [vmem:[%s2783 + $0x4a8] sm:$0xff]
                  %3084 = vst [vmem:[%s2784 + $0x928] sm:$0xff] %v3083
                  %v3085 = vld [vmem:[%s2783 + $0x4b0] sm:$0xff]
                  %3086 = vst [vmem:[%s2784 + $0x930] sm:$0xff] %v3085
                  %v3087 = vld [vmem:[%s2783 + $0x4b8] sm:$0xff]
                  %3088 = vst [vmem:[%s2784 + $0x938] sm:$0xff] %v3087
                  %v3089 = vld [vmem:[%s2783 + $0x4c0] sm:$0xff]
                  %3090 = vst [vmem:[%s2784 + $0x940] sm:$0xff] %v3089
                  %v3091 = vld [vmem:[%s2783 + $0x4c8] sm:$0xff]
                  %3092 = vst [vmem:[%s2784 + $0x948] sm:$0xff] %v3091
                  %v3093 = vld [vmem:[%s2783 + $0x4d0] sm:$0xff]
                  %3094 = vst [vmem:[%s2784 + $0x950] sm:$0xff] %v3093
                  %v3095 = vld [vmem:[%s2783 + $0x4d8] sm:$0xff]
                  %3096 = vst [vmem:[%s2784 + $0x958] sm:$0xff] %v3095
                  %v3097 = vld [vmem:[%s2783 + $0x4e0] sm:$0xff]
                  %3098 = vst [vmem:[%s2784 + $0x960] sm:$0xff] %v3097
                  %v3099 = vld [vmem:[%s2783 + $0x4e8] sm:$0xff]
                  %3100 = vst [vmem:[%s2784 + $0x968] sm:$0xff] %v3099
                  %v3101 = vld [vmem:[%s2783 + $0x4f0] sm:$0xff]
                  %3102 = vst [vmem:[%s2784 + $0x970] sm:$0xff] %v3101
                  %v3103 = vld [vmem:[%s2783 + $0x4f8] sm:$0xff]
                  %3104 = vst [vmem:[%s2784 + $0x978] sm:$0xff] %v3103
                  %v3105 = vld [vmem:[%s2783 + $0x500] sm:$0xff]
                  %3106 = vst [vmem:[%s2784 + $0xa00] sm:$0xff] %v3105
                  %v3107 = vld [vmem:[%s2783 + $0x508] sm:$0xff]
                  %3108 = vst [vmem:[%s2784 + $0xa08] sm:$0xff] %v3107
                  %v3109 = vld [vmem:[%s2783 + $0x510] sm:$0xff]
                  %3110 = vst [vmem:[%s2784 + $0xa10] sm:$0xff] %v3109
                  %v3111 = vld [vmem:[%s2783 + $0x518] sm:$0xff]
                  %3112 = vst [vmem:[%s2784 + $0xa18] sm:$0xff] %v3111
                  %v3113 = vld [vmem:[%s2783 + $0x520] sm:$0xff]
                  %3114 = vst [vmem:[%s2784 + $0xa20] sm:$0xff] %v3113
                  %v3115 = vld [vmem:[%s2783 + $0x528] sm:$0xff]
                  %3116 = vst [vmem:[%s2784 + $0xa28] sm:$0xff] %v3115
                  %v3117 = vld [vmem:[%s2783 + $0x530] sm:$0xff]
                  %3118 = vst [vmem:[%s2784 + $0xa30] sm:$0xff] %v3117
                  %v3119 = vld [vmem:[%s2783 + $0x538] sm:$0xff]
                  %3120 = vst [vmem:[%s2784 + $0xa38] sm:$0xff] %v3119
                  %v3121 = vld [vmem:[%s2783 + $0x540] sm:$0xff]
                  %3122 = vst [vmem:[%s2784 + $0xa40] sm:$0xff] %v3121
                  %v3123 = vld [vmem:[%s2783 + $0x548] sm:$0xff]
                  %3124 = vst [vmem:[%s2784 + $0xa48] sm:$0xff] %v3123
                  %v3125 = vld [vmem:[%s2783 + $0x550] sm:$0xff]
                  %3126 = vst [vmem:[%s2784 + $0xa50] sm:$0xff] %v3125
                  %v3127 = vld [vmem:[%s2783 + $0x558] sm:$0xff]
                  %3128 = vst [vmem:[%s2784 + $0xa58] sm:$0xff] %v3127
                  %v3129 = vld [vmem:[%s2783 + $0x560] sm:$0xff]
                  %3130 = vst [vmem:[%s2784 + $0xa60] sm:$0xff] %v3129
                  %v3131 = vld [vmem:[%s2783 + $0x568] sm:$0xff]
                  %3132 = vst [vmem:[%s2784 + $0xa68] sm:$0xff] %v3131
                  %v3133 = vld [vmem:[%s2783 + $0x570] sm:$0xff]
                  %3134 = vst [vmem:[%s2784 + $0xa70] sm:$0xff] %v3133
                  %v3135 = vld [vmem:[%s2783 + $0x578] sm:$0xff]
                  %3136 = vst [vmem:[%s2784 + $0xa78] sm:$0xff] %v3135
                  %v3137 = vld [vmem:[%s2783 + $0x580] sm:$0xff]
                  %3138 = vst [vmem:[%s2784 + $0xb00] sm:$0xff] %v3137
                  %v3139 = vld [vmem:[%s2783 + $0x588] sm:$0xff]
                  %3140 = vst [vmem:[%s2784 + $0xb08] sm:$0xff] %v3139
                  %v3141 = vld [vmem:[%s2783 + $0x590] sm:$0xff]
                  %3142 = vst [vmem:[%s2784 + $0xb10] sm:$0xff] %v3141
                  %v3143 = vld [vmem:[%s2783 + $0x598] sm:$0xff]
                  %3144 = vst [vmem:[%s2784 + $0xb18] sm:$0xff] %v3143
                  %v3145 = vld [vmem:[%s2783 + $0x5a0] sm:$0xff]
                  %3146 = vst [vmem:[%s2784 + $0xb20] sm:$0xff] %v3145
                  %v3147 = vld [vmem:[%s2783 + $0x5a8] sm:$0xff]
                  %3148 = vst [vmem:[%s2784 + $0xb28] sm:$0xff] %v3147
                  %v3149 = vld [vmem:[%s2783 + $0x5b0] sm:$0xff]
                  %3150 = vst [vmem:[%s2784 + $0xb30] sm:$0xff] %v3149
                  %v3151 = vld [vmem:[%s2783 + $0x5b8] sm:$0xff]
                  %3152 = vst [vmem:[%s2784 + $0xb38] sm:$0xff] %v3151
                  %v3153 = vld [vmem:[%s2783 + $0x5c0] sm:$0xff]
                  %3154 = vst [vmem:[%s2784 + $0xb40] sm:$0xff] %v3153
                  %v3155 = vld [vmem:[%s2783 + $0x5c8] sm:$0xff]
                  %3156 = vst [vmem:[%s2784 + $0xb48] sm:$0xff] %v3155
                  %v3157 = vld [vmem:[%s2783 + $0x5d0] sm:$0xff]
                  %3158 = vst [vmem:[%s2784 + $0xb50] sm:$0xff] %v3157
                  %v3159 = vld [vmem:[%s2783 + $0x5d8] sm:$0xff]
                  %3160 = vst [vmem:[%s2784 + $0xb58] sm:$0xff] %v3159
                  %v3161 = vld [vmem:[%s2783 + $0x5e0] sm:$0xff]
                  %3162 = vst [vmem:[%s2784 + $0xb60] sm:$0xff] %v3161
                  %v3163 = vld [vmem:[%s2783 + $0x5e8] sm:$0xff]
                  %3164 = vst [vmem:[%s2784 + $0xb68] sm:$0xff] %v3163
                  %v3165 = vld [vmem:[%s2783 + $0x5f0] sm:$0xff]
                  %3166 = vst [vmem:[%s2784 + $0xb70] sm:$0xff] %v3165
                  %v3167 = vld [vmem:[%s2783 + $0x5f8] sm:$0xff]
                  %3168 = vst [vmem:[%s2784 + $0xb78] sm:$0xff] %v3167
                $region60: #{tpu_custom_call.1} parent=54 // loop_footer
                  %s2782 = sadd.s32 1, %s2778
                $region61: #{tpu_custom_call.1} parent=54 // loop_footer_branch
                  %2777 = sbr.rel target = $region57
                $region62: #{tpu_custom_call.1} parent=54 // loop_exit
                  _
              $region55: #{tpu_custom_call.1} parent=39 // pred_fallthru
                _
              // Predicated region
              $region63: #{tpu_custom_call.1} parent=39 // pred_check
                _
              $region64: #{tpu_custom_call.1} parent=39 // pred_check_branch
                %3170 = sbr.rel target = $region66
              $region65: #{tpu_custom_call.1} parent=39 // pred_region
                _
              $region66: #{tpu_custom_call.1} parent=39 // pred_fallthru
                _
            $region40: #{tpu_custom_call.1} parent=35 // pred_fallthru
              _
            // Predicated region
            $region41: #{tpu_custom_call.1} parent=35 // pred_check
              _
            $region42: #{tpu_custom_call.1} parent=35 // pred_check_branch
              %2380 = sbr.rel target = $region44
            $region43: #{tpu_custom_call.1} parent=35 // pred_region
              %s2382 = ssub.s32 256, 1
              loop: start=0, step=1, limit=1
              $region45: #{tpu_custom_call.1} parent=43 // loop_pre_header
                _
              $region46: #{tpu_custom_call.1} parent=43 // loop_header
                %s2384 = sphi 0, %s2388
                %p2385 = scmp.ge.s32.totalorder %s2384, 1
                %s2389 = sphi %s2366, %s2366
                %s2390 = sphi %s2374, %s2374
              $region47: #{tpu_custom_call.1} parent=43 // loop_header_branch
                %2387 = sbr.rel (%p2385) target = $region51
              $region48: #{tpu_custom_call.1} parent=43 // loop_body
                %v2391 = vld [vmem:[%s2389] sm:%s2382]
                %2392 = vst [vmem:[%s2390] sm:%s2382] %v2391
                %v2393 = vld [vmem:[%s2389 + $0x8] sm:%s2382]
                %2394 = vst [vmem:[%s2390 + $0x8] sm:%s2382] %v2393
                %v2395 = vld [vmem:[%s2389 + $0x10] sm:%s2382]
                %2396 = vst [vmem:[%s2390 + $0x10] sm:%s2382] %v2395
                %v2397 = vld [vmem:[%s2389 + $0x18] sm:%s2382]
                %2398 = vst [vmem:[%s2390 + $0x18] sm:%s2382] %v2397
                %v2399 = vld [vmem:[%s2389 + $0x20] sm:%s2382]
                %2400 = vst [vmem:[%s2390 + $0x20] sm:%s2382] %v2399
                %v2401 = vld [vmem:[%s2389 + $0x28] sm:%s2382]
                %2402 = vst [vmem:[%s2390 + $0x28] sm:%s2382] %v2401
                %v2403 = vld [vmem:[%s2389 + $0x30] sm:%s2382]
                %2404 = vst [vmem:[%s2390 + $0x30] sm:%s2382] %v2403
                %v2405 = vld [vmem:[%s2389 + $0x38] sm:%s2382]
                %2406 = vst [vmem:[%s2390 + $0x38] sm:%s2382] %v2405
                %v2407 = vld [vmem:[%s2389 + $0x40] sm:%s2382]
                %2408 = vst [vmem:[%s2390 + $0x40] sm:%s2382] %v2407
                %v2409 = vld [vmem:[%s2389 + $0x48] sm:%s2382]
                %2410 = vst [vmem:[%s2390 + $0x48] sm:%s2382] %v2409
                %v2411 = vld [vmem:[%s2389 + $0x50] sm:%s2382]
                %2412 = vst [vmem:[%s2390 + $0x50] sm:%s2382] %v2411
                %v2413 = vld [vmem:[%s2389 + $0x58] sm:%s2382]
                %2414 = vst [vmem:[%s2390 + $0x58] sm:%s2382] %v2413
                %v2415 = vld [vmem:[%s2389 + $0x60] sm:%s2382]
                %2416 = vst [vmem:[%s2390 + $0x60] sm:%s2382] %v2415
                %v2417 = vld [vmem:[%s2389 + $0x68] sm:%s2382]
                %2418 = vst [vmem:[%s2390 + $0x68] sm:%s2382] %v2417
                %v2419 = vld [vmem:[%s2389 + $0x70] sm:%s2382]
                %2420 = vst [vmem:[%s2390 + $0x70] sm:%s2382] %v2419
                %v2421 = vld [vmem:[%s2389 + $0x78] sm:%s2382]
                %2422 = vst [vmem:[%s2390 + $0x78] sm:%s2382] %v2421
                %v2423 = vld [vmem:[%s2389 + $0x80] sm:%s2382]
                %2424 = vst [vmem:[%s2390 + $0x100] sm:%s2382] %v2423
                %v2425 = vld [vmem:[%s2389 + $0x88] sm:%s2382]
                %2426 = vst [vmem:[%s2390 + $0x108] sm:%s2382] %v2425
                %v2427 = vld [vmem:[%s2389 + $0x90] sm:%s2382]
                %2428 = vst [vmem:[%s2390 + $0x110] sm:%s2382] %v2427
                %v2429 = vld [vmem:[%s2389 + $0x98] sm:%s2382]
                %2430 = vst [vmem:[%s2390 + $0x118] sm:%s2382] %v2429
                %v2431 = vld [vmem:[%s2389 + $0xa0] sm:%s2382]
                %2432 = vst [vmem:[%s2390 + $0x120] sm:%s2382] %v2431
                %v2433 = vld [vmem:[%s2389 + $0xa8] sm:%s2382]
                %2434 = vst [vmem:[%s2390 + $0x128] sm:%s2382] %v2433
                %v2435 = vld [vmem:[%s2389 + $0xb0] sm:%s2382]
                %2436 = vst [vmem:[%s2390 + $0x130] sm:%s2382] %v2435
                %v2437 = vld [vmem:[%s2389 + $0xb8] sm:%s2382]
                %2438 = vst [vmem:[%s2390 + $0x138] sm:%s2382] %v2437
                %v2439 = vld [vmem:[%s2389 + $0xc0] sm:%s2382]
                %2440 = vst [vmem:[%s2390 + $0x140] sm:%s2382] %v2439
                %v2441 = vld [vmem:[%s2389 + $0xc8] sm:%s2382]
                %2442 = vst [vmem:[%s2390 + $0x148] sm:%s2382] %v2441
                %v2443 = vld [vmem:[%s2389 + $0xd0] sm:%s2382]
                %2444 = vst [vmem:[%s2390 + $0x150] sm:%s2382] %v2443
                %v2445 = vld [vmem:[%s2389 + $0xd8] sm:%s2382]
                %2446 = vst [vmem:[%s2390 + $0x158] sm:%s2382] %v2445
                %v2447 = vld [vmem:[%s2389 + $0xe0] sm:%s2382]
                %2448 = vst [vmem:[%s2390 + $0x160] sm:%s2382] %v2447
                %v2449 = vld [vmem:[%s2389 + $0xe8] sm:%s2382]
                %2450 = vst [vmem:[%s2390 + $0x168] sm:%s2382] %v2449
                %v2451 = vld [vmem:[%s2389 + $0xf0] sm:%s2382]
                %2452 = vst [vmem:[%s2390 + $0x170] sm:%s2382] %v2451
                %v2453 = vld [vmem:[%s2389 + $0xf8] sm:%s2382]
                %2454 = vst [vmem:[%s2390 + $0x178] sm:%s2382] %v2453
                %v2455 = vld [vmem:[%s2389 + $0x100] sm:%s2382]
                %2456 = vst [vmem:[%s2390 + $0x200] sm:%s2382] %v2455
                %v2457 = vld [vmem:[%s2389 + $0x108] sm:%s2382]
                %2458 = vst [vmem:[%s2390 + $0x208] sm:%s2382] %v2457
                %v2459 = vld [vmem:[%s2389 + $0x110] sm:%s2382]
                %2460 = vst [vmem:[%s2390 + $0x210] sm:%s2382] %v2459
                %v2461 = vld [vmem:[%s2389 + $0x118] sm:%s2382]
                %2462 = vst [vmem:[%s2390 + $0x218] sm:%s2382] %v2461
                %v2463 = vld [vmem:[%s2389 + $0x120] sm:%s2382]
                %2464 = vst [vmem:[%s2390 + $0x220] sm:%s2382] %v2463
                %v2465 = vld [vmem:[%s2389 + $0x128] sm:%s2382]
                %2466 = vst [vmem:[%s2390 + $0x228] sm:%s2382] %v2465
                %v2467 = vld [vmem:[%s2389 + $0x130] sm:%s2382]
                %2468 = vst [vmem:[%s2390 + $0x230] sm:%s2382] %v2467
                %v2469 = vld [vmem:[%s2389 + $0x138] sm:%s2382]
                %2470 = vst [vmem:[%s2390 + $0x238] sm:%s2382] %v2469
                %v2471 = vld [vmem:[%s2389 + $0x140] sm:%s2382]
                %2472 = vst [vmem:[%s2390 + $0x240] sm:%s2382] %v2471
                %v2473 = vld [vmem:[%s2389 + $0x148] sm:%s2382]
                %2474 = vst [vmem:[%s2390 + $0x248] sm:%s2382] %v2473
                %v2475 = vld [vmem:[%s2389 + $0x150] sm:%s2382]
                %2476 = vst [vmem:[%s2390 + $0x250] sm:%s2382] %v2475
                %v2477 = vld [vmem:[%s2389 + $0x158] sm:%s2382]
                %2478 = vst [vmem:[%s2390 + $0x258] sm:%s2382] %v2477
                %v2479 = vld [vmem:[%s2389 + $0x160] sm:%s2382]
                %2480 = vst [vmem:[%s2390 + $0x260] sm:%s2382] %v2479
                %v2481 = vld [vmem:[%s2389 + $0x168] sm:%s2382]
                %2482 = vst [vmem:[%s2390 + $0x268] sm:%s2382] %v2481
                %v2483 = vld [vmem:[%s2389 + $0x170] sm:%s2382]
                %2484 = vst [vmem:[%s2390 + $0x270] sm:%s2382] %v2483
                %v2485 = vld [vmem:[%s2389 + $0x178] sm:%s2382]
                %2486 = vst [vmem:[%s2390 + $0x278] sm:%s2382] %v2485
                %v2487 = vld [vmem:[%s2389 + $0x180] sm:%s2382]
                %2488 = vst [vmem:[%s2390 + $0x300] sm:%s2382] %v2487
                %v2489 = vld [vmem:[%s2389 + $0x188] sm:%s2382]
                %2490 = vst [vmem:[%s2390 + $0x308] sm:%s2382] %v2489
                %v2491 = vld [vmem:[%s2389 + $0x190] sm:%s2382]
                %2492 = vst [vmem:[%s2390 + $0x310] sm:%s2382] %v2491
                %v2493 = vld [vmem:[%s2389 + $0x198] sm:%s2382]
                %2494 = vst [vmem:[%s2390 + $0x318] sm:%s2382] %v2493
                %v2495 = vld [vmem:[%s2389 + $0x1a0] sm:%s2382]
                %2496 = vst [vmem:[%s2390 + $0x320] sm:%s2382] %v2495
                %v2497 = vld [vmem:[%s2389 + $0x1a8] sm:%s2382]
                %2498 = vst [vmem:[%s2390 + $0x328] sm:%s2382] %v2497
                %v2499 = vld [vmem:[%s2389 + $0x1b0] sm:%s2382]
                %2500 = vst [vmem:[%s2390 + $0x330] sm:%s2382] %v2499
                %v2501 = vld [vmem:[%s2389 + $0x1b8] sm:%s2382]
                %2502 = vst [vmem:[%s2390 + $0x338] sm:%s2382] %v2501
                %v2503 = vld [vmem:[%s2389 + $0x1c0] sm:%s2382]
                %2504 = vst [vmem:[%s2390 + $0x340] sm:%s2382] %v2503
                %v2505 = vld [vmem:[%s2389 + $0x1c8] sm:%s2382]
                %2506 = vst [vmem:[%s2390 + $0x348] sm:%s2382] %v2505
                %v2507 = vld [vmem:[%s2389 + $0x1d0] sm:%s2382]
                %2508 = vst [vmem:[%s2390 + $0x350] sm:%s2382] %v2507
                %v2509 = vld [vmem:[%s2389 + $0x1d8] sm:%s2382]
                %2510 = vst [vmem:[%s2390 + $0x358] sm:%s2382] %v2509
                %v2511 = vld [vmem:[%s2389 + $0x1e0] sm:%s2382]
                %2512 = vst [vmem:[%s2390 + $0x360] sm:%s2382] %v2511
                %v2513 = vld [vmem:[%s2389 + $0x1e8] sm:%s2382]
                %2514 = vst [vmem:[%s2390 + $0x368] sm:%s2382] %v2513
                %v2515 = vld [vmem:[%s2389 + $0x1f0] sm:%s2382]
                %2516 = vst [vmem:[%s2390 + $0x370] sm:%s2382] %v2515
                %v2517 = vld [vmem:[%s2389 + $0x1f8] sm:%s2382]
                %2518 = vst [vmem:[%s2390 + $0x378] sm:%s2382] %v2517
                %v2519 = vld [vmem:[%s2389 + $0x200] sm:%s2382]
                %2520 = vst [vmem:[%s2390 + $0x400] sm:%s2382] %v2519
                %v2521 = vld [vmem:[%s2389 + $0x208] sm:%s2382]
                %2522 = vst [vmem:[%s2390 + $0x408] sm:%s2382] %v2521
                %v2523 = vld [vmem:[%s2389 + $0x210] sm:%s2382]
                %2524 = vst [vmem:[%s2390 + $0x410] sm:%s2382] %v2523
                %v2525 = vld [vmem:[%s2389 + $0x218] sm:%s2382]
                %2526 = vst [vmem:[%s2390 + $0x418] sm:%s2382] %v2525
                %v2527 = vld [vmem:[%s2389 + $0x220] sm:%s2382]
                %2528 = vst [vmem:[%s2390 + $0x420] sm:%s2382] %v2527
                %v2529 = vld [vmem:[%s2389 + $0x228] sm:%s2382]
                %2530 = vst [vmem:[%s2390 + $0x428] sm:%s2382] %v2529
                %v2531 = vld [vmem:[%s2389 + $0x230] sm:%s2382]
                %2532 = vst [vmem:[%s2390 + $0x430] sm:%s2382] %v2531
                %v2533 = vld [vmem:[%s2389 + $0x238] sm:%s2382]
                %2534 = vst [vmem:[%s2390 + $0x438] sm:%s2382] %v2533
                %v2535 = vld [vmem:[%s2389 + $0x240] sm:%s2382]
                %2536 = vst [vmem:[%s2390 + $0x440] sm:%s2382] %v2535
                %v2537 = vld [vmem:[%s2389 + $0x248] sm:%s2382]
                %2538 = vst [vmem:[%s2390 + $0x448] sm:%s2382] %v2537
                %v2539 = vld [vmem:[%s2389 + $0x250] sm:%s2382]
                %2540 = vst [vmem:[%s2390 + $0x450] sm:%s2382] %v2539
                %v2541 = vld [vmem:[%s2389 + $0x258] sm:%s2382]
                %2542 = vst [vmem:[%s2390 + $0x458] sm:%s2382] %v2541
                %v2543 = vld [vmem:[%s2389 + $0x260] sm:%s2382]
                %2544 = vst [vmem:[%s2390 + $0x460] sm:%s2382] %v2543
                %v2545 = vld [vmem:[%s2389 + $0x268] sm:%s2382]
                %2546 = vst [vmem:[%s2390 + $0x468] sm:%s2382] %v2545
                %v2547 = vld [vmem:[%s2389 + $0x270] sm:%s2382]
                %2548 = vst [vmem:[%s2390 + $0x470] sm:%s2382] %v2547
                %v2549 = vld [vmem:[%s2389 + $0x278] sm:%s2382]
                %2550 = vst [vmem:[%s2390 + $0x478] sm:%s2382] %v2549
                %v2551 = vld [vmem:[%s2389 + $0x280] sm:%s2382]
                %2552 = vst [vmem:[%s2390 + $0x500] sm:%s2382] %v2551
                %v2553 = vld [vmem:[%s2389 + $0x288] sm:%s2382]
                %2554 = vst [vmem:[%s2390 + $0x508] sm:%s2382] %v2553
                %v2555 = vld [vmem:[%s2389 + $0x290] sm:%s2382]
                %2556 = vst [vmem:[%s2390 + $0x510] sm:%s2382] %v2555
                %v2557 = vld [vmem:[%s2389 + $0x298] sm:%s2382]
                %2558 = vst [vmem:[%s2390 + $0x518] sm:%s2382] %v2557
                %v2559 = vld [vmem:[%s2389 + $0x2a0] sm:%s2382]
                %2560 = vst [vmem:[%s2390 + $0x520] sm:%s2382] %v2559
                %v2561 = vld [vmem:[%s2389 + $0x2a8] sm:%s2382]
                %2562 = vst [vmem:[%s2390 + $0x528] sm:%s2382] %v2561
                %v2563 = vld [vmem:[%s2389 + $0x2b0] sm:%s2382]
                %2564 = vst [vmem:[%s2390 + $0x530] sm:%s2382] %v2563
                %v2565 = vld [vmem:[%s2389 + $0x2b8] sm:%s2382]
                %2566 = vst [vmem:[%s2390 + $0x538] sm:%s2382] %v2565
                %v2567 = vld [vmem:[%s2389 + $0x2c0] sm:%s2382]
                %2568 = vst [vmem:[%s2390 + $0x540] sm:%s2382] %v2567
                %v2569 = vld [vmem:[%s2389 + $0x2c8] sm:%s2382]
                %2570 = vst [vmem:[%s2390 + $0x548] sm:%s2382] %v2569
                %v2571 = vld [vmem:[%s2389 + $0x2d0] sm:%s2382]
                %2572 = vst [vmem:[%s2390 + $0x550] sm:%s2382] %v2571
                %v2573 = vld [vmem:[%s2389 + $0x2d8] sm:%s2382]
                %2574 = vst [vmem:[%s2390 + $0x558] sm:%s2382] %v2573
                %v2575 = vld [vmem:[%s2389 + $0x2e0] sm:%s2382]
                %2576 = vst [vmem:[%s2390 + $0x560] sm:%s2382] %v2575
                %v2577 = vld [vmem:[%s2389 + $0x2e8] sm:%s2382]
                %2578 = vst [vmem:[%s2390 + $0x568] sm:%s2382] %v2577
                %v2579 = vld [vmem:[%s2389 + $0x2f0] sm:%s2382]
                %2580 = vst [vmem:[%s2390 + $0x570] sm:%s2382] %v2579
                %v2581 = vld [vmem:[%s2389 + $0x2f8] sm:%s2382]
                %2582 = vst [vmem:[%s2390 + $0x578] sm:%s2382] %v2581
                %v2583 = vld [vmem:[%s2389 + $0x300] sm:%s2382]
                %2584 = vst [vmem:[%s2390 + $0x600] sm:%s2382] %v2583
                %v2585 = vld [vmem:[%s2389 + $0x308] sm:%s2382]
                %2586 = vst [vmem:[%s2390 + $0x608] sm:%s2382] %v2585
                %v2587 = vld [vmem:[%s2389 + $0x310] sm:%s2382]
                %2588 = vst [vmem:[%s2390 + $0x610] sm:%s2382] %v2587
                %v2589 = vld [vmem:[%s2389 + $0x318] sm:%s2382]
                %2590 = vst [vmem:[%s2390 + $0x618] sm:%s2382] %v2589
                %v2591 = vld [vmem:[%s2389 + $0x320] sm:%s2382]
                %2592 = vst [vmem:[%s2390 + $0x620] sm:%s2382] %v2591
                %v2593 = vld [vmem:[%s2389 + $0x328] sm:%s2382]
                %2594 = vst [vmem:[%s2390 + $0x628] sm:%s2382] %v2593
                %v2595 = vld [vmem:[%s2389 + $0x330] sm:%s2382]
                %2596 = vst [vmem:[%s2390 + $0x630] sm:%s2382] %v2595
                %v2597 = vld [vmem:[%s2389 + $0x338] sm:%s2382]
                %2598 = vst [vmem:[%s2390 + $0x638] sm:%s2382] %v2597
                %v2599 = vld [vmem:[%s2389 + $0x340] sm:%s2382]
                %2600 = vst [vmem:[%s2390 + $0x640] sm:%s2382] %v2599
                %v2601 = vld [vmem:[%s2389 + $0x348] sm:%s2382]
                %2602 = vst [vmem:[%s2390 + $0x648] sm:%s2382] %v2601
                %v2603 = vld [vmem:[%s2389 + $0x350] sm:%s2382]
                %2604 = vst [vmem:[%s2390 + $0x650] sm:%s2382] %v2603
                %v2605 = vld [vmem:[%s2389 + $0x358] sm:%s2382]
                %2606 = vst [vmem:[%s2390 + $0x658] sm:%s2382] %v2605
                %v2607 = vld [vmem:[%s2389 + $0x360] sm:%s2382]
                %2608 = vst [vmem:[%s2390 + $0x660] sm:%s2382] %v2607
                %v2609 = vld [vmem:[%s2389 + $0x368] sm:%s2382]
                %2610 = vst [vmem:[%s2390 + $0x668] sm:%s2382] %v2609
                %v2611 = vld [vmem:[%s2389 + $0x370] sm:%s2382]
                %2612 = vst [vmem:[%s2390 + $0x670] sm:%s2382] %v2611
                %v2613 = vld [vmem:[%s2389 + $0x378] sm:%s2382]
                %2614 = vst [vmem:[%s2390 + $0x678] sm:%s2382] %v2613
                %v2615 = vld [vmem:[%s2389 + $0x380] sm:%s2382]
                %2616 = vst [vmem:[%s2390 + $0x700] sm:%s2382] %v2615
                %v2617 = vld [vmem:[%s2389 + $0x388] sm:%s2382]
                %2618 = vst [vmem:[%s2390 + $0x708] sm:%s2382] %v2617
                %v2619 = vld [vmem:[%s2389 + $0x390] sm:%s2382]
                %2620 = vst [vmem:[%s2390 + $0x710] sm:%s2382] %v2619
                %v2621 = vld [vmem:[%s2389 + $0x398] sm:%s2382]
                %2622 = vst [vmem:[%s2390 + $0x718] sm:%s2382] %v2621
                %v2623 = vld [vmem:[%s2389 + $0x3a0] sm:%s2382]
                %2624 = vst [vmem:[%s2390 + $0x720] sm:%s2382] %v2623
                %v2625 = vld [vmem:[%s2389 + $0x3a8] sm:%s2382]
                %2626 = vst [vmem:[%s2390 + $0x728] sm:%s2382] %v2625
                %v2627 = vld [vmem:[%s2389 + $0x3b0] sm:%s2382]
                %2628 = vst [vmem:[%s2390 + $0x730] sm:%s2382] %v2627
                %v2629 = vld [vmem:[%s2389 + $0x3b8] sm:%s2382]
                %2630 = vst [vmem:[%s2390 + $0x738] sm:%s2382] %v2629
                %v2631 = vld [vmem:[%s2389 + $0x3c0] sm:%s2382]
                %2632 = vst [vmem:[%s2390 + $0x740] sm:%s2382] %v2631
                %v2633 = vld [vmem:[%s2389 + $0x3c8] sm:%s2382]
                %2634 = vst [vmem:[%s2390 + $0x748] sm:%s2382] %v2633
                %v2635 = vld [vmem:[%s2389 + $0x3d0] sm:%s2382]
                %2636 = vst [vmem:[%s2390 + $0x750] sm:%s2382] %v2635
                %v2637 = vld [vmem:[%s2389 + $0x3d8] sm:%s2382]
                %2638 = vst [vmem:[%s2390 + $0x758] sm:%s2382] %v2637
                %v2639 = vld [vmem:[%s2389 + $0x3e0] sm:%s2382]
                %2640 = vst [vmem:[%s2390 + $0x760] sm:%s2382] %v2639
                %v2641 = vld [vmem:[%s2389 + $0x3e8] sm:%s2382]
                %2642 = vst [vmem:[%s2390 + $0x768] sm:%s2382] %v2641
                %v2643 = vld [vmem:[%s2389 + $0x3f0] sm:%s2382]
                %2644 = vst [vmem:[%s2390 + $0x770] sm:%s2382] %v2643
                %v2645 = vld [vmem:[%s2389 + $0x3f8] sm:%s2382]
                %2646 = vst [vmem:[%s2390 + $0x778] sm:%s2382] %v2645
                %v2647 = vld [vmem:[%s2389 + $0x400] sm:%s2382]
                %2648 = vst [vmem:[%s2390 + $0x800] sm:%s2382] %v2647
                %v2649 = vld [vmem:[%s2389 + $0x408] sm:%s2382]
                %2650 = vst [vmem:[%s2390 + $0x808] sm:%s2382] %v2649
                %v2651 = vld [vmem:[%s2389 + $0x410] sm:%s2382]
                %2652 = vst [vmem:[%s2390 + $0x810] sm:%s2382] %v2651
                %v2653 = vld [vmem:[%s2389 + $0x418] sm:%s2382]
                %2654 = vst [vmem:[%s2390 + $0x818] sm:%s2382] %v2653
                %v2655 = vld [vmem:[%s2389 + $0x420] sm:%s2382]
                %2656 = vst [vmem:[%s2390 + $0x820] sm:%s2382] %v2655
                %v2657 = vld [vmem:[%s2389 + $0x428] sm:%s2382]
                %2658 = vst [vmem:[%s2390 + $0x828] sm:%s2382] %v2657
                %v2659 = vld [vmem:[%s2389 + $0x430] sm:%s2382]
                %2660 = vst [vmem:[%s2390 + $0x830] sm:%s2382] %v2659
                %v2661 = vld [vmem:[%s2389 + $0x438] sm:%s2382]
                %2662 = vst [vmem:[%s2390 + $0x838] sm:%s2382] %v2661
                %v2663 = vld [vmem:[%s2389 + $0x440] sm:%s2382]
                %2664 = vst [vmem:[%s2390 + $0x840] sm:%s2382] %v2663
                %v2665 = vld [vmem:[%s2389 + $0x448] sm:%s2382]
                %2666 = vst [vmem:[%s2390 + $0x848] sm:%s2382] %v2665
                %v2667 = vld [vmem:[%s2389 + $0x450] sm:%s2382]
                %2668 = vst [vmem:[%s2390 + $0x850] sm:%s2382] %v2667
                %v2669 = vld [vmem:[%s2389 + $0x458] sm:%s2382]
                %2670 = vst [vmem:[%s2390 + $0x858] sm:%s2382] %v2669
                %v2671 = vld [vmem:[%s2389 + $0x460] sm:%s2382]
                %2672 = vst [vmem:[%s2390 + $0x860] sm:%s2382] %v2671
                %v2673 = vld [vmem:[%s2389 + $0x468] sm:%s2382]
                %2674 = vst [vmem:[%s2390 + $0x868] sm:%s2382] %v2673
                %v2675 = vld [vmem:[%s2389 + $0x470] sm:%s2382]
                %2676 = vst [vmem:[%s2390 + $0x870] sm:%s2382] %v2675
                %v2677 = vld [vmem:[%s2389 + $0x478] sm:%s2382]
                %2678 = vst [vmem:[%s2390 + $0x878] sm:%s2382] %v2677
                %v2679 = vld [vmem:[%s2389 + $0x480] sm:%s2382]
                %2680 = vst [vmem:[%s2390 + $0x900] sm:%s2382] %v2679
                %v2681 = vld [vmem:[%s2389 + $0x488] sm:%s2382]
                %2682 = vst [vmem:[%s2390 + $0x908] sm:%s2382] %v2681
                %v2683 = vld [vmem:[%s2389 + $0x490] sm:%s2382]
                %2684 = vst [vmem:[%s2390 + $0x910] sm:%s2382] %v2683
                %v2685 = vld [vmem:[%s2389 + $0x498] sm:%s2382]
                %2686 = vst [vmem:[%s2390 + $0x918] sm:%s2382] %v2685
                %v2687 = vld [vmem:[%s2389 + $0x4a0] sm:%s2382]
                %2688 = vst [vmem:[%s2390 + $0x920] sm:%s2382] %v2687
                %v2689 = vld [vmem:[%s2389 + $0x4a8] sm:%s2382]
                %2690 = vst [vmem:[%s2390 + $0x928] sm:%s2382] %v2689
                %v2691 = vld [vmem:[%s2389 + $0x4b0] sm:%s2382]
                %2692 = vst [vmem:[%s2390 + $0x930] sm:%s2382] %v2691
                %v2693 = vld [vmem:[%s2389 + $0x4b8] sm:%s2382]
                %2694 = vst [vmem:[%s2390 + $0x938] sm:%s2382] %v2693
                %v2695 = vld [vmem:[%s2389 + $0x4c0] sm:%s2382]
                %2696 = vst [vmem:[%s2390 + $0x940] sm:%s2382] %v2695
                %v2697 = vld [vmem:[%s2389 + $0x4c8] sm:%s2382]
                %2698 = vst [vmem:[%s2390 + $0x948] sm:%s2382] %v2697
                %v2699 = vld [vmem:[%s2389 + $0x4d0] sm:%s2382]
                %2700 = vst [vmem:[%s2390 + $0x950] sm:%s2382] %v2699
                %v2701 = vld [vmem:[%s2389 + $0x4d8] sm:%s2382]
                %2702 = vst [vmem:[%s2390 + $0x958] sm:%s2382] %v2701
                %v2703 = vld [vmem:[%s2389 + $0x4e0] sm:%s2382]
                %2704 = vst [vmem:[%s2390 + $0x960] sm:%s2382] %v2703
                %v2705 = vld [vmem:[%s2389 + $0x4e8] sm:%s2382]
                %2706 = vst [vmem:[%s2390 + $0x968] sm:%s2382] %v2705
                %v2707 = vld [vmem:[%s2389 + $0x4f0] sm:%s2382]
                %2708 = vst [vmem:[%s2390 + $0x970] sm:%s2382] %v2707
                %v2709 = vld [vmem:[%s2389 + $0x4f8] sm:%s2382]
                %2710 = vst [vmem:[%s2390 + $0x978] sm:%s2382] %v2709
                %v2711 = vld [vmem:[%s2389 + $0x500] sm:%s2382]
                %2712 = vst [vmem:[%s2390 + $0xa00] sm:%s2382] %v2711
                %v2713 = vld [vmem:[%s2389 + $0x508] sm:%s2382]
                %2714 = vst [vmem:[%s2390 + $0xa08] sm:%s2382] %v2713
                %v2715 = vld [vmem:[%s2389 + $0x510] sm:%s2382]
                %2716 = vst [vmem:[%s2390 + $0xa10] sm:%s2382] %v2715
                %v2717 = vld [vmem:[%s2389 + $0x518] sm:%s2382]
                %2718 = vst [vmem:[%s2390 + $0xa18] sm:%s2382] %v2717
                %v2719 = vld [vmem:[%s2389 + $0x520] sm:%s2382]
                %2720 = vst [vmem:[%s2390 + $0xa20] sm:%s2382] %v2719
                %v2721 = vld [vmem:[%s2389 + $0x528] sm:%s2382]
                %2722 = vst [vmem:[%s2390 + $0xa28] sm:%s2382] %v2721
                %v2723 = vld [vmem:[%s2389 + $0x530] sm:%s2382]
                %2724 = vst [vmem:[%s2390 + $0xa30] sm:%s2382] %v2723
                %v2725 = vld [vmem:[%s2389 + $0x538] sm:%s2382]
                %2726 = vst [vmem:[%s2390 + $0xa38] sm:%s2382] %v2725
                %v2727 = vld [vmem:[%s2389 + $0x540] sm:%s2382]
                %2728 = vst [vmem:[%s2390 + $0xa40] sm:%s2382] %v2727
                %v2729 = vld [vmem:[%s2389 + $0x548] sm:%s2382]
                %2730 = vst [vmem:[%s2390 + $0xa48] sm:%s2382] %v2729
                %v2731 = vld [vmem:[%s2389 + $0x550] sm:%s2382]
                %2732 = vst [vmem:[%s2390 + $0xa50] sm:%s2382] %v2731
                %v2733 = vld [vmem:[%s2389 + $0x558] sm:%s2382]
                %2734 = vst [vmem:[%s2390 + $0xa58] sm:%s2382] %v2733
                %v2735 = vld [vmem:[%s2389 + $0x560] sm:%s2382]
                %2736 = vst [vmem:[%s2390 + $0xa60] sm:%s2382] %v2735
                %v2737 = vld [vmem:[%s2389 + $0x568] sm:%s2382]
                %2738 = vst [vmem:[%s2390 + $0xa68] sm:%s2382] %v2737
                %v2739 = vld [vmem:[%s2389 + $0x570] sm:%s2382]
                %2740 = vst [vmem:[%s2390 + $0xa70] sm:%s2382] %v2739
                %v2741 = vld [vmem:[%s2389 + $0x578] sm:%s2382]
                %2742 = vst [vmem:[%s2390 + $0xa78] sm:%s2382] %v2741
                %v2743 = vld [vmem:[%s2389 + $0x580] sm:%s2382]
                %2744 = vst [vmem:[%s2390 + $0xb00] sm:%s2382] %v2743
                %v2745 = vld [vmem:[%s2389 + $0x588] sm:%s2382]
                %2746 = vst [vmem:[%s2390 + $0xb08] sm:%s2382] %v2745
                %v2747 = vld [vmem:[%s2389 + $0x590] sm:%s2382]
                %2748 = vst [vmem:[%s2390 + $0xb10] sm:%s2382] %v2747
                %v2749 = vld [vmem:[%s2389 + $0x598] sm:%s2382]
                %2750 = vst [vmem:[%s2390 + $0xb18] sm:%s2382] %v2749
                %v2751 = vld [vmem:[%s2389 + $0x5a0] sm:%s2382]
                %2752 = vst [vmem:[%s2390 + $0xb20] sm:%s2382] %v2751
                %v2753 = vld [vmem:[%s2389 + $0x5a8] sm:%s2382]
                %2754 = vst [vmem:[%s2390 + $0xb28] sm:%s2382] %v2753
                %v2755 = vld [vmem:[%s2389 + $0x5b0] sm:%s2382]
                %2756 = vst [vmem:[%s2390 + $0xb30] sm:%s2382] %v2755
                %v2757 = vld [vmem:[%s2389 + $0x5b8] sm:%s2382]
                %2758 = vst [vmem:[%s2390 + $0xb38] sm:%s2382] %v2757
                %v2759 = vld [vmem:[%s2389 + $0x5c0] sm:%s2382]
                %2760 = vst [vmem:[%s2390 + $0xb40] sm:%s2382] %v2759
                %v2761 = vld [vmem:[%s2389 + $0x5c8] sm:%s2382]
                %2762 = vst [vmem:[%s2390 + $0xb48] sm:%s2382] %v2761
                %v2763 = vld [vmem:[%s2389 + $0x5d0] sm:%s2382]
                %2764 = vst [vmem:[%s2390 + $0xb50] sm:%s2382] %v2763
                %v2765 = vld [vmem:[%s2389 + $0x5d8] sm:%s2382]
                %2766 = vst [vmem:[%s2390 + $0xb58] sm:%s2382] %v2765
                %v2767 = vld [vmem:[%s2389 + $0x5e0] sm:%s2382]
                %2768 = vst [vmem:[%s2390 + $0xb60] sm:%s2382] %v2767
                %v2769 = vld [vmem:[%s2389 + $0x5e8] sm:%s2382]
                %2770 = vst [vmem:[%s2390 + $0xb68] sm:%s2382] %v2769
                %v2771 = vld [vmem:[%s2389 + $0x5f0] sm:%s2382]
                %2772 = vst [vmem:[%s2390 + $0xb70] sm:%s2382] %v2771
                %v2773 = vld [vmem:[%s2389 + $0x5f8] sm:%s2382]
                %2774 = vst [vmem:[%s2390 + $0xb78] sm:%s2382] %v2773
              $region49: #{tpu_custom_call.1} parent=43 // loop_footer
                %s2388 = sadd.s32 1, %s2384
              $region50: #{tpu_custom_call.1} parent=43 // loop_footer_branch
                %2383 = sbr.rel target = $region46
              $region51: #{tpu_custom_call.1} parent=43 // loop_exit
                _
            $region44: #{tpu_custom_call.1} parent=35 // pred_fallthru
              _
          $region36: #{tpu_custom_call.1} parent=31 // pred_fallthru
            _
          %3171 = vnop
        $region32: #{tpu_custom_call.1} parent=27 // pred_fallthru
          _
      $region28: #{tpu_custom_call.1} parent=5 // pred_fallthru
        _
      %p3172 = scmp.le.s32.totalorder 2, %s8
      // Predicated region
      $region67: #{tpu_custom_call.1} parent=5 // pred_check
        %p3173 = pneg %p3172
      $region68: #{tpu_custom_call.1} parent=5 // pred_check_branch
        %3175 = sbr.rel (%p3173) target = $region70
      $region69: #{tpu_custom_call.1} parent=5 // pred_region
        %s3176 = ssub.s32 %s8, 2
        // Predicated region
        $region71: #{tpu_custom_call.1} parent=69 // pred_check
          %p3177 = pneg %p100
        $region72: #{tpu_custom_call.1} parent=69 // pred_check_branch
          %3179 = sbr.rel (%p3177) target = $region74
        $region73: #{tpu_custom_call.1} parent=69 // pred_region
          %s3180 = sand.u32 %s85, 1
          %s3181 = sand.u32 %s85, 1
          %s3182 = smul.addr %s3181, 1536
          %s3183 = scalar_lea.vmem [#allocation2], %s3182
        $region74: #{tpu_custom_call.1} parent=69 // pred_fallthru
          _
      $region70: #{tpu_custom_call.1} parent=5 // pred_fallthru
        _
    $region6: #{tpu_custom_call.1} parent=1 // loop_footer
      %s12 = sadd.s32 1, %s8
    $region7: #{tpu_custom_call.1} parent=1 // loop_footer_branch
      %7 = sbr.rel target = $region3
    $region8: #{tpu_custom_call.1} parent=1 // loop_exit
      _

</llo_original>
